<compile_context>
chip_gen: v6e
topology: v6e:2x2x1
jax: 0.10.0
libtpu: 0.0.40
codegen_flags: <defaults>
</compile_context>

<pallas_src>
import math
import numpy as np
import jax
import jax.numpy as jnp
from jax.experimental import pallas as pl
from jax.experimental.pallas import tpu as pltpu


def _round_up(n, m):
    return ((n + m - 1) // m) * m


_LANE = 128
_CHUNK = 512       # in-kernel time chunk (lanes)
_MAX_TILE = 4096   # per-grid-step output tile (lanes), multiple of _CHUNK


# ------------------------------ Pallas FIR kernel ------------------------------
def _make_sinc_fir_kernel(C, K, dilation, Lt, Lc, Lcw):
    """K-tap stride-1 FIR over one (batch, time-tile) block.

    filt_ref : (C, K)      band-pass filters (VMEM, resident)
    x_ref    : (1, 1, Lx)  this batch's zero-padded waveform (resident across tiles)
    o_ref    : (1, C, Lt)  lane-dense output tile (Lt % 128 == 0 -> unmasked vst)
    """
    n_chunks = Lt // Lc
    # Incremental forward shift by `dilation`:  rolled[i] == window[i + dilation]
    # (np.roll semantics; passed as the non-negative equivalent of -dilation).
    shift = (-dilation) % Lcw if K > 1 else 0

    def kernel(filt_ref, x_ref, o_ref):
        w = filt_ref[...]                                  # (C, K), one vreg
        t = pl.program_id(1)
        base = t * Lt                                      # element offset of this tile

        # Fully unrolled chunk loop (static trip count): small per-chunk live set,
        # each chunk ends with a store so nothing stays live across chunks.
        for c in range(n_chunks):
            off = pl.multiple_of(base + c * Lc, _LANE)     # 128-aligned window start
            # Hoisted out of the tap loop: ONE sublane-broadcast of the chunk window.
            xw = x_ref[0, :, pl.ds(off, Lcw)]              # (1, Lcw)
            cur = jnp.broadcast_to(xw, (C, Lcw))           # (C, Lcw)
            acc = w[:, 0:1] * cur[:, :Lc]                  # tap 0
            for k in range(1, K):
                # Explicit incremental rotate (XLU) instead of per-tap misaligned
                # slices.  Wrapped lanes land beyond column Lc and are never read
                # (Lcw - (K-1)*dilation >= Lc by construction).
                cur = pltpu.roll(cur, shift=shift, axis=1)
                acc = acc + w[:, k:k + 1] * cur[:, :Lc]
            o_ref[0, :, pl.ds(c * Lc, Lc)] = acc           # unmasked lane-dense store

    return kernel


def sinc_fir_conv1d(waveforms, filters, *, stride=1, padding=0, dilation=1):
    """F.conv1d(waveforms, filters[:, None, :], stride, padding, dilation), in_channels=1.

    waveforms: (B, 1, L) float32
    filters:   (C, K)    float32
    returns    (B, C, Lout) float32
    """
    B, Cin, L = waveforms.shape
    assert Cin == 1, "SincConv only supports one input channel"
    C, K = filters.shape
    span = dilation * (K - 1) + 1
    Lp = L + 2 * padding
    assert Lp >= span, "input too short for the kernel"
    Lout = (Lp - span) // stride + 1
    N1 = (Lout - 1) * stride + 1          # stride-1 columns the kernel must produce

    # Lane-dense, chunk-aligned padded output width and per-step time tile.
    Np = _round_up(max(N1, _CHUNK), _CHUNK)
    if Np <= _MAX_TILE:
        Lt = Np
    else:
        Lt = _MAX_TILE
        Np = _round_up(Np, Lt)
    T = Np // Lt

    halo = dilation * (K - 1)
    hpad = _round_up(halo, _LANE) if halo > 0 else 0
    Lc = _CHUNK
    Lcw = Lc + hpad

    # Padded input extent seen by the kernel: conv zero-padding + halo/lane padding.
    # TODO(synk): move this pad into the kernel (VMEM halo staging) to save the
    # extra HBM round-trip of the input.
    Lx = _round_up(max(Np + hpad, L + padding), _LANE)
    x = jnp.pad(waveforms.astype(jnp.float32),
                ((0, 0), (0, 0), (padding, Lx - L - padding)))

    kernel = _make_sinc_fir_kernel(C, K, dilation, Lt, Lc, Lcw)
    out = pl.pallas_call(
        kernel,
        out_shape=jax.ShapeDtypeStruct((B, C, Np), jnp.float32),
        grid=(B, T),
        in_specs=[
            pl.BlockSpec((C, K), lambda b, t: (0, 0)),          # filters: resident
            pl.BlockSpec((1, 1, Lx), lambda b, t: (b, 0, 0)),   # waveform: resident per batch
        ],
        out_specs=pl.BlockSpec((1, C, Lt), lambda b, t: (b, 0, t)),
        compiler_params=pltpu.CompilerParams(
            dimension_semantics=("parallel", "parallel")),
    )(filters.astype(jnp.float32), x)

    if stride == 1:
        return out[:, :, :Lout]
    # TODO(synk): strided accumulation inside the kernel; this path does stride-x
    # redundant work (correct, but stride > 1 is off the default path).
    return out[:, :, :N1:stride]


# ------------------------------ SincConv_fast module ---------------------------
class SincConvFast:
    """JAX/Pallas port of SincConv_fast (Ravanelli & Bengio, SincNet) forward pass."""

    @staticmethod
    def to_mel(hz):
        return 2595 * np.log10(1 + hz / 700)

    @staticmethod
    def to_hz(mel):
        return 700 * (10 ** (mel / 2595) - 1)

    def __init__(self, out_channels, kernel_size, sample_rate=16000, in_channels=1,
                 stride=1, padding=0, dilation=1, bias=False, groups=1,
                 min_low_hz=0.2, min_band_hz=2):
        if in_channels != 1:
            raise ValueError("SincConv only supports one input channel")
        if bias:
            raise ValueError("SincConv does not support bias.")
        if groups > 1:
            raise ValueError("SincConv does not support groups.")
        self.out_channels = out_channels
        self.kernel_size = kernel_size
        if kernel_size % 2 == 0:
            self.kernel_size = self.kernel_size + 1
        self.stride = stride
        self.padding = padding
        self.dilation = dilation
        self.sample_rate = sample_rate
        self.min_low_hz = min_low_hz
        self.min_band_hz = min_band_hz

        low_hz = 30
        high_hz = self.sample_rate / 2 - (self.min_low_hz + self.min_band_hz)
        mel = np.linspace(self.to_mel(low_hz), self.to_mel(high_hz), self.out_channels + 1)
        hz = self.to_hz(mel)
        self.low_hz_ = jnp.asarray(hz[:-1], jnp.float32).reshape(-1, 1)
        self.band_hz_ = jnp.asarray(np.diff(hz), jnp.float32).reshape(-1, 1)

        n_lin = np.linspace(0, self.kernel_size / 2 - 1, int(self.kernel_size / 2))
        self.window_ = jnp.asarray(
            0.54 - 0.46 * np.cos(2 * math.pi * n_lin / self.kernel_size), jnp.float32)
        n = (self.kernel_size - 1) / 2.0
        self.n_ = jnp.asarray(
            2 * math.pi * np.arange(-n, 0).reshape(1, -1) / self.sample_rate, jnp.float32)

    def build_filters(self):
        # Tiny (out_channels x kernel_size) parameter construction -> plain JAX.
        low = self.min_low_hz + jnp.abs(self.low_hz_)
        high = jnp.clip(low + self.min_band_hz + jnp.abs(self.band_hz_),
                        self.min_low_hz, self.sample_rate / 2)
        band = (high - low)[:, 0]
        f_times_t_low = low @ self.n_
        f_times_t_high = high @ self.n_
        band_pass_left = ((jnp.sin(f_times_t_high) - jnp.sin(f_times_t_low))
                          / (self.n_ / 2)) * self.window_
        band_pass_center = 2.0 * band.reshape(-1, 1)
        band_pass_right = jnp.flip(band_pass_left, axis=1)
        band_pass = jnp.concatenate(
            [band_pass_left, band_pass_center, band_pass_right], axis=1)
        band_pass = band_pass / (2.0 * band[:, None])
        return band_pass                               # (out_channels, kernel_size)

    def __call__(self, waveforms):
        """waveforms: (B, 1, n_samples) -> (B, out_channels, n_samples_out)."""
        filters = self.build_filters()
        return sinc_fir_conv1d(waveforms, filters, stride=self.stride,
                               padding=self.padding, dilation=self.dilation)


# ------------------------------ main -------------------------------------------
if __name__ == "__main__":
    B, L = 2, 2048
    out_channels, kernel_size, fs = 8, 32, 16000       # even kernel -> module bumps to 33

    model = SincConvFast(out_channels, kernel_size, sample_rate=fs)
    x = jax.random.normal(jax.random.PRNGKey(0), (B, 1, L), dtype=jnp.float32)

    fwd = jax.jit(model.__call__)
    y = fwd(x)
    jax.block_until_ready(y)

    K = model.kernel_size
    Lout = (L + 2 * model.padding - model.dilation * (K - 1) - 1) // model.stride + 1
    assert y.shape == (B, out_channels, Lout), y.shape
    assert bool(jnp.all(jnp.isfinite(y)))

    # Cross-check against XLA's conv at f32 / HIGHEST precision.
    filt = model.build_filters().reshape(out_channels, 1, K)
    ref = jax.lax.conv_general_dilated(
        x, filt, window_strides=(model.stride,),
        padding=[(model.padding, model.padding)],
        rhs_dilation=(model.dilation,),
        dimension_numbers=('NCH', 'OIH', 'NCH'),
        precision=jax.lax.Precision.HIGHEST)
    err = float(jnp.max(jnp.abs(y - ref)))
    scale = float(jnp.max(jnp.abs(ref))) + 1e-6
    assert err <= 1e-3 * scale + 1e-4, (err, scale)

    print("KERNEL_OK")
</pallas_src>

<mosaic_0001>
module attributes {stable_mosaic.version = 11 : i64} {
  func.func @kernel(%arg0: i32, %arg1: i32, %arg2: memref<8x33xf32, #tpu.memory_space<vmem>>, %arg3: memref<1x1x2176xf32, #tpu.memory_space<vmem>>, %arg4: memref<1x8x2048xf32, #tpu.memory_space<vmem>>) attributes {dimension_semantics = [#tpu.dimension_semantics<parallel>, #tpu.dimension_semantics<parallel>], iteration_bounds = array<i64: 2, 1>, scalar_prefetch = 0 : i64, scratch_operands = 0 : i64, tpu.core_type = #tpu.core_type<tc>, window_params = [{pipeline_mode = #tpu.pipeline_mode<synchronous>, transform_indices = @transform_0, window_bounds = array<i64: 8, 33>}, {transform_indices = @transform_1, window_bounds = array<i64: 1, 1, 2176>}, {transform_indices = @transform_2, window_bounds = array<i64: 1, 8, 2048>}]} {
    %c0 = arith.constant 0 : index
    %c0_0 = arith.constant 0 : index
    %0 = vector.load %arg2[%c0, %c0_0] : memref<8x33xf32, #tpu.memory_space<vmem>>, vector<8x33xf32>
    %c2048_i32 = arith.constant 2048 : i32
    %1 = arith.muli %arg1, %c2048_i32 : i32
    %c0_i32 = arith.constant 0 : i32
    %2 = arith.addi %1, %c0_i32 : i32
    %3 = tpu.assume_multiple %2, 128 : i32
    %c0_1 = arith.constant 0 : index
    %c0_2 = arith.constant 0 : index
    %4 = arith.index_cast %3 : i32 to index
    %5 = vector.load %arg3[%c0_1, %c0_2, %4] : memref<1x1x2176xf32, #tpu.memory_space<vmem>>, vector<1x1x640xf32>
    %6 = vector.shape_cast %5 : vector<1x1x640xf32> to vector<1x640xf32>
    %7 = vector.shape_cast %6 : vector<1x640xf32> to vector<1x640xf32>
    %8 = vector.broadcast %7 : vector<1x640xf32> to vector<8x640xf32>
    %9 = vector.extract_strided_slice %0 {offsets = [0, 0], sizes = [8, 1], strides = [1, 1]} : vector<8x33xf32> to vector<8x1xf32>
    %10 = vector.extract_strided_slice %8 {offsets = [0, 0], sizes = [8, 512], strides = [1, 1]} : vector<8x640xf32> to vector<8x512xf32>
    %11 = vector.broadcast %9 : vector<8x1xf32> to vector<8x512xf32>
    %12 = arith.mulf %11, %10 : vector<8x512xf32>
    %c639_i32 = arith.constant 639 : i32
    %13 = tpu.dynamic_rotate %8 by %c639_i32 dim 1 : vector<8x640xf32>, i32 -> vector<8x640xf32>
    %14 = vector.extract_strided_slice %0 {offsets = [0, 1], sizes = [8, 1], strides = [1, 1]} : vector<8x33xf32> to vector<8x1xf32>
    %15 = vector.extract_strided_slice %13 {offsets = [0, 0], sizes = [8, 512], strides = [1, 1]} : vector<8x640xf32> to vector<8x512xf32>
    %16 = vector.broadcast %14 : vector<8x1xf32> to vector<8x512xf32>
    %17 = arith.mulf %16, %15 : vector<8x512xf32>
    %18 = arith.addf %12, %17 : vector<8x512xf32>
    %c639_i32_3 = arith.constant 639 : i32
    %19 = tpu.dynamic_rotate %13 by %c639_i32_3 dim 1 : vector<8x640xf32>, i32 -> vector<8x640xf32>
    %20 = vector.extract_strided_slice %0 {offsets = [0, 2], sizes = [8, 1], strides = [1, 1]} : vector<8x33xf32> to vector<8x1xf32>
    %21 = vector.extract_strided_slice %19 {offsets = [0, 0], sizes = [8, 512], strides = [1, 1]} : vector<8x640xf32> to vector<8x512xf32>
    %22 = vector.broadcast %20 : vector<8x1xf32> to vector<8x512xf32>
    %23 = arith.mulf %22, %21 : vector<8x512xf32>
    %24 = arith.addf %18, %23 : vector<8x512xf32>
    %c639_i32_4 = arith.constant 639 : i32
    %25 = tpu.dynamic_rotate %19 by %c639_i32_4 dim 1 : vector<8x640xf32>, i32 -> vector<8x640xf32>
    %26 = vector.extract_strided_slice %0 {offsets = [0, 3], sizes = [8, 1], strides = [1, 1]} : vector<8x33xf32> to vector<8x1xf32>
    %27 = vector.extract_strided_slice %25 {offsets = [0, 0], sizes = [8, 512], strides = [1, 1]} : vector<8x640xf32> to vector<8x512xf32>
    %28 = vector.broadcast %26 : vector<8x1xf32> to vector<8x512xf32>
    %29 = arith.mulf %28, %27 : vector<8x512xf32>
    %30 = arith.addf %24, %29 : vector<8x512xf32>
    %c639_i32_5 = arith.constant 639 : i32
    %31 = tpu.dynamic_rotate %25 by %c639_i32_5 dim 1 : vector<8x640xf32>, i32 -> vector<8x640xf32>
    %32 = vector.extract_strided_slice %0 {offsets = [0, 4], sizes = [8, 1], strides = [1, 1]} : vector<8x33xf32> to vector<8x1xf32>
    %33 = vector.extract_strided_slice %31 {offsets = [0, 0], sizes = [8, 512], strides = [1, 1]} : vector<8x640xf32> to vector<8x512xf32>
    %34 = vector.broadcast %32 : vector<8x1xf32> to vector<8x512xf32>
    %35 = arith.mulf %34, %33 : vector<8x512xf32>
    %36 = arith.addf %30, %35 : vector<8x512xf32>
    %c639_i32_6 = arith.constant 639 : i32
    %37 = tpu.dynamic_rotate %31 by %c639_i32_6 dim 1 : vector<8x640xf32>, i32 -> vector<8x640xf32>
    %38 = vector.extract_strided_slice %0 {offsets = [0, 5], sizes = [8, 1], strides = [1, 1]} : vector<8x33xf32> to vector<8x1xf32>
    %39 = vector.extract_strided_slice %37 {offsets = [0, 0], sizes = [8, 512], strides = [1, 1]} : vector<8x640xf32> to vector<8x512xf32>
    %40 = vector.broadcast %38 : vector<8x1xf32> to vector<8x512xf32>
    %41 = arith.mulf %40, %39 : vector<8x512xf32>
    %42 = arith.addf %36, %41 : vector<8x512xf32>
    %c639_i32_7 = arith.constant 639 : i32
    %43 = tpu.dynamic_rotate %37 by %c639_i32_7 dim 1 : vector<8x640xf32>, i32 -> vector<8x640xf32>
    %44 = vector.extract_strided_slice %0 {offsets = [0, 6], sizes = [8, 1], strides = [1, 1]} : vector<8x33xf32> to vector<8x1xf32>
    %45 = vector.extract_strided_slice %43 {offsets = [0, 0], sizes = [8, 512], strides = [1, 1]} : vector<8x640xf32> to vector<8x512xf32>
    %46 = vector.broadcast %44 : vector<8x1xf32> to vector<8x512xf32>
    %47 = arith.mulf %46, %45 : vector<8x512xf32>
    %48 = arith.addf %42, %47 : vector<8x512xf32>
    %c639_i32_8 = arith.constant 639 : i32
    %49 = tpu.dynamic_rotate %43 by %c639_i32_8 dim 1 : vector<8x640xf32>, i32 -> vector<8x640xf32>
    %50 = vector.extract_strided_slice %0 {offsets = [0, 7], sizes = [8, 1], strides = [1, 1]} : vector<8x33xf32> to vector<8x1xf32>
    %51 = vector.extract_strided_slice %49 {offsets = [0, 0], sizes = [8, 512], strides = [1, 1]} : vector<8x640xf32> to vector<8x512xf32>
    %52 = vector.broadcast %50 : vector<8x1xf32> to vector<8x512xf32>
    %53 = arith.mulf %52, %51 : vector<8x512xf32>
    %54 = arith.addf %48, %53 : vector<8x512xf32>
    %c639_i32_9 = arith.constant 639 : i32
    %55 = tpu.dynamic_rotate %49 by %c639_i32_9 dim 1 : vector<8x640xf32>, i32 -> vector<8x640xf32>
    %56 = vector.extract_strided_slice %0 {offsets = [0, 8], sizes = [8, 1], strides = [1, 1]} : vector<8x33xf32> to vector<8x1xf32>
    %57 = vector.extract_strided_slice %55 {offsets = [0, 0], sizes = [8, 512], strides = [1, 1]} : vector<8x640xf32> to vector<8x512xf32>
    %58 = vector.broadcast %56 : vector<8x1xf32> to vector<8x512xf32>
    %59 = arith.mulf %58, %57 : vector<8x512xf32>
    %60 = arith.addf %54, %59 : vector<8x512xf32>
    %c639_i32_10 = arith.constant 639 : i32
    %61 = tpu.dynamic_rotate %55 by %c639_i32_10 dim 1 : vector<8x640xf32>, i32 -> vector<8x640xf32>
    %62 = vector.extract_strided_slice %0 {offsets = [0, 9], sizes = [8, 1], strides = [1, 1]} : vector<8x33xf32> to vector<8x1xf32>
    %63 = vector.extract_strided_slice %61 {offsets = [0, 0], sizes = [8, 512], strides = [1, 1]} : vector<8x640xf32> to vector<8x512xf32>
    %64 = vector.broadcast %62 : vector<8x1xf32> to vector<8x512xf32>
    %65 = arith.mulf %64, %63 : vector<8x512xf32>
    %66 = arith.addf %60, %65 : vector<8x512xf32>
    %c639_i32_11 = arith.constant 639 : i32
    %67 = tpu.dynamic_rotate %61 by %c639_i32_11 dim 1 : vector<8x640xf32>, i32 -> vector<8x640xf32>
    %68 = vector.extract_strided_slice %0 {offsets = [0, 10], sizes = [8, 1], strides = [1, 1]} : vector<8x33xf32> to vector<8x1xf32>
    %69 = vector.extract_strided_slice %67 {offsets = [0, 0], sizes = [8, 512], strides = [1, 1]} : vector<8x640xf32> to vector<8x512xf32>
    %70 = vector.broadcast %68 : vector<8x1xf32> to vector<8x512xf32>
    %71 = arith.mulf %70, %69 : vector<8x512xf32>
    %72 = arith.addf %66, %71 : vector<8x512xf32>
    %c639_i32_12 = arith.constant 639 : i32
    %73 = tpu.dynamic_rotate %67 by %c639_i32_12 dim 1 : vector<8x640xf32>, i32 -> vector<8x640xf32>
    %74 = vector.extract_strided_slice %0 {offsets = [0, 11], sizes = [8, 1], strides = [1, 1]} : vector<8x33xf32> to vector<8x1xf32>
    %75 = vector.extract_strided_slice %73 {offsets = [0, 0], sizes = [8, 512], strides = [1, 1]} : vector<8x640xf32> to vector<8x512xf32>
    %76 = vector.broadcast %74 : vector<8x1xf32> to vector<8x512xf32>
    %77 = arith.mulf %76, %75 : vector<8x512xf32>
    %78 = arith.addf %72, %77 : vector<8x512xf32>
    %c639_i32_13 = arith.constant 639 : i32
    %79 = tpu.dynamic_rotate %73 by %c639_i32_13 dim 1 : vector<8x640xf32>, i32 -> vector<8x640xf32>
    %80 = vector.extract_strided_slice %0 {offsets = [0, 12], sizes = [8, 1], strides = [1, 1]} : vector<8x33xf32> to vector<8x1xf32>
    %81 = vector.extract_strided_slice %79 {offsets = [0, 0], sizes = [8, 512], strides = [1, 1]} : vector<8x640xf32> to vector<8x512xf32>
    %82 = vector.broadcast %80 : vector<8x1xf32> to vector<8x512xf32>
    %83 = arith.mulf %82, %81 : vector<8x512xf32>
    %84 = arith.addf %78, %83 : vector<8x512xf32>
    %c639_i32_14 = arith.constant 639 : i32
    %85 = tpu.dynamic_rotate %79 by %c639_i32_14 dim 1 : vector<8x640xf32>, i32 -> vector<8x640xf32>
    %86 = vector.extract_strided_slice %0 {offsets = [0, 13], sizes = [8, 1], strides = [1, 1]} : vector<8x33xf32> to vector<8x1xf32>
    %87 = vector.extract_strided_slice %85 {offsets = [0, 0], sizes = [8, 512], strides = [1, 1]} : vector<8x640xf32> to vector<8x512xf32>
    %88 = vector.broadcast %86 : vector<8x1xf32> to vector<8x512xf32>
    %89 = arith.mulf %88, %87 : vector<8x512xf32>
    %90 = arith.addf %84, %89 : vector<8x512xf32>
    %c639_i32_15 = arith.constant 639 : i32
    %91 = tpu.dynamic_rotate %85 by %c639_i32_15 dim 1 : vector<8x640xf32>, i32 -> vector<8x640xf32>
    %92 = vector.extract_strided_slice %0 {offsets = [0, 14], sizes = [8, 1], strides = [1, 1]} : vector<8x33xf32> to vector<8x1xf32>
    %93 = vector.extract_strided_slice %91 {offsets = [0, 0], sizes = [8, 512], strides = [1, 1]} : vector<8x640xf32> to vector<8x512xf32>
    %94 = vector.broadcast %92 : vector<8x1xf32> to vector<8x512xf32>
    %95 = arith.mulf %94, %93 : vector<8x512xf32>
    %96 = arith.addf %90, %95 : vector<8x512xf32>
    %c639_i32_16 = arith.constant 639 : i32
    %97 = tpu.dynamic_rotate %91 by %c639_i32_16 dim 1 : vector<8x640xf32>, i32 -> vector<8x640xf32>
    %98 = vector.extract_strided_slice %0 {offsets = [0, 15], sizes = [8, 1], strides = [1, 1]} : vector<8x33xf32> to vector<8x1xf32>
    %99 = vector.extract_strided_slice %97 {offsets = [0, 0], sizes = [8, 512], strides = [1, 1]} : vector<8x640xf32> to vector<8x512xf32>
    %100 = vector.broadcast %98 : vector<8x1xf32> to vector<8x512xf32>
    %101 = arith.mulf %100, %99 : vector<8x512xf32>
    %102 = arith.addf %96, %101 : vector<8x512xf32>
    %c639_i32_17 = arith.constant 639 : i32
    %103 = tpu.dynamic_rotate %97 by %c639_i32_17 dim 1 : vector<8x640xf32>, i32 -> vector<8x640xf32>
    %104 = vector.extract_strided_slice %0 {offsets = [0, 16], sizes = [8, 1], strides = [1, 1]} : vector<8x33xf32> to vector<8x1xf32>
    %105 = vector.extract_strided_slice %103 {offsets = [0, 0], sizes = [8, 512], strides = [1, 1]} : vector<8x640xf32> to vector<8x512xf32>
    %106 = vector.broadcast %104 : vector<8x1xf32> to vector<8x512xf32>
    %107 = arith.mulf %106, %105 : vector<8x512xf32>
    %108 = arith.addf %102, %107 : vector<8x512xf32>
    %c639_i32_18 = arith.constant 639 : i32
    %109 = tpu.dynamic_rotate %103 by %c639_i32_18 dim 1 : vector<8x640xf32>, i32 -> vector<8x640xf32>
    %110 = vector.extract_strided_slice %0 {offsets = [0, 17], sizes = [8, 1], strides = [1, 1]} : vector<8x33xf32> to vector<8x1xf32>
    %111 = vector.extract_strided_slice %109 {offsets = [0, 0], sizes = [8, 512], strides = [1, 1]} : vector<8x640xf32> to vector<8x512xf32>
    %112 = vector.broadcast %110 : vector<8x1xf32> to vector<8x512xf32>
    %113 = arith.mulf %112, %111 : vector<8x512xf32>
    %114 = arith.addf %108, %113 : vector<8x512xf32>
    %c639_i32_19 = arith.constant 639 : i32
    %115 = tpu.dynamic_rotate %109 by %c639_i32_19 dim 1 : vector<8x640xf32>, i32 -> vector<8x640xf32>
    %116 = vector.extract_strided_slice %0 {offsets = [0, 18], sizes = [8, 1], strides = [1, 1]} : vector<8x33xf32> to vector<8x1xf32>
    %117 = vector.extract_strided_slice %115 {offsets = [0, 0], sizes = [8, 512], strides = [1, 1]} : vector<8x640xf32> to vector<8x512xf32>
    %118 = vector.broadcast %116 : vector<8x1xf32> to vector<8x512xf32>
    %119 = arith.mulf %118, %117 : vector<8x512xf32>
    %120 = arith.addf %114, %119 : vector<8x512xf32>
    %c639_i32_20 = arith.constant 639 : i32
    %121 = tpu.dynamic_rotate %115 by %c639_i32_20 dim 1 : vector<8x640xf32>, i32 -> vector<8x640xf32>
    %122 = vector.extract_strided_slice %0 {offsets = [0, 19], sizes = [8, 1], strides = [1, 1]} : vector<8x33xf32> to vector<8x1xf32>
    %123 = vector.extract_strided_slice %121 {offsets = [0, 0], sizes = [8, 512], strides = [1, 1]} : vector<8x640xf32> to vector<8x512xf32>
    %124 = vector.broadcast %122 : vector<8x1xf32> to vector<8x512xf32>
    %125 = arith.mulf %124, %123 : vector<8x512xf32>
    %126 = arith.addf %120, %125 : vector<8x512xf32>
    %c639_i32_21 = arith.constant 639 : i32
    %127 = tpu.dynamic_rotate %121 by %c639_i32_21 dim 1 : vector<8x640xf32>, i32 -> vector<8x640xf32>
    %128 = vector.extract_strided_slice %0 {offsets = [0, 20], sizes = [8, 1], strides = [1, 1]} : vector<8x33xf32> to vector<8x1xf32>
    %129 = vector.extract_strided_slice %127 {offsets = [0, 0], sizes = [8, 512], strides = [1, 1]} : vector<8x640xf32> to vector<8x512xf32>
    %130 = vector.broadcast %128 : vector<8x1xf32> to vector<8x512xf32>
    %131 = arith.mulf %130, %129 : vector<8x512xf32>
    %132 = arith.addf %126, %131 : vector<8x512xf32>
    %c639_i32_22 = arith.constant 639 : i32
    %133 = tpu.dynamic_rotate %127 by %c639_i32_22 dim 1 : vector<8x640xf32>, i32 -> vector<8x640xf32>
    %134 = vector.extract_strided_slice %0 {offsets = [0, 21], sizes = [8, 1], strides = [1, 1]} : vector<8x33xf32> to vector<8x1xf32>
    %135 = vector.extract_strided_slice %133 {offsets = [0, 0], sizes = [8, 512], strides = [1, 1]} : vector<8x640xf32> to vector<8x512xf32>
    %136 = vector.broadcast %134 : vector<8x1xf32> to vector<8x512xf32>
    %137 = arith.mulf %136, %135 : vector<8x512xf32>
    %138 = arith.addf %132, %137 : vector<8x512xf32>
    %c639_i32_23 = arith.constant 639 : i32
    %139 = tpu.dynamic_rotate %133 by %c639_i32_23 dim 1 : vector<8x640xf32>, i32 -> vector<8x640xf32>
    %140 = vector.extract_strided_slice %0 {offsets = [0, 22], sizes = [8, 1], strides = [1, 1]} : vector<8x33xf32> to vector<8x1xf32>
    %141 = vector.extract_strided_slice %139 {offsets = [0, 0], sizes = [8, 512], strides = [1, 1]} : vector<8x640xf32> to vector<8x512xf32>
    %142 = vector.broadcast %140 : vector<8x1xf32> to vector<8x512xf32>
    %143 = arith.mulf %142, %141 : vector<8x512xf32>
    %144 = arith.addf %138, %143 : vector<8x512xf32>
    %c639_i32_24 = arith.constant 639 : i32
    %145 = tpu.dynamic_rotate %139 by %c639_i32_24 dim 1 : vector<8x640xf32>, i32 -> vector<8x640xf32>
    %146 = vector.extract_strided_slice %0 {offsets = [0, 23], sizes = [8, 1], strides = [1, 1]} : vector<8x33xf32> to vector<8x1xf32>
    %147 = vector.extract_strided_slice %145 {offsets = [0, 0], sizes = [8, 512], strides = [1, 1]} : vector<8x640xf32> to vector<8x512xf32>
    %148 = vector.broadcast %146 : vector<8x1xf32> to vector<8x512xf32>
    %149 = arith.mulf %148, %147 : vector<8x512xf32>
    %150 = arith.addf %144, %149 : vector<8x512xf32>
    %c639_i32_25 = arith.constant 639 : i32
    %151 = tpu.dynamic_rotate %145 by %c639_i32_25 dim 1 : vector<8x640xf32>, i32 -> vector<8x640xf32>
    %152 = vector.extract_strided_slice %0 {offsets = [0, 24], sizes = [8, 1], strides = [1, 1]} : vector<8x33xf32> to vector<8x1xf32>
    %153 = vector.extract_strided_slice %151 {offsets = [0, 0], sizes = [8, 512], strides = [1, 1]} : vector<8x640xf32> to vector<8x512xf32>
    %154 = vector.broadcast %152 : vector<8x1xf32> to vector<8x512xf32>
    %155 = arith.mulf %154, %153 : vector<8x512xf32>
    %156 = arith.addf %150, %155 : vector<8x512xf32>
    %c639_i32_26 = arith.constant 639 : i32
    %157 = tpu.dynamic_rotate %151 by %c639_i32_26 dim 1 : vector<8x640xf32>, i32 -> vector<8x640xf32>
    %158 = vector.extract_strided_slice %0 {offsets = [0, 25], sizes = [8, 1], strides = [1, 1]} : vector<8x33xf32> to vector<8x1xf32>
    %159 = vector.extract_strided_slice %157 {offsets = [0, 0], sizes = [8, 512], strides = [1, 1]} : vector<8x640xf32> to vector<8x512xf32>
    %160 = vector.broadcast %158 : vector<8x1xf32> to vector<8x512xf32>
    %161 = arith.mulf %160, %159 : vector<8x512xf32>
    %162 = arith.addf %156, %161 : vector<8x512xf32>
    %c639_i32_27 = arith.constant 639 : i32
    %163 = tpu.dynamic_rotate %157 by %c639_i32_27 dim 1 : vector<8x640xf32>, i32 -> vector<8x640xf32>
    %164 = vector.extract_strided_slice %0 {offsets = [0, 26], sizes = [8, 1], strides = [1, 1]} : vector<8x33xf32> to vector<8x1xf32>
    %165 = vector.extract_strided_slice %163 {offsets = [0, 0], sizes = [8, 512], strides = [1, 1]} : vector<8x640xf32> to vector<8x512xf32>
    %166 = vector.broadcast %164 : vector<8x1xf32> to vector<8x512xf32>
    %167 = arith.mulf %166, %165 : vector<8x512xf32>
    %168 = arith.addf %162, %167 : vector<8x512xf32>
    %c639_i32_28 = arith.constant 639 : i32
    %169 = tpu.dynamic_rotate %163 by %c639_i32_28 dim 1 : vector<8x640xf32>, i32 -> vector<8x640xf32>
    %170 = vector.extract_strided_slice %0 {offsets = [0, 27], sizes = [8, 1], strides = [1, 1]} : vector<8x33xf32> to vector<8x1xf32>
    %171 = vector.extract_strided_slice %169 {offsets = [0, 0], sizes = [8, 512], strides = [1, 1]} : vector<8x640xf32> to vector<8x512xf32>
    %172 = vector.broadcast %170 : vector<8x1xf32> to vector<8x512xf32>
    %173 = arith.mulf %172, %171 : vector<8x512xf32>
    %174 = arith.addf %168, %173 : vector<8x512xf32>
    %c639_i32_29 = arith.constant 639 : i32
    %175 = tpu.dynamic_rotate %169 by %c639_i32_29 dim 1 : vector<8x640xf32>, i32 -> vector<8x640xf32>
    %176 = vector.extract_strided_slice %0 {offsets = [0, 28], sizes = [8, 1], strides = [1, 1]} : vector<8x33xf32> to vector<8x1xf32>
    %177 = vector.extract_strided_slice %175 {offsets = [0, 0], sizes = [8, 512], strides = [1, 1]} : vector<8x640xf32> to vector<8x512xf32>
    %178 = vector.broadcast %176 : vector<8x1xf32> to vector<8x512xf32>
    %179 = arith.mulf %178, %177 : vector<8x512xf32>
    %180 = arith.addf %174, %179 : vector<8x512xf32>
    %c639_i32_30 = arith.constant 639 : i32
    %181 = tpu.dynamic_rotate %175 by %c639_i32_30 dim 1 : vector<8x640xf32>, i32 -> vector<8x640xf32>
    %182 = vector.extract_strided_slice %0 {offsets = [0, 29], sizes = [8, 1], strides = [1, 1]} : vector<8x33xf32> to vector<8x1xf32>
    %183 = vector.extract_strided_slice %181 {offsets = [0, 0], sizes = [8, 512], strides = [1, 1]} : vector<8x640xf32> to vector<8x512xf32>
    %184 = vector.broadcast %182 : vector<8x1xf32> to vector<8x512xf32>
    %185 = arith.mulf %184, %183 : vector<8x512xf32>
    %186 = arith.addf %180, %185 : vector<8x512xf32>
    %c639_i32_31 = arith.constant 639 : i32
    %187 = tpu.dynamic_rotate %181 by %c639_i32_31 dim 1 : vector<8x640xf32>, i32 -> vector<8x640xf32>
    %188 = vector.extract_strided_slice %0 {offsets = [0, 30], sizes = [8, 1], strides = [1, 1]} : vector<8x33xf32> to vector<8x1xf32>
    %189 = vector.extract_strided_slice %187 {offsets = [0, 0], sizes = [8, 512], strides = [1, 1]} : vector<8x640xf32> to vector<8x512xf32>
    %190 = vector.broadcast %188 : vector<8x1xf32> to vector<8x512xf32>
    %191 = arith.mulf %190, %189 : vector<8x512xf32>
    %192 = arith.addf %186, %191 : vector<8x512xf32>
    %c639_i32_32 = arith.constant 639 : i32
    %193 = tpu.dynamic_rotate %187 by %c639_i32_32 dim 1 : vector<8x640xf32>, i32 -> vector<8x640xf32>
    %194 = vector.extract_strided_slice %0 {offsets = [0, 31], sizes = [8, 1], strides = [1, 1]} : vector<8x33xf32> to vector<8x1xf32>
    %195 = vector.extract_strided_slice %193 {offsets = [0, 0], sizes = [8, 512], strides = [1, 1]} : vector<8x640xf32> to vector<8x512xf32>
    %196 = vector.broadcast %194 : vector<8x1xf32> to vector<8x512xf32>
    %197 = arith.mulf %196, %195 : vector<8x512xf32>
    %198 = arith.addf %192, %197 : vector<8x512xf32>
    %c639_i32_33 = arith.constant 639 : i32
    %199 = tpu.dynamic_rotate %193 by %c639_i32_33 dim 1 : vector<8x640xf32>, i32 -> vector<8x640xf32>
    %200 = vector.extract_strided_slice %0 {offsets = [0, 32], sizes = [8, 1], strides = [1, 1]} : vector<8x33xf32> to vector<8x1xf32>
    %201 = vector.extract_strided_slice %199 {offsets = [0, 0], sizes = [8, 512], strides = [1, 1]} : vector<8x640xf32> to vector<8x512xf32>
    %202 = vector.broadcast %200 : vector<8x1xf32> to vector<8x512xf32>
    %203 = arith.mulf %202, %201 : vector<8x512xf32>
    %204 = arith.addf %198, %203 : vector<8x512xf32>
    %c0_34 = arith.constant 0 : index
    %c0_35 = arith.constant 0 : index
    %c0_36 = arith.constant 0 : index
    %205 = vector.load %arg4[%c0_34, %c0_35, %c0_36] : memref<1x8x2048xf32, #tpu.memory_space<vmem>>, vector<1x8x512xf32>
    %206 = vector.shape_cast %205 : vector<1x8x512xf32> to vector<8x512xf32>
    %207 = vector.shape_cast %204 : vector<8x512xf32> to vector<1x8x512xf32>
    tpu.vector_store %arg4[%c0_34, %c0_35, %c0_36], %207 {strides = array<i32>} : memref<1x8x2048xf32, #tpu.memory_space<vmem>>, vector<1x8x512xf32>,
    %c512_i32 = arith.constant 512 : i32
    %208 = arith.addi %1, %c512_i32 : i32
    %209 = tpu.assume_multiple %208, 128 : i32
    %c0_37 = arith.constant 0 : index
    %c0_38 = arith.constant 0 : index
    %210 = arith.index_cast %209 : i32 to index
    %211 = vector.load %arg3[%c0_37, %c0_38, %210] : memref<1x1x2176xf32, #tpu.memory_space<vmem>>, vector<1x1x640xf32>
    %212 = vector.shape_cast %211 : vector<1x1x640xf32> to vector<1x640xf32>
    %213 = vector.shape_cast %212 : vector<1x640xf32> to vector<1x640xf32>
    %214 = vector.broadcast %213 : vector<1x640xf32> to vector<8x640xf32>
    %215 = vector.extract_strided_slice %0 {offsets = [0, 0], sizes = [8, 1], strides = [1, 1]} : vector<8x33xf32> to vector<8x1xf32>
    %216 = vector.extract_strided_slice %214 {offsets = [0, 0], sizes = [8, 512], strides = [1, 1]} : vector<8x640xf32> to vector<8x512xf32>
    %217 = vector.broadcast %215 : vector<8x1xf32> to vector<8x512xf32>
    %218 = arith.mulf %217, %216 : vector<8x512xf32>
    %c639_i32_39 = arith.constant 639 : i32
    %219 = tpu.dynamic_rotate %214 by %c639_i32_39 dim 1 : vector<8x640xf32>, i32 -> vector<8x640xf32>
    %220 = vector.extract_strided_slice %0 {offsets = [0, 1], sizes = [8, 1], strides = [1, 1]} : vector<8x33xf32> to vector<8x1xf32>
    %221 = vector.extract_strided_slice %219 {offsets = [0, 0], sizes = [8, 512], strides = [1, 1]} : vector<8x640xf32> to vector<8x512xf32>
    %222 = vector.broadcast %220 : vector<8x1xf32> to vector<8x512xf32>
    %223 = arith.mulf %222, %221 : vector<8x512xf32>
    %224 = arith.addf %218, %223 : vector<8x512xf32>
    %c639_i32_40 = arith.constant 639 : i32
    %225 = tpu.dynamic_rotate %219 by %c639_i32_40 dim 1 : vector<8x640xf32>, i32 -> vector<8x640xf32>
    %226 = vector.extract_strided_slice %0 {offsets = [0, 2], sizes = [8, 1], strides = [1, 1]} : vector<8x33xf32> to vector<8x1xf32>
    %227 = vector.extract_strided_slice %225 {offsets = [0, 0], sizes = [8, 512], strides = [1, 1]} : vector<8x640xf32> to vector<8x512xf32>
    %228 = vector.broadcast %226 : vector<8x1xf32> to vector<8x512xf32>
    %229 = arith.mulf %228, %227 : vector<8x512xf32>
    %230 = arith.addf %224, %229 : vector<8x512xf32>
    %c639_i32_41 = arith.constant 639 : i32
    %231 = tpu.dynamic_rotate %225 by %c639_i32_41 dim 1 : vector<8x640xf32>, i32 -> vector<8x640xf32>
    %232 = vector.extract_strided_slice %0 {offsets = [0, 3], sizes = [8, 1], strides = [1, 1]} : vector<8x33xf32> to vector<8x1xf32>
    %233 = vector.extract_strided_slice %231 {offsets = [0, 0], sizes = [8, 512], strides = [1, 1]} : vector<8x640xf32> to vector<8x512xf32>
    %234 = vector.broadcast %232 : vector<8x1xf32> to vector<8x512xf32>
    %235 = arith.mulf %234, %233 : vector<8x512xf32>
    %236 = arith.addf %230, %235 : vector<8x512xf32>
    %c639_i32_42 = arith.constant 639 : i32
    %237 = tpu.dynamic_rotate %231 by %c639_i32_42 dim 1 : vector<8x640xf32>, i32 -> vector<8x640xf32>
    %238 = vector.extract_strided_slice %0 {offsets = [0, 4], sizes = [8, 1], strides = [1, 1]} : vector<8x33xf32> to vector<8x1xf32>
    %239 = vector.extract_strided_slice %237 {offsets = [0, 0], sizes = [8, 512], strides = [1, 1]} : vector<8x640xf32> to vector<8x512xf32>
    %240 = vector.broadcast %238 : vector<8x1xf32> to vector<8x512xf32>
    %241 = arith.mulf %240, %239 : vector<8x512xf32>
    %242 = arith.addf %236, %241 : vector<8x512xf32>
    %c639_i32_43 = arith.constant 639 : i32
    %243 = tpu.dynamic_rotate %237 by %c639_i32_43 dim 1 : vector<8x640xf32>, i32 -> vector<8x640xf32>
    %244 = vector.extract_strided_slice %0 {offsets = [0, 5], sizes = [8, 1], strides = [1, 1]} : vector<8x33xf32> to vector<8x1xf32>
    %245 = vector.extract_strided_slice %243 {offsets = [0, 0], sizes = [8, 512], strides = [1, 1]} : vector<8x640xf32> to vector<8x512xf32>
    %246 = vector.broadcast %244 : vector<8x1xf32> to vector<8x512xf32>
    %247 = arith.mulf %246, %245 : vector<8x512xf32>
    %248 = arith.addf %242, %247 : vector<8x512xf32>
    %c639_i32_44 = arith.constant 639 : i32
    %249 = tpu.dynamic_rotate %243 by %c639_i32_44 dim 1 : vector<8x640xf32>, i32 -> vector<8x640xf32>
    %250 = vector.extract_strided_slice %0 {offsets = [0, 6], sizes = [8, 1], strides = [1, 1]} : vector<8x33xf32> to vector<8x1xf32>
    %251 = vector.extract_strided_slice %249 {offsets = [0, 0], sizes = [8, 512], strides = [1, 1]} : vector<8x640xf32> to vector<8x512xf32>
    %252 = vector.broadcast %250 : vector<8x1xf32> to vector<8x512xf32>
    %253 = arith.mulf %252, %251 : vector<8x512xf32>
    %254 = arith.addf %248, %253 : vector<8x512xf32>
    %c639_i32_45 = arith.constant 639 : i32
    %255 = tpu.dynamic_rotate %249 by %c639_i32_45 dim 1 : vector<8x640xf32>, i32 -> vector<8x640xf32>
    %256 = vector.extract_strided_slice %0 {offsets = [0, 7], sizes = [8, 1], strides = [1, 1]} : vector<8x33xf32> to vector<8x1xf32>
    %257 = vector.extract_strided_slice %255 {offsets = [0, 0], sizes = [8, 512], strides = [1, 1]} : vector<8x640xf32> to vector<8x512xf32>
    %258 = vector.broadcast %256 : vector<8x1xf32> to vector<8x512xf32>
    %259 = arith.mulf %258, %257 : vector<8x512xf32>
    %260 = arith.addf %254, %259 : vector<8x512xf32>
    %c639_i32_46 = arith.constant 639 : i32
    %261 = tpu.dynamic_rotate %255 by %c639_i32_46 dim 1 : vector<8x640xf32>, i32 -> vector<8x640xf32>
    %262 = vector.extract_strided_slice %0 {offsets = [0, 8], sizes = [8, 1], strides = [1, 1]} : vector<8x33xf32> to vector<8x1xf32>
    %263 = vector.extract_strided_slice %261 {offsets = [0, 0], sizes = [8, 512], strides = [1, 1]} : vector<8x640xf32> to vector<8x512xf32>
    %264 = vector.broadcast %262 : vector<8x1xf32> to vector<8x512xf32>
    %265 = arith.mulf %264, %263 : vector<8x512xf32>
    %266 = arith.addf %260, %265 : vector<8x512xf32>
    %c639_i32_47 = arith.constant 639 : i32
    %267 = tpu.dynamic_rotate %261 by %c639_i32_47 dim 1 : vector<8x640xf32>, i32 -> vector<8x640xf32>
    %268 = vector.extract_strided_slice %0 {offsets = [0, 9], sizes = [8, 1], strides = [1, 1]} : vector<8x33xf32> to vector<8x1xf32>
    %269 = vector.extract_strided_slice %267 {offsets = [0, 0], sizes = [8, 512], strides = [1, 1]} : vector<8x640xf32> to vector<8x512xf32>
    %270 = vector.broadcast %268 : vector<8x1xf32> to vector<8x512xf32>
    %271 = arith.mulf %270, %269 : vector<8x512xf32>
    %272 = arith.addf %266, %271 : vector<8x512xf32>
    %c639_i32_48 = arith.constant 639 : i32
    %273 = tpu.dynamic_rotate %267 by %c639_i32_48 dim 1 : vector<8x640xf32>, i32 -> vector<8x640xf32>
    %274 = vector.extract_strided_slice %0 {offsets = [0, 10], sizes = [8, 1], strides = [1, 1]} : vector<8x33xf32> to vector<8x1xf32>
    %275 = vector.extract_strided_slice %273 {offsets = [0, 0], sizes = [8, 512], strides = [1, 1]} : vector<8x640xf32> to vector<8x512xf32>
    %276 = vector.broadcast %274 : vector<8x1xf32> to vector<8x512xf32>
    %277 = arith.mulf %276, %275 : vector<8x512xf32>
    %278 = arith.addf %272, %277 : vector<8x512xf32>
    %c639_i32_49 = arith.constant 639 : i32
    %279 = tpu.dynamic_rotate %273 by %c639_i32_49 dim 1 : vector<8x640xf32>, i32 -> vector<8x640xf32>
    %280 = vector.extract_strided_slice %0 {offsets = [0, 11], sizes = [8, 1], strides = [1, 1]} : vector<8x33xf32> to vector<8x1xf32>
    %281 = vector.extract_strided_slice %279 {offsets = [0, 0], sizes = [8, 512], strides = [1, 1]} : vector<8x640xf32> to vector<8x512xf32>
    %282 = vector.broadcast %280 : vector<8x1xf32> to vector<8x512xf32>
    %283 = arith.mulf %282, %281 : vector<8x512xf32>
    %284 = arith.addf %278, %283 : vector<8x512xf32>
    %c639_i32_50 = arith.constant 639 : i32
    %285 = tpu.dynamic_rotate %279 by %c639_i32_50 dim 1 : vector<8x640xf32>, i32 -> vector<8x640xf32>
    %286 = vector.extract_strided_slice %0 {offsets = [0, 12], sizes = [8, 1], strides = [1, 1]} : vector<8x33xf32> to vector<8x1xf32>
    %287 = vector.extract_strided_slice %285 {offsets = [0, 0], sizes = [8, 512], strides = [1, 1]} : vector<8x640xf32> to vector<8x512xf32>
    %288 = vector.broadcast %286 : vector<8x1xf32> to vector<8x512xf32>
    %289 = arith.mulf %288, %287 : vector<8x512xf32>
    %290 = arith.addf %284, %289 : vector<8x512xf32>
    %c639_i32_51 = arith.constant 639 : i32
    %291 = tpu.dynamic_rotate %285 by %c639_i32_51 dim 1 : vector<8x640xf32>, i32 -> vector<8x640xf32>
    %292 = vector.extract_strided_slice %0 {offsets = [0, 13], sizes = [8, 1], strides = [1, 1]} : vector<8x33xf32> to vector<8x1xf32>
    %293 = vector.extract_strided_slice %291 {offsets = [0, 0], sizes = [8, 512], strides = [1, 1]} : vector<8x640xf32> to vector<8x512xf32>
    %294 = vector.broadcast %292 : vector<8x1xf32> to vector<8x512xf32>
    %295 = arith.mulf %294, %293 : vector<8x512xf32>
    %296 = arith.addf %290, %295 : vector<8x512xf32>
    %c639_i32_52 = arith.constant 639 : i32
    %297 = tpu.dynamic_rotate %291 by %c639_i32_52 dim 1 : vector<8x640xf32>, i32 -> vector<8x640xf32>
    %298 = vector.extract_strided_slice %0 {offsets = [0, 14], sizes = [8, 1], strides = [1, 1]} : vector<8x33xf32> to vector<8x1xf32>
    %299 = vector.extract_strided_slice %297 {offsets = [0, 0], sizes = [8, 512], strides = [1, 1]} : vector<8x640xf32> to vector<8x512xf32>
    %300 = vector.broadcast %298 : vector<8x1xf32> to vector<8x512xf32>
    %301 = arith.mulf %300, %299 : vector<8x512xf32>
    %302 = arith.addf %296, %301 : vector<8x512xf32>
    %c639_i32_53 = arith.constant 639 : i32
    %303 = tpu.dynamic_rotate %297 by %c639_i32_53 dim 1 : vector<8x640xf32>, i32 -> vector<8x640xf32>
    %304 = vector.extract_strided_slice %0 {offsets = [0, 15], sizes = [8, 1], strides = [1, 1]} : vector<8x33xf32> to vector<8x1xf32>
    %305 = vector.extract_strided_slice %303 {offsets = [0, 0], sizes = [8, 512], strides = [1, 1]} : vector<8x640xf32> to vector<8x512xf32>
    %306 = vector.broadcast %304 : vector<8x1xf32> to vector<8x512xf32>
    %307 = arith.mulf %306, %305 : vector<8x512xf32>
    %308 = arith.addf %302, %307 : vector<8x512xf32>
    %c639_i32_54 = arith.constant 639 : i32
    %309 = tpu.dynamic_rotate %303 by %c639_i32_54 dim 1 : vector<8x640xf32>, i32 -> vector<8x640xf32>
    %310 = vector.extract_strided_slice %0 {offsets = [0, 16], sizes = [8, 1], strides = [1, 1]} : vector<8x33xf32> to vector<8x1xf32>
    %311 = vector.extract_strided_slice %309 {offsets = [0, 0], sizes = [8, 512], strides = [1, 1]} : vector<8x640xf32> to vector<8x512xf32>
    %312 = vector.broadcast %310 : vector<8x1xf32> to vector<8x512xf32>
    %313 = arith.mulf %312, %311 : vector<8x512xf32>
    %314 = arith.addf %308, %313 : vector<8x512xf32>
    %c639_i32_55 = arith.constant 639 : i32
    %315 = tpu.dynamic_rotate %309 by %c639_i32_55 dim 1 : vector<8x640xf32>, i32 -> vector<8x640xf32>
    %316 = vector.extract_strided_slice %0 {offsets = [0, 17], sizes = [8, 1], strides = [1, 1]} : vector<8x33xf32> to vector<8x1xf32>
    %317 = vector.extract_strided_slice %315 {offsets = [0, 0], sizes = [8, 512], strides = [1, 1]} : vector<8x640xf32> to vector<8x512xf32>
    %318 = vector.broadcast %316 : vector<8x1xf32> to vector<8x512xf32>
    %319 = arith.mulf %318, %317 : vector<8x512xf32>
    %320 = arith.addf %314, %319 : vector<8x512xf32>
    %c639_i32_56 = arith.constant 639 : i32
    %321 = tpu.dynamic_rotate %315 by %c639_i32_56 dim 1 : vector<8x640xf32>, i32 -> vector<8x640xf32>
    %322 = vector.extract_strided_slice %0 {offsets = [0, 18], sizes = [8, 1], strides = [1, 1]} : vector<8x33xf32> to vector<8x1xf32>
    %323 = vector.extract_strided_slice %321 {offsets = [0, 0], sizes = [8, 512], strides = [1, 1]} : vector<8x640xf32> to vector<8x512xf32>
    %324 = vector.broadcast %322 : vector<8x1xf32> to vector<8x512xf32>
    %325 = arith.mulf %324, %323 : vector<8x512xf32>
    %326 = arith.addf %320, %325 : vector<8x512xf32>
    %c639_i32_57 = arith.constant 639 : i32
    %327 = tpu.dynamic_rotate %321 by %c639_i32_57 dim 1 : vector<8x640xf32>, i32 -> vector<8x640xf32>
    %328 = vector.extract_strided_slice %0 {offsets = [0, 19], sizes = [8, 1], strides = [1, 1]} : vector<8x33xf32> to vector<8x1xf32>
    %329 = vector.extract_strided_slice %327 {offsets = [0, 0], sizes = [8, 512], strides = [1, 1]} : vector<8x640xf32> to vector<8x512xf32>
    %330 = vector.broadcast %328 : vector<8x1xf32> to vector<8x512xf32>
    %331 = arith.mulf %330, %329 : vector<8x512xf32>
    %332 = arith.addf %326, %331 : vector<8x512xf32>
    %c639_i32_58 = arith.constant 639 : i32
    %333 = tpu.dynamic_rotate %327 by %c639_i32_58 dim 1 : vector<8x640xf32>, i32 -> vector<8x640xf32>
    %334 = vector.extract_strided_slice %0 {offsets = [0, 20], sizes = [8, 1], strides = [1, 1]} : vector<8x33xf32> to vector<8x1xf32>
    %335 = vector.extract_strided_slice %333 {offsets = [0, 0], sizes = [8, 512], strides = [1, 1]} : vector<8x640xf32> to vector<8x512xf32>
    %336 = vector.broadcast %334 : vector<8x1xf32> to vector<8x512xf32>
    %337 = arith.mulf %336, %335 : vector<8x512xf32>
    %338 = arith.addf %332, %337 : vector<8x512xf32>
    %c639_i32_59 = arith.constant 639 : i32
    %339 = tpu.dynamic_rotate %333 by %c639_i32_59 dim 1 : vector<8x640xf32>, i32 -> vector<8x640xf32>
    %340 = vector.extract_strided_slice %0 {offsets = [0, 21], sizes = [8, 1], strides = [1, 1]} : vector<8x33xf32> to vector<8x1xf32>
    %341 = vector.extract_strided_slice %339 {offsets = [0, 0], sizes = [8, 512], strides = [1, 1]} : vector<8x640xf32> to vector<8x512xf32>
    %342 = vector.broadcast %340 : vector<8x1xf32> to vector<8x512xf32>
    %343 = arith.mulf %342, %341 : vector<8x512xf32>
    %344 = arith.addf %338, %343 : vector<8x512xf32>
    %c639_i32_60 = arith.constant 639 : i32
    %345 = tpu.dynamic_rotate %339 by %c639_i32_60 dim 1 : vector<8x640xf32>, i32 -> vector<8x640xf32>
    %346 = vector.extract_strided_slice %0 {offsets = [0, 22], sizes = [8, 1], strides = [1, 1]} : vector<8x33xf32> to vector<8x1xf32>
    %347 = vector.extract_strided_slice %345 {offsets = [0, 0], sizes = [8, 512], strides = [1, 1]} : vector<8x640xf32> to vector<8x512xf32>
    %348 = vector.broadcast %346 : vector<8x1xf32> to vector<8x512xf32>
    %349 = arith.mulf %348, %347 : vector<8x512xf32>
    %350 = arith.addf %344, %349 : vector<8x512xf32>
    %c639_i32_61 = arith.constant 639 : i32
    %351 = tpu.dynamic_rotate %345 by %c639_i32_61 dim 1 : vector<8x640xf32>, i32 -> vector<8x640xf32>
    %352 = vector.extract_strided_slice %0 {offsets = [0, 23], sizes = [8, 1], strides = [1, 1]} : vector<8x33xf32> to vector<8x1xf32>
    %353 = vector.extract_strided_slice %351 {offsets = [0, 0], sizes = [8, 512], strides = [1, 1]} : vector<8x640xf32> to vector<8x512xf32>
    %354 = vector.broadcast %352 : vector<8x1xf32> to vector<8x512xf32>
    %355 = arith.mulf %354, %353 : vector<8x512xf32>
    %356 = arith.addf %350, %355 : vector<8x512xf32>
    %c639_i32_62 = arith.constant 639 : i32
    %357 = tpu.dynamic_rotate %351 by %c639_i32_62 dim 1 : vector<8x640xf32>, i32 -> vector<8x640xf32>
    %358 = vector.extract_strided_slice %0 {offsets = [0, 24], sizes = [8, 1], strides = [1, 1]} : vector<8x33xf32> to vector<8x1xf32>
    %359 = vector.extract_strided_slice %357 {offsets = [0, 0], sizes = [8, 512], strides = [1, 1]} : vector<8x640xf32> to vector<8x512xf32>
    %360 = vector.broadcast %358 : vector<8x1xf32> to vector<8x512xf32>
    %361 = arith.mulf %360, %359 : vector<8x512xf32>
    %362 = arith.addf %356, %361 : vector<8x512xf32>
    %c639_i32_63 = arith.constant 639 : i32
    %363 = tpu.dynamic_rotate %357 by %c639_i32_63 dim 1 : vector<8x640xf32>, i32 -> vector<8x640xf32>
    %364 = vector.extract_strided_slice %0 {offsets = [0, 25], sizes = [8, 1], strides = [1, 1]} : vector<8x33xf32> to vector<8x1xf32>
    %365 = vector.extract_strided_slice %363 {offsets = [0, 0], sizes = [8, 512], strides = [1, 1]} : vector<8x640xf32> to vector<8x512xf32>
    %366 = vector.broadcast %364 : vector<8x1xf32> to vector<8x512xf32>
    %367 = arith.mulf %366, %365 : vector<8x512xf32>
    %368 = arith.addf %362, %367 : vector<8x512xf32>
    %c639_i32_64 = arith.constant 639 : i32
    %369 = tpu.dynamic_rotate %363 by %c639_i32_64 dim 1 : vector<8x640xf32>, i32 -> vector<8x640xf32>
    %370 = vector.extract_strided_slice %0 {offsets = [0, 26], sizes = [8, 1], strides = [1, 1]} : vector<8x33xf32> to vector<8x1xf32>
    %371 = vector.extract_strided_slice %369 {offsets = [0, 0], sizes = [8, 512], strides = [1, 1]} : vector<8x640xf32> to vector<8x512xf32>
    %372 = vector.broadcast %370 : vector<8x1xf32> to vector<8x512xf32>
    %373 = arith.mulf %372, %371 : vector<8x512xf32>
    %374 = arith.addf %368, %373 : vector<8x512xf32>
    %c639_i32_65 = arith.constant 639 : i32
    %375 = tpu.dynamic_rotate %369 by %c639_i32_65 dim 1 : vector<8x640xf32>, i32 -> vector<8x640xf32>
    %376 = vector.extract_strided_slice %0 {offsets = [0, 27], sizes = [8, 1], strides = [1, 1]} : vector<8x33xf32> to vector<8x1xf32>
    %377 = vector.extract_strided_slice %375 {offsets = [0, 0], sizes = [8, 512], strides = [1, 1]} : vector<8x640xf32> to vector<8x512xf32>
    %378 = vector.broadcast %376 : vector<8x1xf32> to vector<8x512xf32>
    %379 = arith.mulf %378, %377 : vector<8x512xf32>
    %380 = arith.addf %374, %379 : vector<8x512xf32>
    %c639_i32_66 = arith.constant 639 : i32
    %381 = tpu.dynamic_rotate %375 by %c639_i32_66 dim 1 : vector<8x640xf32>, i32 -> vector<8x640xf32>
    %382 = vector.extract_strided_slice %0 {offsets = [0, 28], sizes = [8, 1], strides = [1, 1]} : vector<8x33xf32> to vector<8x1xf32>
    %383 = vector.extract_strided_slice %381 {offsets = [0, 0], sizes = [8, 512], strides = [1, 1]} : vector<8x640xf32> to vector<8x512xf32>
    %384 = vector.broadcast %382 : vector<8x1xf32> to vector<8x512xf32>
    %385 = arith.mulf %384, %383 : vector<8x512xf32>
    %386 = arith.addf %380, %385 : vector<8x512xf32>
    %c639_i32_67 = arith.constant 639 : i32
    %387 = tpu.dynamic_rotate %381 by %c639_i32_67 dim 1 : vector<8x640xf32>, i32 -> vector<8x640xf32>
    %388 = vector.extract_strided_slice %0 {offsets = [0, 29], sizes = [8, 1], strides = [1, 1]} : vector<8x33xf32> to vector<8x1xf32>
    %389 = vector.extract_strided_slice %387 {offsets = [0, 0], sizes = [8, 512], strides = [1, 1]} : vector<8x640xf32> to vector<8x512xf32>
    %390 = vector.broadcast %388 : vector<8x1xf32> to vector<8x512xf32>
    %391 = arith.mulf %390, %389 : vector<8x512xf32>
    %392 = arith.addf %386, %391 : vector<8x512xf32>
    %c639_i32_68 = arith.constant 639 : i32
    %393 = tpu.dynamic_rotate %387 by %c639_i32_68 dim 1 : vector<8x640xf32>, i32 -> vector<8x640xf32>
    %394 = vector.extract_strided_slice %0 {offsets = [0, 30], sizes = [8, 1], strides = [1, 1]} : vector<8x33xf32> to vector<8x1xf32>
    %395 = vector.extract_strided_slice %393 {offsets = [0, 0], sizes = [8, 512], strides = [1, 1]} : vector<8x640xf32> to vector<8x512xf32>
    %396 = vector.broadcast %394 : vector<8x1xf32> to vector<8x512xf32>
    %397 = arith.mulf %396, %395 : vector<8x512xf32>
    %398 = arith.addf %392, %397 : vector<8x512xf32>
    %c639_i32_69 = arith.constant 639 : i32
    %399 = tpu.dynamic_rotate %393 by %c639_i32_69 dim 1 : vector<8x640xf32>, i32 -> vector<8x640xf32>
    %400 = vector.extract_strided_slice %0 {offsets = [0, 31], sizes = [8, 1], strides = [1, 1]} : vector<8x33xf32> to vector<8x1xf32>
    %401 = vector.extract_strided_slice %399 {offsets = [0, 0], sizes = [8, 512], strides = [1, 1]} : vector<8x640xf32> to vector<8x512xf32>
    %402 = vector.broadcast %400 : vector<8x1xf32> to vector<8x512xf32>
    %403 = arith.mulf %402, %401 : vector<8x512xf32>
    %404 = arith.addf %398, %403 : vector<8x512xf32>
    %c639_i32_70 = arith.constant 639 : i32
    %405 = tpu.dynamic_rotate %399 by %c639_i32_70 dim 1 : vector<8x640xf32>, i32 -> vector<8x640xf32>
    %406 = vector.extract_strided_slice %0 {offsets = [0, 32], sizes = [8, 1], strides = [1, 1]} : vector<8x33xf32> to vector<8x1xf32>
    %407 = vector.extract_strided_slice %405 {offsets = [0, 0], sizes = [8, 512], strides = [1, 1]} : vector<8x640xf32> to vector<8x512xf32>
    %408 = vector.broadcast %406 : vector<8x1xf32> to vector<8x512xf32>
    %409 = arith.mulf %408, %407 : vector<8x512xf32>
    %410 = arith.addf %404, %409 : vector<8x512xf32>
    %c0_71 = arith.constant 0 : index
    %c0_72 = arith.constant 0 : index
    %c512 = arith.constant 512 : index
    %411 = vector.load %arg4[%c0_71, %c0_72, %c512] : memref<1x8x2048xf32, #tpu.memory_space<vmem>>, vector<1x8x512xf32>
    %412 = vector.shape_cast %411 : vector<1x8x512xf32> to vector<8x512xf32>
    %413 = vector.shape_cast %410 : vector<8x512xf32> to vector<1x8x512xf32>
    tpu.vector_store %arg4[%c0_71, %c0_72, %c512], %413 {strides = array<i32>} : memref<1x8x2048xf32, #tpu.memory_space<vmem>>, vector<1x8x512xf32>,
    %c1024_i32 = arith.constant 1024 : i32
    %414 = arith.addi %1, %c1024_i32 : i32
    %415 = tpu.assume_multiple %414, 128 : i32
    %c0_73 = arith.constant 0 : index
    %c0_74 = arith.constant 0 : index
    %416 = arith.index_cast %415 : i32 to index
    %417 = vector.load %arg3[%c0_73, %c0_74, %416] : memref<1x1x2176xf32, #tpu.memory_space<vmem>>, vector<1x1x640xf32>
    %418 = vector.shape_cast %417 : vector<1x1x640xf32> to vector<1x640xf32>
    %419 = vector.shape_cast %418 : vector<1x640xf32> to vector<1x640xf32>
    %420 = vector.broadcast %419 : vector<1x640xf32> to vector<8x640xf32>
    %421 = vector.extract_strided_slice %0 {offsets = [0, 0], sizes = [8, 1], strides = [1, 1]} : vector<8x33xf32> to vector<8x1xf32>
    %422 = vector.extract_strided_slice %420 {offsets = [0, 0], sizes = [8, 512], strides = [1, 1]} : vector<8x640xf32> to vector<8x512xf32>
    %423 = vector.broadcast %421 : vector<8x1xf32> to vector<8x512xf32>
    %424 = arith.mulf %423, %422 : vector<8x512xf32>
    %c639_i32_75 = arith.constant 639 : i32
    %425 = tpu.dynamic_rotate %420 by %c639_i32_75 dim 1 : vector<8x640xf32>, i32 -> vector<8x640xf32>
    %426 = vector.extract_strided_slice %0 {offsets = [0, 1], sizes = [8, 1], strides = [1, 1]} : vector<8x33xf32> to vector<8x1xf32>
    %427 = vector.extract_strided_slice %425 {offsets = [0, 0], sizes = [8, 512], strides = [1, 1]} : vector<8x640xf32> to vector<8x512xf32>
    %428 = vector.broadcast %426 : vector<8x1xf32> to vector<8x512xf32>
    %429 = arith.mulf %428, %427 : vector<8x512xf32>
    %430 = arith.addf %424, %429 : vector<8x512xf32>
    %c639_i32_76 = arith.constant 639 : i32
    %431 = tpu.dynamic_rotate %425 by %c639_i32_76 dim 1 : vector<8x640xf32>, i32 -> vector<8x640xf32>
    %432 = vector.extract_strided_slice %0 {offsets = [0, 2], sizes = [8, 1], strides = [1, 1]} : vector<8x33xf32> to vector<8x1xf32>
    %433 = vector.extract_strided_slice %431 {offsets = [0, 0], sizes = [8, 512], strides = [1, 1]} : vector<8x640xf32> to vector<8x512xf32>
    %434 = vector.broadcast %432 : vector<8x1xf32> to vector<8x512xf32>
    %435 = arith.mulf %434, %433 : vector<8x512xf32>
    %436 = arith.addf %430, %435 : vector<8x512xf32>
    %c639_i32_77 = arith.constant 639 : i32
    %437 = tpu.dynamic_rotate %431 by %c639_i32_77 dim 1 : vector<8x640xf32>, i32 -> vector<8x640xf32>
    %438 = vector.extract_strided_slice %0 {offsets = [0, 3], sizes = [8, 1], strides = [1, 1]} : vector<8x33xf32> to vector<8x1xf32>
    %439 = vector.extract_strided_slice %437 {offsets = [0, 0], sizes = [8, 512], strides = [1, 1]} : vector<8x640xf32> to vector<8x512xf32>
    %440 = vector.broadcast %438 : vector<8x1xf32> to vector<8x512xf32>
    %441 = arith.mulf %440, %439 : vector<8x512xf32>
    %442 = arith.addf %436, %441 : vector<8x512xf32>
    %c639_i32_78 = arith.constant 639 : i32
    %443 = tpu.dynamic_rotate %437 by %c639_i32_78 dim 1 : vector<8x640xf32>, i32 -> vector<8x640xf32>
    %444 = vector.extract_strided_slice %0 {offsets = [0, 4], sizes = [8, 1], strides = [1, 1]} : vector<8x33xf32> to vector<8x1xf32>
    %445 = vector.extract_strided_slice %443 {offsets = [0, 0], sizes = [8, 512], strides = [1, 1]} : vector<8x640xf32> to vector<8x512xf32>
    %446 = vector.broadcast %444 : vector<8x1xf32> to vector<8x512xf32>
    %447 = arith.mulf %446, %445 : vector<8x512xf32>
    %448 = arith.addf %442, %447 : vector<8x512xf32>
    %c639_i32_79 = arith.constant 639 : i32
    %449 = tpu.dynamic_rotate %443 by %c639_i32_79 dim 1 : vector<8x640xf32>, i32 -> vector<8x640xf32>
    %450 = vector.extract_strided_slice %0 {offsets = [0, 5], sizes = [8, 1], strides = [1, 1]} : vector<8x33xf32> to vector<8x1xf32>
    %451 = vector.extract_strided_slice %449 {offsets = [0, 0], sizes = [8, 512], strides = [1, 1]} : vector<8x640xf32> to vector<8x512xf32>
    %452 = vector.broadcast %450 : vector<8x1xf32> to vector<8x512xf32>
    %453 = arith.mulf %452, %451 : vector<8x512xf32>
    %454 = arith.addf %448, %453 : vector<8x512xf32>
    %c639_i32_80 = arith.constant 639 : i32
    %455 = tpu.dynamic_rotate %449 by %c639_i32_80 dim 1 : vector<8x640xf32>, i32 -> vector<8x640xf32>
    %456 = vector.extract_strided_slice %0 {offsets = [0, 6], sizes = [8, 1], strides = [1, 1]} : vector<8x33xf32> to vector<8x1xf32>
    %457 = vector.extract_strided_slice %455 {offsets = [0, 0], sizes = [8, 512], strides = [1, 1]} : vector<8x640xf32> to vector<8x512xf32>
    %458 = vector.broadcast %456 : vector<8x1xf32> to vector<8x512xf32>
    %459 = arith.mulf %458, %457 : vector<8x512xf32>
    %460 = arith.addf %454, %459 : vector<8x512xf32>
    %c639_i32_81 = arith.constant 639 : i32
    %461 = tpu.dynamic_rotate %455 by %c639_i32_81 dim 1 : vector<8x640xf32>, i32 -> vector<8x640xf32>
    %462 = vector.extract_strided_slice %0 {offsets = [0, 7], sizes = [8, 1], strides = [1, 1]} : vector<8x33xf32> to vector<8x1xf32>
    %463 = vector.extract_strided_slice %461 {offsets = [0, 0], sizes = [8, 512], strides = [1, 1]} : vector<8x640xf32> to vector<8x512xf32>
    %464 = vector.broadcast %462 : vector<8x1xf32> to vector<8x512xf32>
    %465 = arith.mulf %464, %463 : vector<8x512xf32>
    %466 = arith.addf %460, %465 : vector<8x512xf32>
    %c639_i32_82 = arith.constant 639 : i32
    %467 = tpu.dynamic_rotate %461 by %c639_i32_82 dim 1 : vector<8x640xf32>, i32 -> vector<8x640xf32>
    %468 = vector.extract_strided_slice %0 {offsets = [0, 8], sizes = [8, 1], strides = [1, 1]} : vector<8x33xf32> to vector<8x1xf32>
    %469 = vector.extract_strided_slice %467 {offsets = [0, 0], sizes = [8, 512], strides = [1, 1]} : vector<8x640xf32> to vector<8x512xf32>
    %470 = vector.broadcast %468 : vector<8x1xf32> to vector<8x512xf32>
    %471 = arith.mulf %470, %469 : vector<8x512xf32>
    %472 = arith.addf %466, %471 : vector<8x512xf32>
    %c639_i32_83 = arith.constant 639 : i32
    %473 = tpu.dynamic_rotate %467 by %c639_i32_83 dim 1 : vector<8x640xf32>, i32 -> vector<8x640xf32>
    %474 = vector.extract_strided_slice %0 {offsets = [0, 9], sizes = [8, 1], strides = [1, 1]} : vector<8x33xf32> to vector<8x1xf32>
    %475 = vector.extract_strided_slice %473 {offsets = [0, 0], sizes = [8, 512], strides = [1, 1]} : vector<8x640xf32> to vector<8x512xf32>
    %476 = vector.broadcast %474 : vector<8x1xf32> to vector<8x512xf32>
    %477 = arith.mulf %476, %475 : vector<8x512xf32>
    %478 = arith.addf %472, %477 : vector<8x512xf32>
    %c639_i32_84 = arith.constant 639 : i32
    %479 = tpu.dynamic_rotate %473 by %c639_i32_84 dim 1 : vector<8x640xf32>, i32 -> vector<8x640xf32>
    %480 = vector.extract_strided_slice %0 {offsets = [0, 10], sizes = [8, 1], strides = [1, 1]} : vector<8x33xf32> to vector<8x1xf32>
    %481 = vector.extract_strided_slice %479 {offsets = [0, 0], sizes = [8, 512], strides = [1, 1]} : vector<8x640xf32> to vector<8x512xf32>
    %482 = vector.broadcast %480 : vector<8x1xf32> to vector<8x512xf32>
    %483 = arith.mulf %482, %481 : vector<8x512xf32>
    %484 = arith.addf %478, %483 : vector<8x512xf32>
    %c639_i32_85 = arith.constant 639 : i32
    %485 = tpu.dynamic_rotate %479 by %c639_i32_85 dim 1 : vector<8x640xf32>, i32 -> vector<8x640xf32>
    %486 = vector.extract_strided_slice %0 {offsets = [0, 11], sizes = [8, 1], strides = [1, 1]} : vector<8x33xf32> to vector<8x1xf32>
    %487 = vector.extract_strided_slice %485 {offsets = [0, 0], sizes = [8, 512], strides = [1, 1]} : vector<8x640xf32> to vector<8x512xf32>
    %488 = vector.broadcast %486 : vector<8x1xf32> to vector<8x512xf32>
    %489 = arith.mulf %488, %487 : vector<8x512xf32>
    %490 = arith.addf %484, %489 : vector<8x512xf32>
    %c639_i32_86 = arith.constant 639 : i32
    %491 = tpu.dynamic_rotate %485 by %c639_i32_86 dim 1 : vector<8x640xf32>, i32 -> vector<8x640xf32>
    %492 = vector.extract_strided_slice %0 {offsets = [0, 12], sizes = [8, 1], strides = [1, 1]} : vector<8x33xf32> to vector<8x1xf32>
    %493 = vector.extract_strided_slice %491 {offsets = [0, 0], sizes = [8, 512], strides = [1, 1]} : vector<8x640xf32> to vector<8x512xf32>
    %494 = vector.broadcast %492 : vector<8x1xf32> to vector<8x512xf32>
    %495 = arith.mulf %494, %493 : vector<8x512xf32>
    %496 = arith.addf %490, %495 : vector<8x512xf32>
    %c639_i32_87 = arith.constant 639 : i32
    %497 = tpu.dynamic_rotate %491 by %c639_i32_87 dim 1 : vector<8x640xf32>, i32 -> vector<8x640xf32>
    %498 = vector.extract_strided_slice %0 {offsets = [0, 13], sizes = [8, 1], strides = [1, 1]} : vector<8x33xf32> to vector<8x1xf32>
    %499 = vector.extract_strided_slice %497 {offsets = [0, 0], sizes = [8, 512], strides = [1, 1]} : vector<8x640xf32> to vector<8x512xf32>
    %500 = vector.broadcast %498 : vector<8x1xf32> to vector<8x512xf32>
    %501 = arith.mulf %500, %499 : vector<8x512xf32>
    %502 = arith.addf %496, %501 : vector<8x512xf32>
    %c639_i32_88 = arith.constant 639 : i32
    %503 = tpu.dynamic_rotate %497 by %c639_i32_88 dim 1 : vector<8x640xf32>, i32 -> vector<8x640xf32>
    %504 = vector.extract_strided_slice %0 {offsets = [0, 14], sizes = [8, 1], strides = [1, 1]} : vector<8x33xf32> to vector<8x1xf32>
    %505 = vector.extract_strided_slice %503 {offsets = [0, 0], sizes = [8, 512], strides = [1, 1]} : vector<8x640xf32> to vector<8x512xf32>
    %506 = vector.broadcast %504 : vector<8x1xf32> to vector<8x512xf32>
    %507 = arith.mulf %506, %505 : vector<8x512xf32>
    %508 = arith.addf %502, %507 : vector<8x512xf32>
    %c639_i32_89 = arith.constant 639 : i32
    %509 = tpu.dynamic_rotate %503 by %c639_i32_89 dim 1 : vector<8x640xf32>, i32 -> vector<8x640xf32>
    %510 = vector.extract_strided_slice %0 {offsets = [0, 15], sizes = [8, 1], strides = [1, 1]} : vector<8x33xf32> to vector<8x1xf32>
    %511 = vector.extract_strided_slice %509 {offsets = [0, 0], sizes = [8, 512], strides = [1, 1]} : vector<8x640xf32> to vector<8x512xf32>
    %512 = vector.broadcast %510 : vector<8x1xf32> to vector<8x512xf32>
    %513 = arith.mulf %512, %511 : vector<8x512xf32>
    %514 = arith.addf %508, %513 : vector<8x512xf32>
    %c639_i32_90 = arith.constant 639 : i32
    %515 = tpu.dynamic_rotate %509 by %c639_i32_90 dim 1 : vector<8x640xf32>, i32 -> vector<8x640xf32>
    %516 = vector.extract_strided_slice %0 {offsets = [0, 16], sizes = [8, 1], strides = [1, 1]} : vector<8x33xf32> to vector<8x1xf32>
    %517 = vector.extract_strided_slice %515 {offsets = [0, 0], sizes = [8, 512], strides = [1, 1]} : vector<8x640xf32> to vector<8x512xf32>
    %518 = vector.broadcast %516 : vector<8x1xf32> to vector<8x512xf32>
    %519 = arith.mulf %518, %517 : vector<8x512xf32>
    %520 = arith.addf %514, %519 : vector<8x512xf32>
    %c639_i32_91 = arith.constant 639 : i32
    %521 = tpu.dynamic_rotate %515 by %c639_i32_91 dim 1 : vector<8x640xf32>, i32 -> vector<8x640xf32>
    %522 = vector.extract_strided_slice %0 {offsets = [0, 17], sizes = [8, 1], strides = [1, 1]} : vector<8x33xf32> to vector<8x1xf32>
    %523 = vector.extract_strided_slice %521 {offsets = [0, 0], sizes = [8, 512], strides = [1, 1]} : vector<8x640xf32> to vector<8x512xf32>
    %524 = vector.broadcast %522 : vector<8x1xf32> to vector<8x512xf32>
    %525 = arith.mulf %524, %523 : vector<8x512xf32>
    %526 = arith.addf %520, %525 : vector<8x512xf32>
    %c639_i32_92 = arith.constant 639 : i32
    %527 = tpu.dynamic_rotate %521 by %c639_i32_92 dim 1 : vector<8x640xf32>, i32 -> vector<8x640xf32>
    %528 = vector.extract_strided_slice %0 {offsets = [0, 18], sizes = [8, 1], strides = [1, 1]} : vector<8x33xf32> to vector<8x1xf32>
    %529 = vector.extract_strided_slice %527 {offsets = [0, 0], sizes = [8, 512], strides = [1, 1]} : vector<8x640xf32> to vector<8x512xf32>
    %530 = vector.broadcast %528 : vector<8x1xf32> to vector<8x512xf32>
    %531 = arith.mulf %530, %529 : vector<8x512xf32>
    %532 = arith.addf %526, %531 : vector<8x512xf32>
    %c639_i32_93 = arith.constant 639 : i32
    %533 = tpu.dynamic_rotate %527 by %c639_i32_93 dim 1 : vector<8x640xf32>, i32 -> vector<8x640xf32>
    %534 = vector.extract_strided_slice %0 {offsets = [0, 19], sizes = [8, 1], strides = [1, 1]} : vector<8x33xf32> to vector<8x1xf32>
    %535 = vector.extract_strided_slice %533 {offsets = [0, 0], sizes = [8, 512], strides = [1, 1]} : vector<8x640xf32> to vector<8x512xf32>
    %536 = vector.broadcast %534 : vector<8x1xf32> to vector<8x512xf32>
    %537 = arith.mulf %536, %535 : vector<8x512xf32>
    %538 = arith.addf %532, %537 : vector<8x512xf32>
    %c639_i32_94 = arith.constant 639 : i32
    %539 = tpu.dynamic_rotate %533 by %c639_i32_94 dim 1 : vector<8x640xf32>, i32 -> vector<8x640xf32>
    %540 = vector.extract_strided_slice %0 {offsets = [0, 20], sizes = [8, 1], strides = [1, 1]} : vector<8x33xf32> to vector<8x1xf32>
    %541 = vector.extract_strided_slice %539 {offsets = [0, 0], sizes = [8, 512], strides = [1, 1]} : vector<8x640xf32> to vector<8x512xf32>
    %542 = vector.broadcast %540 : vector<8x1xf32> to vector<8x512xf32>
    %543 = arith.mulf %542, %541 : vector<8x512xf32>
    %544 = arith.addf %538, %543 : vector<8x512xf32>
    %c639_i32_95 = arith.constant 639 : i32
    %545 = tpu.dynamic_rotate %539 by %c639_i32_95 dim 1 : vector<8x640xf32>, i32 -> vector<8x640xf32>
    %546 = vector.extract_strided_slice %0 {offsets = [0, 21], sizes = [8, 1], strides = [1, 1]} : vector<8x33xf32> to vector<8x1xf32>
    %547 = vector.extract_strided_slice %545 {offsets = [0, 0], sizes = [8, 512], strides = [1, 1]} : vector<8x640xf32> to vector<8x512xf32>
    %548 = vector.broadcast %546 : vector<8x1xf32> to vector<8x512xf32>
    %549 = arith.mulf %548, %547 : vector<8x512xf32>
    %550 = arith.addf %544, %549 : vector<8x512xf32>
    %c639_i32_96 = arith.constant 639 : i32
    %551 = tpu.dynamic_rotate %545 by %c639_i32_96 dim 1 : vector<8x640xf32>, i32 -> vector<8x640xf32>
    %552 = vector.extract_strided_slice %0 {offsets = [0, 22], sizes = [8, 1], strides = [1, 1]} : vector<8x33xf32> to vector<8x1xf32>
    %553 = vector.extract_strided_slice %551 {offsets = [0, 0], sizes = [8, 512], strides = [1, 1]} : vector<8x640xf32> to vector<8x512xf32>
    %554 = vector.broadcast %552 : vector<8x1xf32> to vector<8x512xf32>
    %555 = arith.mulf %554, %553 : vector<8x512xf32>
    %556 = arith.addf %550, %555 : vector<8x512xf32>
    %c639_i32_97 = arith.constant 639 : i32
    %557 = tpu.dynamic_rotate %551 by %c639_i32_97 dim 1 : vector<8x640xf32>, i32 -> vector<8x640xf32>
    %558 = vector.extract_strided_slice %0 {offsets = [0, 23], sizes = [8, 1], strides = [1, 1]} : vector<8x33xf32> to vector<8x1xf32>
    %559 = vector.extract_strided_slice %557 {offsets = [0, 0], sizes = [8, 512], strides = [1, 1]} : vector<8x640xf32> to vector<8x512xf32>
    %560 = vector.broadcast %558 : vector<8x1xf32> to vector<8x512xf32>
    %561 = arith.mulf %560, %559 : vector<8x512xf32>
    %562 = arith.addf %556, %561 : vector<8x512xf32>
    %c639_i32_98 = arith.constant 639 : i32
    %563 = tpu.dynamic_rotate %557 by %c639_i32_98 dim 1 : vector<8x640xf32>, i32 -> vector<8x640xf32>
    %564 = vector.extract_strided_slice %0 {offsets = [0, 24], sizes = [8, 1], strides = [1, 1]} : vector<8x33xf32> to vector<8x1xf32>
    %565 = vector.extract_strided_slice %563 {offsets = [0, 0], sizes = [8, 512], strides = [1, 1]} : vector<8x640xf32> to vector<8x512xf32>
    %566 = vector.broadcast %564 : vector<8x1xf32> to vector<8x512xf32>
    %567 = arith.mulf %566, %565 : vector<8x512xf32>
    %568 = arith.addf %562, %567 : vector<8x512xf32>
    %c639_i32_99 = arith.constant 639 : i32
    %569 = tpu.dynamic_rotate %563 by %c639_i32_99 dim 1 : vector<8x640xf32>, i32 -> vector<8x640xf32>
    %570 = vector.extract_strided_slice %0 {offsets = [0, 25], sizes = [8, 1], strides = [1, 1]} : vector<8x33xf32> to vector<8x1xf32>
    %571 = vector.extract_strided_slice %569 {offsets = [0, 0], sizes = [8, 512], strides = [1, 1]} : vector<8x640xf32> to vector<8x512xf32>
    %572 = vector.broadcast %570 : vector<8x1xf32> to vector<8x512xf32>
    %573 = arith.mulf %572, %571 : vector<8x512xf32>
    %574 = arith.addf %568, %573 : vector<8x512xf32>
    %c639_i32_100 = arith.constant 639 : i32
    %575 = tpu.dynamic_rotate %569 by %c639_i32_100 dim 1 : vector<8x640xf32>, i32 -> vector<8x640xf32>
    %576 = vector.extract_strided_slice %0 {offsets = [0, 26], sizes = [8, 1], strides = [1, 1]} : vector<8x33xf32> to vector<8x1xf32>
    %577 = vector.extract_strided_slice %575 {offsets = [0, 0], sizes = [8, 512], strides = [1, 1]} : vector<8x640xf32> to vector<8x512xf32>
    %578 = vector.broadcast %576 : vector<8x1xf32> to vector<8x512xf32>
    %579 = arith.mulf %578, %577 : vector<8x512xf32>
    %580 = arith.addf %574, %579 : vector<8x512xf32>
    %c639_i32_101 = arith.constant 639 : i32
    %581 = tpu.dynamic_rotate %575 by %c639_i32_101 dim 1 : vector<8x640xf32>, i32 -> vector<8x640xf32>
    %582 = vector.extract_strided_slice %0 {offsets = [0, 27], sizes = [8, 1], strides = [1, 1]} : vector<8x33xf32> to vector<8x1xf32>
    %583 = vector.extract_strided_slice %581 {offsets = [0, 0], sizes = [8, 512], strides = [1, 1]} : vector<8x640xf32> to vector<8x512xf32>
    %584 = vector.broadcast %582 : vector<8x1xf32> to vector<8x512xf32>
    %585 = arith.mulf %584, %583 : vector<8x512xf32>
    %586 = arith.addf %580, %585 : vector<8x512xf32>
    %c639_i32_102 = arith.constant 639 : i32
    %587 = tpu.dynamic_rotate %581 by %c639_i32_102 dim 1 : vector<8x640xf32>, i32 -> vector<8x640xf32>
    %588 = vector.extract_strided_slice %0 {offsets = [0, 28], sizes = [8, 1], strides = [1, 1]} : vector<8x33xf32> to vector<8x1xf32>
    %589 = vector.extract_strided_slice %587 {offsets = [0, 0], sizes = [8, 512], strides = [1, 1]} : vector<8x640xf32> to vector<8x512xf32>
    %590 = vector.broadcast %588 : vector<8x1xf32> to vector<8x512xf32>
    %591 = arith.mulf %590, %589 : vector<8x512xf32>
    %592 = arith.addf %586, %591 : vector<8x512xf32>
    %c639_i32_103 = arith.constant 639 : i32
    %593 = tpu.dynamic_rotate %587 by %c639_i32_103 dim 1 : vector<8x640xf32>, i32 -> vector<8x640xf32>
    %594 = vector.extract_strided_slice %0 {offsets = [0, 29], sizes = [8, 1], strides = [1, 1]} : vector<8x33xf32> to vector<8x1xf32>
    %595 = vector.extract_strided_slice %593 {offsets = [0, 0], sizes = [8, 512], strides = [1, 1]} : vector<8x640xf32> to vector<8x512xf32>
    %596 = vector.broadcast %594 : vector<8x1xf32> to vector<8x512xf32>
    %597 = arith.mulf %596, %595 : vector<8x512xf32>
    %598 = arith.addf %592, %597 : vector<8x512xf32>
    %c639_i32_104 = arith.constant 639 : i32
    %599 = tpu.dynamic_rotate %593 by %c639_i32_104 dim 1 : vector<8x640xf32>, i32 -> vector<8x640xf32>
    %600 = vector.extract_strided_slice %0 {offsets = [0, 30], sizes = [8, 1], strides = [1, 1]} : vector<8x33xf32> to vector<8x1xf32>
    %601 = vector.extract_strided_slice %599 {offsets = [0, 0], sizes = [8, 512], strides = [1, 1]} : vector<8x640xf32> to vector<8x512xf32>
    %602 = vector.broadcast %600 : vector<8x1xf32> to vector<8x512xf32>
    %603 = arith.mulf %602, %601 : vector<8x512xf32>
    %604 = arith.addf %598, %603 : vector<8x512xf32>
    %c639_i32_105 = arith.constant 639 : i32
    %605 = tpu.dynamic_rotate %599 by %c639_i32_105 dim 1 : vector<8x640xf32>, i32 -> vector<8x640xf32>
    %606 = vector.extract_strided_slice %0 {offsets = [0, 31], sizes = [8, 1], strides = [1, 1]} : vector<8x33xf32> to vector<8x1xf32>
    %607 = vector.extract_strided_slice %605 {offsets = [0, 0], sizes = [8, 512], strides = [1, 1]} : vector<8x640xf32> to vector<8x512xf32>
    %608 = vector.broadcast %606 : vector<8x1xf32> to vector<8x512xf32>
    %609 = arith.mulf %608, %607 : vector<8x512xf32>
    %610 = arith.addf %604, %609 : vector<8x512xf32>
    %c639_i32_106 = arith.constant 639 : i32
    %611 = tpu.dynamic_rotate %605 by %c639_i32_106 dim 1 : vector<8x640xf32>, i32 -> vector<8x640xf32>
    %612 = vector.extract_strided_slice %0 {offsets = [0, 32], sizes = [8, 1], strides = [1, 1]} : vector<8x33xf32> to vector<8x1xf32>
    %613 = vector.extract_strided_slice %611 {offsets = [0, 0], sizes = [8, 512], strides = [1, 1]} : vector<8x640xf32> to vector<8x512xf32>
    %614 = vector.broadcast %612 : vector<8x1xf32> to vector<8x512xf32>
    %615 = arith.mulf %614, %613 : vector<8x512xf32>
    %616 = arith.addf %610, %615 : vector<8x512xf32>
    %c0_107 = arith.constant 0 : index
    %c0_108 = arith.constant 0 : index
    %c1024 = arith.constant 1024 : index
    %617 = vector.load %arg4[%c0_107, %c0_108, %c1024] : memref<1x8x2048xf32, #tpu.memory_space<vmem>>, vector<1x8x512xf32>
    %618 = vector.shape_cast %617 : vector<1x8x512xf32> to vector<8x512xf32>
    %619 = vector.shape_cast %616 : vector<8x512xf32> to vector<1x8x512xf32>
    tpu.vector_store %arg4[%c0_107, %c0_108, %c1024], %619 {strides = array<i32>} : memref<1x8x2048xf32, #tpu.memory_space<vmem>>, vector<1x8x512xf32>,
    %c1536_i32 = arith.constant 1536 : i32
    %620 = arith.addi %1, %c1536_i32 : i32
    %621 = tpu.assume_multiple %620, 128 : i32
    %c0_109 = arith.constant 0 : index
    %c0_110 = arith.constant 0 : index
    %622 = arith.index_cast %621 : i32 to index
    %623 = vector.load %arg3[%c0_109, %c0_110, %622] : memref<1x1x2176xf32, #tpu.memory_space<vmem>>, vector<1x1x640xf32>
    %624 = vector.shape_cast %623 : vector<1x1x640xf32> to vector<1x640xf32>
    %625 = vector.shape_cast %624 : vector<1x640xf32> to vector<1x640xf32>
    %626 = vector.broadcast %625 : vector<1x640xf32> to vector<8x640xf32>
    %627 = vector.extract_strided_slice %0 {offsets = [0, 0], sizes = [8, 1], strides = [1, 1]} : vector<8x33xf32> to vector<8x1xf32>
    %628 = vector.extract_strided_slice %626 {offsets = [0, 0], sizes = [8, 512], strides = [1, 1]} : vector<8x640xf32> to vector<8x512xf32>
    %629 = vector.broadcast %627 : vector<8x1xf32> to vector<8x512xf32>
    %630 = arith.mulf %629, %628 : vector<8x512xf32>
    %c639_i32_111 = arith.constant 639 : i32
    %631 = tpu.dynamic_rotate %626 by %c639_i32_111 dim 1 : vector<8x640xf32>, i32 -> vector<8x640xf32>
    %632 = vector.extract_strided_slice %0 {offsets = [0, 1], sizes = [8, 1], strides = [1, 1]} : vector<8x33xf32> to vector<8x1xf32>
    %633 = vector.extract_strided_slice %631 {offsets = [0, 0], sizes = [8, 512], strides = [1, 1]} : vector<8x640xf32> to vector<8x512xf32>
    %634 = vector.broadcast %632 : vector<8x1xf32> to vector<8x512xf32>
    %635 = arith.mulf %634, %633 : vector<8x512xf32>
    %636 = arith.addf %630, %635 : vector<8x512xf32>
    %c639_i32_112 = arith.constant 639 : i32
    %637 = tpu.dynamic_rotate %631 by %c639_i32_112 dim 1 : vector<8x640xf32>, i32 -> vector<8x640xf32>
    %638 = vector.extract_strided_slice %0 {offsets = [0, 2], sizes = [8, 1], strides = [1, 1]} : vector<8x33xf32> to vector<8x1xf32>
    %639 = vector.extract_strided_slice %637 {offsets = [0, 0], sizes = [8, 512], strides = [1, 1]} : vector<8x640xf32> to vector<8x512xf32>
    %640 = vector.broadcast %638 : vector<8x1xf32> to vector<8x512xf32>
    %641 = arith.mulf %640, %639 : vector<8x512xf32>
    %642 = arith.addf %636, %641 : vector<8x512xf32>
    %c639_i32_113 = arith.constant 639 : i32
    %643 = tpu.dynamic_rotate %637 by %c639_i32_113 dim 1 : vector<8x640xf32>, i32 -> vector<8x640xf32>
    %644 = vector.extract_strided_slice %0 {offsets = [0, 3], sizes = [8, 1], strides = [1, 1]} : vector<8x33xf32> to vector<8x1xf32>
    %645 = vector.extract_strided_slice %643 {offsets = [0, 0], sizes = [8, 512], strides = [1, 1]} : vector<8x640xf32> to vector<8x512xf32>
    %646 = vector.broadcast %644 : vector<8x1xf32> to vector<8x512xf32>
    %647 = arith.mulf %646, %645 : vector<8x512xf32>
    %648 = arith.addf %642, %647 : vector<8x512xf32>
    %c639_i32_114 = arith.constant 639 : i32
    %649 = tpu.dynamic_rotate %643 by %c639_i32_114 dim 1 : vector<8x640xf32>, i32 -> vector<8x640xf32>
    %650 = vector.extract_strided_slice %0 {offsets = [0, 4], sizes = [8, 1], strides = [1, 1]} : vector<8x33xf32> to vector<8x1xf32>
    %651 = vector.extract_strided_slice %649 {offsets = [0, 0], sizes = [8, 512], strides = [1, 1]} : vector<8x640xf32> to vector<8x512xf32>
    %652 = vector.broadcast %650 : vector<8x1xf32> to vector<8x512xf32>
    %653 = arith.mulf %652, %651 : vector<8x512xf32>
    %654 = arith.addf %648, %653 : vector<8x512xf32>
    %c639_i32_115 = arith.constant 639 : i32
    %655 = tpu.dynamic_rotate %649 by %c639_i32_115 dim 1 : vector<8x640xf32>, i32 -> vector<8x640xf32>
    %656 = vector.extract_strided_slice %0 {offsets = [0, 5], sizes = [8, 1], strides = [1, 1]} : vector<8x33xf32> to vector<8x1xf32>
    %657 = vector.extract_strided_slice %655 {offsets = [0, 0], sizes = [8, 512], strides = [1, 1]} : vector<8x640xf32> to vector<8x512xf32>
    %658 = vector.broadcast %656 : vector<8x1xf32> to vector<8x512xf32>
    %659 = arith.mulf %658, %657 : vector<8x512xf32>
    %660 = arith.addf %654, %659 : vector<8x512xf32>
    %c639_i32_116 = arith.constant 639 : i32
    %661 = tpu.dynamic_rotate %655 by %c639_i32_116 dim 1 : vector<8x640xf32>, i32 -> vector<8x640xf32>
    %662 = vector.extract_strided_slice %0 {offsets = [0, 6], sizes = [8, 1], strides = [1, 1]} : vector<8x33xf32> to vector<8x1xf32>
    %663 = vector.extract_strided_slice %661 {offsets = [0, 0], sizes = [8, 512], strides = [1, 1]} : vector<8x640xf32> to vector<8x512xf32>
    %664 = vector.broadcast %662 : vector<8x1xf32> to vector<8x512xf32>
    %665 = arith.mulf %664, %663 : vector<8x512xf32>
    %666 = arith.addf %660, %665 : vector<8x512xf32>
    %c639_i32_117 = arith.constant 639 : i32
    %667 = tpu.dynamic_rotate %661 by %c639_i32_117 dim 1 : vector<8x640xf32>, i32 -> vector<8x640xf32>
    %668 = vector.extract_strided_slice %0 {offsets = [0, 7], sizes = [8, 1], strides = [1, 1]} : vector<8x33xf32> to vector<8x1xf32>
    %669 = vector.extract_strided_slice %667 {offsets = [0, 0], sizes = [8, 512], strides = [1, 1]} : vector<8x640xf32> to vector<8x512xf32>
    %670 = vector.broadcast %668 : vector<8x1xf32> to vector<8x512xf32>
    %671 = arith.mulf %670, %669 : vector<8x512xf32>
    %672 = arith.addf %666, %671 : vector<8x512xf32>
    %c639_i32_118 = arith.constant 639 : i32
    %673 = tpu.dynamic_rotate %667 by %c639_i32_118 dim 1 : vector<8x640xf32>, i32 -> vector<8x640xf32>
    %674 = vector.extract_strided_slice %0 {offsets = [0, 8], sizes = [8, 1], strides = [1, 1]} : vector<8x33xf32> to vector<8x1xf32>
    %675 = vector.extract_strided_slice %673 {offsets = [0, 0], sizes = [8, 512], strides = [1, 1]} : vector<8x640xf32> to vector<8x512xf32>
    %676 = vector.broadcast %674 : vector<8x1xf32> to vector<8x512xf32>
    %677 = arith.mulf %676, %675 : vector<8x512xf32>
    %678 = arith.addf %672, %677 : vector<8x512xf32>
    %c639_i32_119 = arith.constant 639 : i32
    %679 = tpu.dynamic_rotate %673 by %c639_i32_119 dim 1 : vector<8x640xf32>, i32 -> vector<8x640xf32>
    %680 = vector.extract_strided_slice %0 {offsets = [0, 9], sizes = [8, 1], strides = [1, 1]} : vector<8x33xf32> to vector<8x1xf32>
    %681 = vector.extract_strided_slice %679 {offsets = [0, 0], sizes = [8, 512], strides = [1, 1]} : vector<8x640xf32> to vector<8x512xf32>
    %682 = vector.broadcast %680 : vector<8x1xf32> to vector<8x512xf32>
    %683 = arith.mulf %682, %681 : vector<8x512xf32>
    %684 = arith.addf %678, %683 : vector<8x512xf32>
    %c639_i32_120 = arith.constant 639 : i32
    %685 = tpu.dynamic_rotate %679 by %c639_i32_120 dim 1 : vector<8x640xf32>, i32 -> vector<8x640xf32>
    %686 = vector.extract_strided_slice %0 {offsets = [0, 10], sizes = [8, 1], strides = [1, 1]} : vector<8x33xf32> to vector<8x1xf32>
    %687 = vector.extract_strided_slice %685 {offsets = [0, 0], sizes = [8, 512], strides = [1, 1]} : vector<8x640xf32> to vector<8x512xf32>
    %688 = vector.broadcast %686 : vector<8x1xf32> to vector<8x512xf32>
    %689 = arith.mulf %688, %687 : vector<8x512xf32>
    %690 = arith.addf %684, %689 : vector<8x512xf32>
    %c639_i32_121 = arith.constant 639 : i32
    %691 = tpu.dynamic_rotate %685 by %c639_i32_121 dim 1 : vector<8x640xf32>, i32 -> vector<8x640xf32>
    %692 = vector.extract_strided_slice %0 {offsets = [0, 11], sizes = [8, 1], strides = [1, 1]} : vector<8x33xf32> to vector<8x1xf32>
    %693 = vector.extract_strided_slice %691 {offsets = [0, 0], sizes = [8, 512], strides = [1, 1]} : vector<8x640xf32> to vector<8x512xf32>
    %694 = vector.broadcast %692 : vector<8x1xf32> to vector<8x512xf32>
    %695 = arith.mulf %694, %693 : vector<8x512xf32>
    %696 = arith.addf %690, %695 : vector<8x512xf32>
    %c639_i32_122 = arith.constant 639 : i32
    %697 = tpu.dynamic_rotate %691 by %c639_i32_122 dim 1 : vector<8x640xf32>, i32 -> vector<8x640xf32>
    %698 = vector.extract_strided_slice %0 {offsets = [0, 12], sizes = [8, 1], strides = [1, 1]} : vector<8x33xf32> to vector<8x1xf32>
    %699 = vector.extract_strided_slice %697 {offsets = [0, 0], sizes = [8, 512], strides = [1, 1]} : vector<8x640xf32> to vector<8x512xf32>
    %700 = vector.broadcast %698 : vector<8x1xf32> to vector<8x512xf32>
    %701 = arith.mulf %700, %699 : vector<8x512xf32>
    %702 = arith.addf %696, %701 : vector<8x512xf32>
    %c639_i32_123 = arith.constant 639 : i32
    %703 = tpu.dynamic_rotate %697 by %c639_i32_123 dim 1 : vector<8x640xf32>, i32 -> vector<8x640xf32>
    %704 = vector.extract_strided_slice %0 {offsets = [0, 13], sizes = [8, 1], strides = [1, 1]} : vector<8x33xf32> to vector<8x1xf32>
    %705 = vector.extract_strided_slice %703 {offsets = [0, 0], sizes = [8, 512], strides = [1, 1]} : vector<8x640xf32> to vector<8x512xf32>
    %706 = vector.broadcast %704 : vector<8x1xf32> to vector<8x512xf32>
    %707 = arith.mulf %706, %705 : vector<8x512xf32>
    %708 = arith.addf %702, %707 : vector<8x512xf32>
    %c639_i32_124 = arith.constant 639 : i32
    %709 = tpu.dynamic_rotate %703 by %c639_i32_124 dim 1 : vector<8x640xf32>, i32 -> vector<8x640xf32>
    %710 = vector.extract_strided_slice %0 {offsets = [0, 14], sizes = [8, 1], strides = [1, 1]} : vector<8x33xf32> to vector<8x1xf32>
    %711 = vector.extract_strided_slice %709 {offsets = [0, 0], sizes = [8, 512], strides = [1, 1]} : vector<8x640xf32> to vector<8x512xf32>
    %712 = vector.broadcast %710 : vector<8x1xf32> to vector<8x512xf32>
    %713 = arith.mulf %712, %711 : vector<8x512xf32>
    %714 = arith.addf %708, %713 : vector<8x512xf32>
    %c639_i32_125 = arith.constant 639 : i32
    %715 = tpu.dynamic_rotate %709 by %c639_i32_125 dim 1 : vector<8x640xf32>, i32 -> vector<8x640xf32>
    %716 = vector.extract_strided_slice %0 {offsets = [0, 15], sizes = [8, 1], strides = [1, 1]} : vector<8x33xf32> to vector<8x1xf32>
    %717 = vector.extract_strided_slice %715 {offsets = [0, 0], sizes = [8, 512], strides = [1, 1]} : vector<8x640xf32> to vector<8x512xf32>
    %718 = vector.broadcast %716 : vector<8x1xf32> to vector<8x512xf32>
    %719 = arith.mulf %718, %717 : vector<8x512xf32>
    %720 = arith.addf %714, %719 : vector<8x512xf32>
    %c639_i32_126 = arith.constant 639 : i32
    %721 = tpu.dynamic_rotate %715 by %c639_i32_126 dim 1 : vector<8x640xf32>, i32 -> vector<8x640xf32>
    %722 = vector.extract_strided_slice %0 {offsets = [0, 16], sizes = [8, 1], strides = [1, 1]} : vector<8x33xf32> to vector<8x1xf32>
    %723 = vector.extract_strided_slice %721 {offsets = [0, 0], sizes = [8, 512], strides = [1, 1]} : vector<8x640xf32> to vector<8x512xf32>
    %724 = vector.broadcast %722 : vector<8x1xf32> to vector<8x512xf32>
    %725 = arith.mulf %724, %723 : vector<8x512xf32>
    %726 = arith.addf %720, %725 : vector<8x512xf32>
    %c639_i32_127 = arith.constant 639 : i32
    %727 = tpu.dynamic_rotate %721 by %c639_i32_127 dim 1 : vector<8x640xf32>, i32 -> vector<8x640xf32>
    %728 = vector.extract_strided_slice %0 {offsets = [0, 17], sizes = [8, 1], strides = [1, 1]} : vector<8x33xf32> to vector<8x1xf32>
    %729 = vector.extract_strided_slice %727 {offsets = [0, 0], sizes = [8, 512], strides = [1, 1]} : vector<8x640xf32> to vector<8x512xf32>
    %730 = vector.broadcast %728 : vector<8x1xf32> to vector<8x512xf32>
    %731 = arith.mulf %730, %729 : vector<8x512xf32>
    %732 = arith.addf %726, %731 : vector<8x512xf32>
    %c639_i32_128 = arith.constant 639 : i32
    %733 = tpu.dynamic_rotate %727 by %c639_i32_128 dim 1 : vector<8x640xf32>, i32 -> vector<8x640xf32>
    %734 = vector.extract_strided_slice %0 {offsets = [0, 18], sizes = [8, 1], strides = [1, 1]} : vector<8x33xf32> to vector<8x1xf32>
    %735 = vector.extract_strided_slice %733 {offsets = [0, 0], sizes = [8, 512], strides = [1, 1]} : vector<8x640xf32> to vector<8x512xf32>
    %736 = vector.broadcast %734 : vector<8x1xf32> to vector<8x512xf32>
    %737 = arith.mulf %736, %735 : vector<8x512xf32>
    %738 = arith.addf %732, %737 : vector<8x512xf32>
    %c639_i32_129 = arith.constant 639 : i32
    %739 = tpu.dynamic_rotate %733 by %c639_i32_129 dim 1 : vector<8x640xf32>, i32 -> vector<8x640xf32>
    %740 = vector.extract_strided_slice %0 {offsets = [0, 19], sizes = [8, 1], strides = [1, 1]} : vector<8x33xf32> to vector<8x1xf32>
    %741 = vector.extract_strided_slice %739 {offsets = [0, 0], sizes = [8, 512], strides = [1, 1]} : vector<8x640xf32> to vector<8x512xf32>
    %742 = vector.broadcast %740 : vector<8x1xf32> to vector<8x512xf32>
    %743 = arith.mulf %742, %741 : vector<8x512xf32>
    %744 = arith.addf %738, %743 : vector<8x512xf32>
    %c639_i32_130 = arith.constant 639 : i32
    %745 = tpu.dynamic_rotate %739 by %c639_i32_130 dim 1 : vector<8x640xf32>, i32 -> vector<8x640xf32>
    %746 = vector.extract_strided_slice %0 {offsets = [0, 20], sizes = [8, 1], strides = [1, 1]} : vector<8x33xf32> to vector<8x1xf32>
    %747 = vector.extract_strided_slice %745 {offsets = [0, 0], sizes = [8, 512], strides = [1, 1]} : vector<8x640xf32> to vector<8x512xf32>
    %748 = vector.broadcast %746 : vector<8x1xf32> to vector<8x512xf32>
    %749 = arith.mulf %748, %747 : vector<8x512xf32>
    %750 = arith.addf %744, %749 : vector<8x512xf32>
    %c639_i32_131 = arith.constant 639 : i32
    %751 = tpu.dynamic_rotate %745 by %c639_i32_131 dim 1 : vector<8x640xf32>, i32 -> vector<8x640xf32>
    %752 = vector.extract_strided_slice %0 {offsets = [0, 21], sizes = [8, 1], strides = [1, 1]} : vector<8x33xf32> to vector<8x1xf32>
    %753 = vector.extract_strided_slice %751 {offsets = [0, 0], sizes = [8, 512], strides = [1, 1]} : vector<8x640xf32> to vector<8x512xf32>
    %754 = vector.broadcast %752 : vector<8x1xf32> to vector<8x512xf32>
    %755 = arith.mulf %754, %753 : vector<8x512xf32>
    %756 = arith.addf %750, %755 : vector<8x512xf32>
    %c639_i32_132 = arith.constant 639 : i32
    %757 = tpu.dynamic_rotate %751 by %c639_i32_132 dim 1 : vector<8x640xf32>, i32 -> vector<8x640xf32>
    %758 = vector.extract_strided_slice %0 {offsets = [0, 22], sizes = [8, 1], strides = [1, 1]} : vector<8x33xf32> to vector<8x1xf32>
    %759 = vector.extract_strided_slice %757 {offsets = [0, 0], sizes = [8, 512], strides = [1, 1]} : vector<8x640xf32> to vector<8x512xf32>
    %760 = vector.broadcast %758 : vector<8x1xf32> to vector<8x512xf32>
    %761 = arith.mulf %760, %759 : vector<8x512xf32>
    %762 = arith.addf %756, %761 : vector<8x512xf32>
    %c639_i32_133 = arith.constant 639 : i32
    %763 = tpu.dynamic_rotate %757 by %c639_i32_133 dim 1 : vector<8x640xf32>, i32 -> vector<8x640xf32>
    %764 = vector.extract_strided_slice %0 {offsets = [0, 23], sizes = [8, 1], strides = [1, 1]} : vector<8x33xf32> to vector<8x1xf32>
    %765 = vector.extract_strided_slice %763 {offsets = [0, 0], sizes = [8, 512], strides = [1, 1]} : vector<8x640xf32> to vector<8x512xf32>
    %766 = vector.broadcast %764 : vector<8x1xf32> to vector<8x512xf32>
    %767 = arith.mulf %766, %765 : vector<8x512xf32>
    %768 = arith.addf %762, %767 : vector<8x512xf32>
    %c639_i32_134 = arith.constant 639 : i32
    %769 = tpu.dynamic_rotate %763 by %c639_i32_134 dim 1 : vector<8x640xf32>, i32 -> vector<8x640xf32>
    %770 = vector.extract_strided_slice %0 {offsets = [0, 24], sizes = [8, 1], strides = [1, 1]} : vector<8x33xf32> to vector<8x1xf32>
    %771 = vector.extract_strided_slice %769 {offsets = [0, 0], sizes = [8, 512], strides = [1, 1]} : vector<8x640xf32> to vector<8x512xf32>
    %772 = vector.broadcast %770 : vector<8x1xf32> to vector<8x512xf32>
    %773 = arith.mulf %772, %771 : vector<8x512xf32>
    %774 = arith.addf %768, %773 : vector<8x512xf32>
    %c639_i32_135 = arith.constant 639 : i32
    %775 = tpu.dynamic_rotate %769 by %c639_i32_135 dim 1 : vector<8x640xf32>, i32 -> vector<8x640xf32>
    %776 = vector.extract_strided_slice %0 {offsets = [0, 25], sizes = [8, 1], strides = [1, 1]} : vector<8x33xf32> to vector<8x1xf32>
    %777 = vector.extract_strided_slice %775 {offsets = [0, 0], sizes = [8, 512], strides = [1, 1]} : vector<8x640xf32> to vector<8x512xf32>
    %778 = vector.broadcast %776 : vector<8x1xf32> to vector<8x512xf32>
    %779 = arith.mulf %778, %777 : vector<8x512xf32>
    %780 = arith.addf %774, %779 : vector<8x512xf32>
    %c639_i32_136 = arith.constant 639 : i32
    %781 = tpu.dynamic_rotate %775 by %c639_i32_136 dim 1 : vector<8x640xf32>, i32 -> vector<8x640xf32>
    %782 = vector.extract_strided_slice %0 {offsets = [0, 26], sizes = [8, 1], strides = [1, 1]} : vector<8x33xf32> to vector<8x1xf32>
    %783 = vector.extract_strided_slice %781 {offsets = [0, 0], sizes = [8, 512], strides = [1, 1]} : vector<8x640xf32> to vector<8x512xf32>
    %784 = vector.broadcast %782 : vector<8x1xf32> to vector<8x512xf32>
    %785 = arith.mulf %784, %783 : vector<8x512xf32>
    %786 = arith.addf %780, %785 : vector<8x512xf32>
    %c639_i32_137 = arith.constant 639 : i32
    %787 = tpu.dynamic_rotate %781 by %c639_i32_137 dim 1 : vector<8x640xf32>, i32 -> vector<8x640xf32>
    %788 = vector.extract_strided_slice %0 {offsets = [0, 27], sizes = [8, 1], strides = [1, 1]} : vector<8x33xf32> to vector<8x1xf32>
    %789 = vector.extract_strided_slice %787 {offsets = [0, 0], sizes = [8, 512], strides = [1, 1]} : vector<8x640xf32> to vector<8x512xf32>
    %790 = vector.broadcast %788 : vector<8x1xf32> to vector<8x512xf32>
    %791 = arith.mulf %790, %789 : vector<8x512xf32>
    %792 = arith.addf %786, %791 : vector<8x512xf32>
    %c639_i32_138 = arith.constant 639 : i32
    %793 = tpu.dynamic_rotate %787 by %c639_i32_138 dim 1 : vector<8x640xf32>, i32 -> vector<8x640xf32>
    %794 = vector.extract_strided_slice %0 {offsets = [0, 28], sizes = [8, 1], strides = [1, 1]} : vector<8x33xf32> to vector<8x1xf32>
    %795 = vector.extract_strided_slice %793 {offsets = [0, 0], sizes = [8, 512], strides = [1, 1]} : vector<8x640xf32> to vector<8x512xf32>
    %796 = vector.broadcast %794 : vector<8x1xf32> to vector<8x512xf32>
    %797 = arith.mulf %796, %795 : vector<8x512xf32>
    %798 = arith.addf %792, %797 : vector<8x512xf32>
    %c639_i32_139 = arith.constant 639 : i32
    %799 = tpu.dynamic_rotate %793 by %c639_i32_139 dim 1 : vector<8x640xf32>, i32 -> vector<8x640xf32>
    %800 = vector.extract_strided_slice %0 {offsets = [0, 29], sizes = [8, 1], strides = [1, 1]} : vector<8x33xf32> to vector<8x1xf32>
    %801 = vector.extract_strided_slice %799 {offsets = [0, 0], sizes = [8, 512], strides = [1, 1]} : vector<8x640xf32> to vector<8x512xf32>
    %802 = vector.broadcast %800 : vector<8x1xf32> to vector<8x512xf32>
    %803 = arith.mulf %802, %801 : vector<8x512xf32>
    %804 = arith.addf %798, %803 : vector<8x512xf32>
    %c639_i32_140 = arith.constant 639 : i32
    %805 = tpu.dynamic_rotate %799 by %c639_i32_140 dim 1 : vector<8x640xf32>, i32 -> vector<8x640xf32>
    %806 = vector.extract_strided_slice %0 {offsets = [0, 30], sizes = [8, 1], strides = [1, 1]} : vector<8x33xf32> to vector<8x1xf32>
    %807 = vector.extract_strided_slice %805 {offsets = [0, 0], sizes = [8, 512], strides = [1, 1]} : vector<8x640xf32> to vector<8x512xf32>
    %808 = vector.broadcast %806 : vector<8x1xf32> to vector<8x512xf32>
    %809 = arith.mulf %808, %807 : vector<8x512xf32>
    %810 = arith.addf %804, %809 : vector<8x512xf32>
    %c639_i32_141 = arith.constant 639 : i32
    %811 = tpu.dynamic_rotate %805 by %c639_i32_141 dim 1 : vector<8x640xf32>, i32 -> vector<8x640xf32>
    %812 = vector.extract_strided_slice %0 {offsets = [0, 31], sizes = [8, 1], strides = [1, 1]} : vector<8x33xf32> to vector<8x1xf32>
    %813 = vector.extract_strided_slice %811 {offsets = [0, 0], sizes = [8, 512], strides = [1, 1]} : vector<8x640xf32> to vector<8x512xf32>
    %814 = vector.broadcast %812 : vector<8x1xf32> to vector<8x512xf32>
    %815 = arith.mulf %814, %813 : vector<8x512xf32>
    %816 = arith.addf %810, %815 : vector<8x512xf32>
    %c639_i32_142 = arith.constant 639 : i32
    %817 = tpu.dynamic_rotate %811 by %c639_i32_142 dim 1 : vector<8x640xf32>, i32 -> vector<8x640xf32>
    %818 = vector.extract_strided_slice %0 {offsets = [0, 32], sizes = [8, 1], strides = [1, 1]} : vector<8x33xf32> to vector<8x1xf32>
    %819 = vector.extract_strided_slice %817 {offsets = [0, 0], sizes = [8, 512], strides = [1, 1]} : vector<8x640xf32> to vector<8x512xf32>
    %820 = vector.broadcast %818 : vector<8x1xf32> to vector<8x512xf32>
    %821 = arith.mulf %820, %819 : vector<8x512xf32>
    %822 = arith.addf %816, %821 : vector<8x512xf32>
    %c0_143 = arith.constant 0 : index
    %c0_144 = arith.constant 0 : index
    %c1536 = arith.constant 1536 : index
    %823 = vector.load %arg4[%c0_143, %c0_144, %c1536] : memref<1x8x2048xf32, #tpu.memory_space<vmem>>, vector<1x8x512xf32>
    %824 = vector.shape_cast %823 : vector<1x8x512xf32> to vector<8x512xf32>
    %825 = vector.shape_cast %822 : vector<8x512xf32> to vector<1x8x512xf32>
    tpu.vector_store %arg4[%c0_143, %c0_144, %c1536], %825 {strides = array<i32>} : memref<1x8x2048xf32, #tpu.memory_space<vmem>>, vector<1x8x512xf32>,
    return
  }
  func.func @transform_0(%arg0: i32, %arg1: i32) -> (i32, i32) {
    %c0_i32 = arith.constant 0 : i32
    %c0_i32_0 = arith.constant 0 : i32
    %c0_i32_1 = arith.constant 0 : i32
    return %c0_i32, %c0_i32_0 : i32, i32
  }
  func.func @transform_1(%arg0: i32, %arg1: i32) -> (i32, i32, i32) {
    %c0_i32 = arith.constant 0 : i32
    %c0_i32_0 = arith.constant 0 : i32
    %c0_i32_1 = arith.constant 0 : i32
    return %arg0, %c0_i32, %c0_i32_0 : i32, i32, i32
  }
  func.func @transform_2(%arg0: i32, %arg1: i32) -> (i32, i32, i32) {
    %c0_i32 = arith.constant 0 : i32
    %c0_i32_0 = arith.constant 0 : i32
    return %arg0, %c0_i32, %arg1 : i32, i32, i32
  }
}

</mosaic_0001>

<llo_original>
// kernel: a_call__.1
$region0: #{a_call__.1}
  #allocation0 [shape = 'u32[]', space=smem, size = 0x4, offset = 0x4, fixed_abs, tag = 'smem constant byte address 0x4 - core index']
  #allocation1 [shape = 'u32[144,128]{1,0:T(1,128)}', space=vmem, size = 0x12000, scoped, tag = 'internal scratch']
  %s0 = inlined_call_operand.vmem [shape: f32[8,33], index: 0, kind: input, shape index: {}]
  %s1 = inlined_call_operand.vmem [shape: f32[2,1,2176], index: 1, kind: input, shape index: {}]
  %s2 = inlined_call_operand.hbm [shape: f32[2,8,2048], index: 2, kind: output, shape index: {}]
  %s3 = sld [smem:[#allocation0]]
  $region41: #{a_call__.1} parent=0
    _
  %s5 = ssub.s32 1, %s3
  %s6 = scalar_select 0, %s5, %s3
  $region1: #{a_call__.1} parent=0
    #allocation2 [shape = 'u8[131072]{0}', space=vmem, size = 0x20000, scoped, tag = 'output window, operand 0']
    #allocation3 [shape = 's32[2]{0}', space=sflag, size = 0x8, scoped, tag = 'scoped memory for a_call__.1']
    %7 = vsyncpa [#allocation3], 0
    %s8 = scalar_lea.sflag [#allocation3], 1
    %9 = vsyncpa %s8, 0
    loop: start=0, step=1, limit=4
    $region2: #{a_call__.1} parent=1 // loop_pre_header
      _
    $region3: #{a_call__.1} parent=1 // loop_header
      %s11 = sphi 0, %s15
      %p12 = scmp.ge.s32.totalorder %s11, 4
      %s18 = sphi 0, %s30
      %s19 = sphi 0, %s26
      %s20 = sphi 0, %s18
      %s21 = sphi 0, %s19
      %s22 = sphi 0, %s20
      %s23 = sphi 0, %s21
      %s31 = sphi 0, %s31
      %s33 = sphi 0, %s31
      %s34 = sphi 0, %s33
      %s48 = sphi 0, %s34
      %s54 = sphi 0, %s56
      %s57 = sphi 0, %s54
      %s58 = sphi 0, %s57
      %s74 = sphi 0, %s58
      %s82 = sphi 0, %s84
      %s85 = sphi 0, %s82
      %s86 = sphi 0, %s85
      %s102 = sphi 0, %s86
    $region4: #{a_call__.1} parent=1 // loop_header_branch
      %14 = sbr.rel (%p12) target = $region8
    $region5: #{a_call__.1} parent=1 // loop_body
      %s16 = ssub.s32 %s11, 1
      %s17 = ssub.s32 %s11, 2
      %s24 = sadd.s32 1, %s19
      %p25 = scmp.ge.s32.totalorder %s24, 1
      %s26 = scalar_select %p25, 0, %s24
      %s27 = sadd.s32 1, %s18
      %s28 = scalar_select %p25, %s27, %s18
      %p29 = scmp.ge.s32.totalorder %s28, 2
      %s30 = scalar_select %p29, 0, %s28
      %s32 = sadd.s32 %s31, 1
      %p35 = scmp.eq.s32.totalorder %s11, 1
      %p36 = scmp.ne.s32.totalorder %s31, %s33
      %p37 = scmp.eq.s32.totalorder %s11, 0
      %p38 = por %p36, %p37
      %p39 = scmp.ne.s32.totalorder %s31, %s33
      %p40 = scmp.eq.s32.totalorder %s16, 1
      %p41 = por %p39, %p40
      %p42 = scmp.ne.s32.totalorder %s33, %s34
      %p43 = scmp.eq.s32.totalorder %s16, 0
      %p44 = por %p42, %p43
      %p45 = scmp.ne.s32.totalorder %s33, %s34
      %p46 = scmp.eq.s32.totalorder %s17, 1
      %p47 = por %p45, %p46
      %p49 = scmp.ne.s32.totalorder %s34, %s48
      %p50 = scmp.eq.s32.totalorder %s17, 0
      %p51 = por %p49, %p50
      %s52 = ssub.s32 %s18, %s30
      %p53 = scmp.eq.s32.totalorder %s52, 0
      %s55 = sadd.s32 %s54, 1
      %s56 = scalar_select %p53, %s54, %s55
      %p59 = pneg %p53
      %p60 = scmp.eq.s32.totalorder %s11, 1
      %p61 = por %p59, %p60
      %p62 = scmp.ne.s32.totalorder %s54, %s57
      %p63 = scmp.eq.s32.totalorder %s11, 0
      %p64 = por %p62, %p63
      %p65 = scmp.ne.s32.totalorder %s54, %s57
      %p66 = scmp.eq.s32.totalorder %s16, 1
      %p67 = por %p65, %p66
      %p68 = scmp.ne.s32.totalorder %s57, %s58
      %p69 = scmp.eq.s32.totalorder %s16, 0
      %p70 = por %p68, %p69
      %p71 = scmp.ne.s32.totalorder %s57, %s58
      %p72 = scmp.eq.s32.totalorder %s17, 1
      %p73 = por %p71, %p72
      %p75 = scmp.ne.s32.totalorder %s58, %s74
      %p76 = scmp.eq.s32.totalorder %s17, 0
      %p77 = por %p75, %p76
      %s78 = ssub.s32 %s18, %s30
      %s79 = ssub.s32 %s19, %s26
      %s80 = sor.u32 %s78, %s79
      %p81 = scmp.eq.s32.totalorder %s80, 0
      %s83 = sadd.s32 %s82, 1
      %s84 = scalar_select %p81, %s82, %s83
      %p87 = pneg %p81
      %p88 = scmp.eq.s32.totalorder %s11, 1
      %p89 = por %p87, %p88
      %p90 = scmp.ne.s32.totalorder %s82, %s85
      %p91 = scmp.eq.s32.totalorder %s11, 0
      %p92 = por %p90, %p91
      %p93 = scmp.ne.s32.totalorder %s82, %s85
      %p94 = scmp.eq.s32.totalorder %s16, 1
      %p95 = por %p93, %p94
      %p96 = scmp.ne.s32.totalorder %s85, %s86
      %p97 = scmp.eq.s32.totalorder %s16, 0
      %p98 = por %p96, %p97
      %p99 = scmp.ne.s32.totalorder %s85, %s86
      %p100 = scmp.eq.s32.totalorder %s17, 1
      %p101 = por %p99, %p100
      %p103 = scmp.ne.s32.totalorder %s86, %s102
      %p104 = scmp.eq.s32.totalorder %s17, 0
      %p105 = por %p103, %p104
      %p106 = scmp.le.s32.totalorder 1, %s11
      %p107 = scmp.lt.s32.totalorder %s11, 3
      %p108 = pnand %p106, %p107
      %p109 = pneg %p108
      // Predicated region
      $region9: #{a_call__.1} parent=5 // pred_check
        _
      $region10: #{a_call__.1} parent=5 // pred_check_branch
        %111 = sbr.rel (%p108) target = $region12
      $region11: #{a_call__.1} parent=5 // pred_region
        %s112 = ssub.s32 %s11, 1
        // Predicated region
        $region13: #{a_call__.1} parent=11 // pred_check
          %p113 = pneg %p44
        $region14: #{a_call__.1} parent=11 // pred_check_branch
          %115 = sbr.rel (%p113) target = $region16
        $region15: #{a_call__.1} parent=11 // pred_region
          _
        $region16: #{a_call__.1} parent=11 // pred_fallthru
          _
      $region12: #{a_call__.1} parent=5 // pred_fallthru
        _
      %p116 = scmp.lt.s32.totalorder %s11, 2
      // Predicated region
      $region17: #{a_call__.1} parent=5 // pred_check
        %p117 = pneg %p116
      $region18: #{a_call__.1} parent=5 // pred_check_branch
        %119 = sbr.rel (%p117) target = $region20
      $region19: #{a_call__.1} parent=5 // pred_region
        // Predicated region
        $region21: #{a_call__.1} parent=19 // pred_check
          %p120 = pneg %p64
        $region22: #{a_call__.1} parent=19 // pred_check_branch
          %122 = sbr.rel (%p120) target = $region24
        $region23: #{a_call__.1} parent=19 // pred_region
          %p123 = scmp.lt.s32.totalorder %s18, 1
          %s124 = scalar_select %p123, %s18, 1
          %s125 = smul.addr %s124, 17
          %s126 = scalar_lea.vmem %s1, %s125
        $region24: #{a_call__.1} parent=19 // pred_fallthru
          _
      $region20: #{a_call__.1} parent=5 // pred_fallthru
        _
      %p127 = scmp.le.s32.totalorder 1, %s11
      %p128 = scmp.lt.s32.totalorder %s11, 3
      %p129 = pnand %p127, %p128
      %p130 = pneg %p129
      // Predicated region
      $region25: #{a_call__.1} parent=5 // pred_check
        _
      $region26: #{a_call__.1} parent=5 // pred_check_branch
        %132 = sbr.rel (%p129) target = $region28
      $region27: #{a_call__.1} parent=5 // pred_region
        %s133 = ssub.s32 %s11, 1
        %p134 = pneg %p44
        %p135 = pneg %p41
        %p136 = scmp.lt.s32.totalorder %s20, 1
        %s137 = scalar_select %p136, %s20, 1
        %s138 = smul.addr %s137, 17
        %s139 = scalar_lea.vmem %s1, %s138
        %p140 = pneg %p70
        %p141 = pneg %p67
        %p142 = pneg %p98
        %p143 = pneg %p95
        %s144 = sand.u32 %s85, 1
        %s145 = scalar_lea.sflag [#allocation3], %s144
        %s146 = sand.u32 %s85, 1
        %s147 = smul.addr %s146, 128
        %s148 = scalar_lea.vmem [#allocation2], %s147
        %p149 = scmp.lt.s32.totalorder %s20, 1
        %s150 = scalar_select %p149, %s20, 1
        %s151 = smul.addr %s150, 17
        %s152 = scalar_lea.vmem %s1, %s151
        %s153 = smul.u32 16, %s21
        %v154 = vld [vmem:[%s0] sm:$0xff]
        %s155 = smul.u32 %s21, 2048
        %s156 = sshra.s32 %s155, 7
        %s157 = sand.u32 %s155, 127
        %s158 = scalar_lea.vmem %s152, %s156
        %v159 = vld [vmem:[%s158] sm:$0x1f]
        %v161 = vlaneseq
        %v162 = vshrl.u32 %v161, 7
        %v163 = vsub.s32 0, %v162
        %v164 = vrot.slane %v159, %v163
        %v165 = vlaneseq
        %v166 = vshrl.u32 %v165, 7
        %v167 = vsub.s32 1, %v166
        %v168 = vrot.slane %v159, %v167
        %v169 = vlaneseq
        %v170 = vshrl.u32 %v169, 7
        %v171 = vsub.s32 2, %v170
        %v172 = vrot.slane %v159, %v171
        %v173 = vlaneseq
        %v174 = vshrl.u32 %v173, 7
        %v175 = vsub.s32 3, %v174
        %v176 = vrot.slane %v159, %v175
        %v177 = vlaneseq
        %v178 = vshrl.u32 %v177, 7
        %v179 = vsub.s32 4, %v178
        %v180 = vrot.slane %v159, %v179
        %187 = vset.pattern.permute.xlu0 0
        %188 = vperm.xlu0 %187, %v154
        %v189 = vpop.permute.xlu0 %188
        %v191 = vmul.f32 %v189, %v164
        %v192 = vmul.f32 %v189, %v168
        %v193 = vmul.f32 %v189, %v172
        %v194 = vmul.f32 %v189, %v176
        %195 = vrot.lane.b32.xlu0 %v164, 127
        %v196 = vpop.permute.xlu0 %195
        %197 = vrot.lane.b32.xlu0 %v168, 127
        %v198 = vpop.permute.xlu0 %197
        %199 = vrot.lane.b32.xlu0 %v172, 127
        %v200 = vpop.permute.xlu0 %199
        %201 = vrot.lane.b32.xlu0 %v176, 127
        %v202 = vpop.permute.xlu0 %201
        %203 = vrot.lane.b32.xlu0 %v180, 127
        %v204 = vpop.permute.xlu0 %203
        %v205 = vlaneseq
        %v206 = vand.u32 %v205, 127
        %vm207 = vcmp.lt.s32.totalorder %v206, 127
        %v208 = vsel %vm207, %v202, %v204
        %v209 = vsel %vm207, %v200, %v202
        %v210 = vsel %vm207, %v198, %v200
        %v211 = vsel %vm207, %v196, %v198
        %v212 = vsel %vm207, %v204, %v196
        %213 = vset.pattern.permute.xlu0 1
        %214 = vperm.xlu0 %213, %v154
        %v215 = vpop.permute.xlu0 %214
        %v217 = vmul.f32 %v215, %v211
        %v218 = vmul.f32 %v215, %v210
        %v219 = vmul.f32 %v215, %v209
        %v220 = vmul.f32 %v215, %v208
        %v221 = vadd.f32 %v191, %v217
        %v222 = vadd.f32 %v192, %v218
        %v223 = vadd.f32 %v193, %v219
        %v224 = vadd.f32 %v194, %v220
        %225 = vrot.lane.b32.xlu0 %v211, 127
        %v226 = vpop.permute.xlu0 %225
        %227 = vrot.lane.b32.xlu0 %v210, 127
        %v228 = vpop.permute.xlu0 %227
        %229 = vrot.lane.b32.xlu0 %v209, 127
        %v230 = vpop.permute.xlu0 %229
        %231 = vrot.lane.b32.xlu0 %v208, 127
        %v232 = vpop.permute.xlu0 %231
        %233 = vrot.lane.b32.xlu0 %v212, 127
        %v234 = vpop.permute.xlu0 %233
        %v235 = vsel %vm207, %v232, %v234
        %v236 = vsel %vm207, %v230, %v232
        %v237 = vsel %vm207, %v228, %v230
        %v238 = vsel %vm207, %v226, %v228
        %v239 = vsel %vm207, %v234, %v226
        %240 = vset.pattern.permute.xlu0 2
        %241 = vperm.xlu0 %240, %v154
        %v242 = vpop.permute.xlu0 %241
        %v244 = vmul.f32 %v242, %v238
        %v245 = vmul.f32 %v242, %v237
        %v246 = vmul.f32 %v242, %v236
        %v247 = vmul.f32 %v242, %v235
        %v248 = vadd.f32 %v221, %v244
        %v249 = vadd.f32 %v222, %v245
        %v250 = vadd.f32 %v223, %v246
        %v251 = vadd.f32 %v224, %v247
        %252 = vrot.lane.b32.xlu0 %v238, 127
        %v253 = vpop.permute.xlu0 %252
        %254 = vrot.lane.b32.xlu0 %v237, 127
        %v255 = vpop.permute.xlu0 %254
        %256 = vrot.lane.b32.xlu0 %v236, 127
        %v257 = vpop.permute.xlu0 %256
        %258 = vrot.lane.b32.xlu0 %v235, 127
        %v259 = vpop.permute.xlu0 %258
        %260 = vrot.lane.b32.xlu0 %v239, 127
        %v261 = vpop.permute.xlu0 %260
        %v262 = vsel %vm207, %v259, %v261
        %v263 = vsel %vm207, %v257, %v259
        %v264 = vsel %vm207, %v255, %v257
        %v265 = vsel %vm207, %v253, %v255
        %v266 = vsel %vm207, %v261, %v253
        %267 = vset.pattern.permute.xlu0 3
        %268 = vperm.xlu0 %267, %v154
        %v269 = vpop.permute.xlu0 %268
        %v271 = vmul.f32 %v269, %v265
        %v272 = vmul.f32 %v269, %v264
        %v273 = vmul.f32 %v269, %v263
        %v274 = vmul.f32 %v269, %v262
        %v275 = vadd.f32 %v248, %v271
        %v276 = vadd.f32 %v249, %v272
        %v277 = vadd.f32 %v250, %v273
        %v278 = vadd.f32 %v251, %v274
        %279 = vrot.lane.b32.xlu0 %v265, 127
        %v280 = vpop.permute.xlu0 %279
        %281 = vrot.lane.b32.xlu0 %v264, 127
        %v282 = vpop.permute.xlu0 %281
        %283 = vrot.lane.b32.xlu0 %v263, 127
        %v284 = vpop.permute.xlu0 %283
        %285 = vrot.lane.b32.xlu0 %v262, 127
        %v286 = vpop.permute.xlu0 %285
        %287 = vrot.lane.b32.xlu0 %v266, 127
        %v288 = vpop.permute.xlu0 %287
        %v289 = vsel %vm207, %v286, %v288
        %v290 = vsel %vm207, %v284, %v286
        %v291 = vsel %vm207, %v282, %v284
        %v292 = vsel %vm207, %v280, %v282
        %v293 = vsel %vm207, %v288, %v280
        %294 = vset.pattern.permute.xlu0 4
        %295 = vperm.xlu0 %294, %v154
        %v296 = vpop.permute.xlu0 %295
        %v298 = vmul.f32 %v296, %v292
        %v299 = vmul.f32 %v296, %v291
        %v300 = vmul.f32 %v296, %v290
        %v301 = vmul.f32 %v296, %v289
        %v302 = vadd.f32 %v275, %v298
        %v303 = vadd.f32 %v276, %v299
        %v304 = vadd.f32 %v277, %v300
        %v305 = vadd.f32 %v278, %v301
        %306 = vrot.lane.b32.xlu0 %v292, 127
        %v307 = vpop.permute.xlu0 %306
        %308 = vrot.lane.b32.xlu0 %v291, 127
        %v309 = vpop.permute.xlu0 %308
        %310 = vrot.lane.b32.xlu0 %v290, 127
        %v311 = vpop.permute.xlu0 %310
        %312 = vrot.lane.b32.xlu0 %v289, 127
        %v313 = vpop.permute.xlu0 %312
        %314 = vrot.lane.b32.xlu0 %v293, 127
        %v315 = vpop.permute.xlu0 %314
        %v316 = vsel %vm207, %v313, %v315
        %v317 = vsel %vm207, %v311, %v313
        %v318 = vsel %vm207, %v309, %v311
        %v319 = vsel %vm207, %v307, %v309
        %v320 = vsel %vm207, %v315, %v307
        %321 = vset.pattern.permute.xlu0 5
        %322 = vperm.xlu0 %321, %v154
        %v323 = vpop.permute.xlu0 %322
        %v325 = vmul.f32 %v323, %v319
        %v326 = vmul.f32 %v323, %v318
        %v327 = vmul.f32 %v323, %v317
        %v328 = vmul.f32 %v323, %v316
        %v329 = vadd.f32 %v302, %v325
        %v330 = vadd.f32 %v303, %v326
        %v331 = vadd.f32 %v304, %v327
        %v332 = vadd.f32 %v305, %v328
        %333 = vrot.lane.b32.xlu0 %v319, 127
        %v334 = vpop.permute.xlu0 %333
        %335 = vrot.lane.b32.xlu0 %v318, 127
        %v336 = vpop.permute.xlu0 %335
        %337 = vrot.lane.b32.xlu0 %v317, 127
        %v338 = vpop.permute.xlu0 %337
        %339 = vrot.lane.b32.xlu0 %v316, 127
        %v340 = vpop.permute.xlu0 %339
        %341 = vrot.lane.b32.xlu0 %v320, 127
        %v342 = vpop.permute.xlu0 %341
        %v343 = vsel %vm207, %v340, %v342
        %v344 = vsel %vm207, %v338, %v340
        %v345 = vsel %vm207, %v336, %v338
        %v346 = vsel %vm207, %v334, %v336
        %v347 = vsel %vm207, %v342, %v334
        %348 = vset.pattern.permute.xlu0 6
        %349 = vperm.xlu0 %348, %v154
        %v350 = vpop.permute.xlu0 %349
        %v352 = vmul.f32 %v350, %v346
        %v353 = vmul.f32 %v350, %v345
        %v354 = vmul.f32 %v350, %v344
        %v355 = vmul.f32 %v350, %v343
        %v356 = vadd.f32 %v329, %v352
        %v357 = vadd.f32 %v330, %v353
        %v358 = vadd.f32 %v331, %v354
        %v359 = vadd.f32 %v332, %v355
        %360 = vrot.lane.b32.xlu0 %v346, 127
        %v361 = vpop.permute.xlu0 %360
        %362 = vrot.lane.b32.xlu0 %v345, 127
        %v363 = vpop.permute.xlu0 %362
        %364 = vrot.lane.b32.xlu0 %v344, 127
        %v365 = vpop.permute.xlu0 %364
        %366 = vrot.lane.b32.xlu0 %v343, 127
        %v367 = vpop.permute.xlu0 %366
        %368 = vrot.lane.b32.xlu0 %v347, 127
        %v369 = vpop.permute.xlu0 %368
        %v370 = vsel %vm207, %v367, %v369
        %v371 = vsel %vm207, %v365, %v367
        %v372 = vsel %vm207, %v363, %v365
        %v373 = vsel %vm207, %v361, %v363
        %v374 = vsel %vm207, %v369, %v361
        %375 = vset.pattern.permute.xlu0 7
        %376 = vperm.xlu0 %375, %v154
        %v377 = vpop.permute.xlu0 %376
        %v379 = vmul.f32 %v377, %v373
        %v380 = vmul.f32 %v377, %v372
        %v381 = vmul.f32 %v377, %v371
        %v382 = vmul.f32 %v377, %v370
        %v383 = vadd.f32 %v356, %v379
        %v384 = vadd.f32 %v357, %v380
        %v385 = vadd.f32 %v358, %v381
        %v386 = vadd.f32 %v359, %v382
        %387 = vrot.lane.b32.xlu0 %v373, 127
        %v388 = vpop.permute.xlu0 %387
        %389 = vrot.lane.b32.xlu0 %v372, 127
        %v390 = vpop.permute.xlu0 %389
        %391 = vrot.lane.b32.xlu0 %v371, 127
        %v392 = vpop.permute.xlu0 %391
        %393 = vrot.lane.b32.xlu0 %v370, 127
        %v394 = vpop.permute.xlu0 %393
        %395 = vrot.lane.b32.xlu0 %v374, 127
        %v396 = vpop.permute.xlu0 %395
        %v397 = vsel %vm207, %v394, %v396
        %v398 = vsel %vm207, %v392, %v394
        %v399 = vsel %vm207, %v390, %v392
        %v400 = vsel %vm207, %v388, %v390
        %v401 = vsel %vm207, %v396, %v388
        %402 = vset.pattern.permute.xlu0 8
        %403 = vperm.xlu0 %402, %v154
        %v404 = vpop.permute.xlu0 %403
        %v406 = vmul.f32 %v404, %v400
        %v407 = vmul.f32 %v404, %v399
        %v408 = vmul.f32 %v404, %v398
        %v409 = vmul.f32 %v404, %v397
        %v410 = vadd.f32 %v383, %v406
        %v411 = vadd.f32 %v384, %v407
        %v412 = vadd.f32 %v385, %v408
        %v413 = vadd.f32 %v386, %v409
        %414 = vrot.lane.b32.xlu0 %v400, 127
        %v415 = vpop.permute.xlu0 %414
        %416 = vrot.lane.b32.xlu0 %v399, 127
        %v417 = vpop.permute.xlu0 %416
        %418 = vrot.lane.b32.xlu0 %v398, 127
        %v419 = vpop.permute.xlu0 %418
        %420 = vrot.lane.b32.xlu0 %v397, 127
        %v421 = vpop.permute.xlu0 %420
        %422 = vrot.lane.b32.xlu0 %v401, 127
        %v423 = vpop.permute.xlu0 %422
        %v424 = vsel %vm207, %v421, %v423
        %v425 = vsel %vm207, %v419, %v421
        %v426 = vsel %vm207, %v417, %v419
        %v427 = vsel %vm207, %v415, %v417
        %v428 = vsel %vm207, %v423, %v415
        %429 = vset.pattern.permute.xlu0 9
        %430 = vperm.xlu0 %429, %v154
        %v431 = vpop.permute.xlu0 %430
        %v433 = vmul.f32 %v431, %v427
        %v434 = vmul.f32 %v431, %v426
        %v435 = vmul.f32 %v431, %v425
        %v436 = vmul.f32 %v431, %v424
        %v437 = vadd.f32 %v410, %v433
        %v438 = vadd.f32 %v411, %v434
        %v439 = vadd.f32 %v412, %v435
        %v440 = vadd.f32 %v413, %v436
        %441 = vrot.lane.b32.xlu0 %v427, 127
        %v442 = vpop.permute.xlu0 %441
        %443 = vrot.lane.b32.xlu0 %v426, 127
        %v444 = vpop.permute.xlu0 %443
        %445 = vrot.lane.b32.xlu0 %v425, 127
        %v446 = vpop.permute.xlu0 %445
        %447 = vrot.lane.b32.xlu0 %v424, 127
        %v448 = vpop.permute.xlu0 %447
        %449 = vrot.lane.b32.xlu0 %v428, 127
        %v450 = vpop.permute.xlu0 %449
        %v451 = vsel %vm207, %v448, %v450
        %v452 = vsel %vm207, %v446, %v448
        %v453 = vsel %vm207, %v444, %v446
        %v454 = vsel %vm207, %v442, %v444
        %v455 = vsel %vm207, %v450, %v442
        %456 = vset.pattern.permute.xlu0 10
        %457 = vperm.xlu0 %456, %v154
        %v458 = vpop.permute.xlu0 %457
        %v460 = vmul.f32 %v458, %v454
        %v461 = vmul.f32 %v458, %v453
        %v462 = vmul.f32 %v458, %v452
        %v463 = vmul.f32 %v458, %v451
        %v464 = vadd.f32 %v437, %v460
        %v465 = vadd.f32 %v438, %v461
        %v466 = vadd.f32 %v439, %v462
        %v467 = vadd.f32 %v440, %v463
        %468 = vrot.lane.b32.xlu0 %v454, 127
        %v469 = vpop.permute.xlu0 %468
        %470 = vrot.lane.b32.xlu0 %v453, 127
        %v471 = vpop.permute.xlu0 %470
        %472 = vrot.lane.b32.xlu0 %v452, 127
        %v473 = vpop.permute.xlu0 %472
        %474 = vrot.lane.b32.xlu0 %v451, 127
        %v475 = vpop.permute.xlu0 %474
        %476 = vrot.lane.b32.xlu0 %v455, 127
        %v477 = vpop.permute.xlu0 %476
        %v478 = vsel %vm207, %v475, %v477
        %v479 = vsel %vm207, %v473, %v475
        %v480 = vsel %vm207, %v471, %v473
        %v481 = vsel %vm207, %v469, %v471
        %v482 = vsel %vm207, %v477, %v469
        %483 = vset.pattern.permute.xlu0 11
        %484 = vperm.xlu0 %483, %v154
        %v485 = vpop.permute.xlu0 %484
        %v487 = vmul.f32 %v485, %v481
        %v488 = vmul.f32 %v485, %v480
        %v489 = vmul.f32 %v485, %v479
        %v490 = vmul.f32 %v485, %v478
        %v491 = vadd.f32 %v464, %v487
        %v492 = vadd.f32 %v465, %v488
        %v493 = vadd.f32 %v466, %v489
        %v494 = vadd.f32 %v467, %v490
        %495 = vrot.lane.b32.xlu0 %v481, 127
        %v496 = vpop.permute.xlu0 %495
        %497 = vrot.lane.b32.xlu0 %v480, 127
        %v498 = vpop.permute.xlu0 %497
        %499 = vrot.lane.b32.xlu0 %v479, 127
        %v500 = vpop.permute.xlu0 %499
        %501 = vrot.lane.b32.xlu0 %v478, 127
        %v502 = vpop.permute.xlu0 %501
        %503 = vrot.lane.b32.xlu0 %v482, 127
        %v504 = vpop.permute.xlu0 %503
        %v505 = vsel %vm207, %v502, %v504
        %v506 = vsel %vm207, %v500, %v502
        %v507 = vsel %vm207, %v498, %v500
        %v508 = vsel %vm207, %v496, %v498
        %v509 = vsel %vm207, %v504, %v496
        %510 = vset.pattern.permute.xlu0 12
        %511 = vperm.xlu0 %510, %v154
        %v512 = vpop.permute.xlu0 %511
        %v514 = vmul.f32 %v512, %v508
        %v515 = vmul.f32 %v512, %v507
        %v516 = vmul.f32 %v512, %v506
        %v517 = vmul.f32 %v512, %v505
        %v518 = vadd.f32 %v491, %v514
        %v519 = vadd.f32 %v492, %v515
        %v520 = vadd.f32 %v493, %v516
        %v521 = vadd.f32 %v494, %v517
        %522 = vrot.lane.b32.xlu0 %v508, 127
        %v523 = vpop.permute.xlu0 %522
        %524 = vrot.lane.b32.xlu0 %v507, 127
        %v525 = vpop.permute.xlu0 %524
        %526 = vrot.lane.b32.xlu0 %v506, 127
        %v527 = vpop.permute.xlu0 %526
        %528 = vrot.lane.b32.xlu0 %v505, 127
        %v529 = vpop.permute.xlu0 %528
        %530 = vrot.lane.b32.xlu0 %v509, 127
        %v531 = vpop.permute.xlu0 %530
        %v532 = vsel %vm207, %v529, %v531
        %v533 = vsel %vm207, %v527, %v529
        %v534 = vsel %vm207, %v525, %v527
        %v535 = vsel %vm207, %v523, %v525
        %v536 = vsel %vm207, %v531, %v523
        %537 = vset.pattern.permute.xlu0 13
        %538 = vperm.xlu0 %537, %v154
        %v539 = vpop.permute.xlu0 %538
        %v541 = vmul.f32 %v539, %v535
        %v542 = vmul.f32 %v539, %v534
        %v543 = vmul.f32 %v539, %v533
        %v544 = vmul.f32 %v539, %v532
        %v545 = vadd.f32 %v518, %v541
        %v546 = vadd.f32 %v519, %v542
        %v547 = vadd.f32 %v520, %v543
        %v548 = vadd.f32 %v521, %v544
        %549 = vrot.lane.b32.xlu0 %v535, 127
        %v550 = vpop.permute.xlu0 %549
        %551 = vrot.lane.b32.xlu0 %v534, 127
        %v552 = vpop.permute.xlu0 %551
        %553 = vrot.lane.b32.xlu0 %v533, 127
        %v554 = vpop.permute.xlu0 %553
        %555 = vrot.lane.b32.xlu0 %v532, 127
        %v556 = vpop.permute.xlu0 %555
        %557 = vrot.lane.b32.xlu0 %v536, 127
        %v558 = vpop.permute.xlu0 %557
        %v559 = vsel %vm207, %v556, %v558
        %v560 = vsel %vm207, %v554, %v556
        %v561 = vsel %vm207, %v552, %v554
        %v562 = vsel %vm207, %v550, %v552
        %v563 = vsel %vm207, %v558, %v550
        %564 = vset.pattern.permute.xlu0 14
        %565 = vperm.xlu0 %564, %v154
        %v566 = vpop.permute.xlu0 %565
        %v568 = vmul.f32 %v566, %v562
        %v569 = vmul.f32 %v566, %v561
        %v570 = vmul.f32 %v566, %v560
        %v571 = vmul.f32 %v566, %v559
        %v572 = vadd.f32 %v545, %v568
        %v573 = vadd.f32 %v546, %v569
        %v574 = vadd.f32 %v547, %v570
        %v575 = vadd.f32 %v548, %v571
        %576 = vrot.lane.b32.xlu0 %v562, 127
        %v577 = vpop.permute.xlu0 %576
        %578 = vrot.lane.b32.xlu0 %v561, 127
        %v579 = vpop.permute.xlu0 %578
        %580 = vrot.lane.b32.xlu0 %v560, 127
        %v581 = vpop.permute.xlu0 %580
        %582 = vrot.lane.b32.xlu0 %v559, 127
        %v583 = vpop.permute.xlu0 %582
        %584 = vrot.lane.b32.xlu0 %v563, 127
        %v585 = vpop.permute.xlu0 %584
        %v586 = vsel %vm207, %v583, %v585
        %v587 = vsel %vm207, %v581, %v583
        %v588 = vsel %vm207, %v579, %v581
        %v589 = vsel %vm207, %v577, %v579
        %v590 = vsel %vm207, %v585, %v577
        %591 = vset.pattern.permute.xlu0 15
        %592 = vperm.xlu0 %591, %v154
        %v593 = vpop.permute.xlu0 %592
        %v595 = vmul.f32 %v593, %v589
        %v596 = vmul.f32 %v593, %v588
        %v597 = vmul.f32 %v593, %v587
        %v598 = vmul.f32 %v593, %v586
        %v599 = vadd.f32 %v572, %v595
        %v600 = vadd.f32 %v573, %v596
        %v601 = vadd.f32 %v574, %v597
        %v602 = vadd.f32 %v575, %v598
        %603 = vrot.lane.b32.xlu0 %v589, 127
        %v604 = vpop.permute.xlu0 %603
        %605 = vrot.lane.b32.xlu0 %v588, 127
        %v606 = vpop.permute.xlu0 %605
        %607 = vrot.lane.b32.xlu0 %v587, 127
        %v608 = vpop.permute.xlu0 %607
        %609 = vrot.lane.b32.xlu0 %v586, 127
        %v610 = vpop.permute.xlu0 %609
        %611 = vrot.lane.b32.xlu0 %v590, 127
        %v612 = vpop.permute.xlu0 %611
        %v613 = vsel %vm207, %v610, %v612
        %v614 = vsel %vm207, %v608, %v610
        %v615 = vsel %vm207, %v606, %v608
        %v616 = vsel %vm207, %v604, %v606
        %v617 = vsel %vm207, %v612, %v604
        %618 = vset.pattern.permute.xlu0 16
        %619 = vperm.xlu0 %618, %v154
        %v620 = vpop.permute.xlu0 %619
        %v622 = vmul.f32 %v620, %v616
        %v623 = vmul.f32 %v620, %v615
        %v624 = vmul.f32 %v620, %v614
        %v625 = vmul.f32 %v620, %v613
        %v626 = vadd.f32 %v599, %v622
        %v627 = vadd.f32 %v600, %v623
        %v628 = vadd.f32 %v601, %v624
        %v629 = vadd.f32 %v602, %v625
        %630 = vrot.lane.b32.xlu0 %v616, 127
        %v631 = vpop.permute.xlu0 %630
        %632 = vrot.lane.b32.xlu0 %v615, 127
        %v633 = vpop.permute.xlu0 %632
        %634 = vrot.lane.b32.xlu0 %v614, 127
        %v635 = vpop.permute.xlu0 %634
        %636 = vrot.lane.b32.xlu0 %v613, 127
        %v637 = vpop.permute.xlu0 %636
        %638 = vrot.lane.b32.xlu0 %v617, 127
        %v639 = vpop.permute.xlu0 %638
        %v640 = vsel %vm207, %v637, %v639
        %v641 = vsel %vm207, %v635, %v637
        %v642 = vsel %vm207, %v633, %v635
        %v643 = vsel %vm207, %v631, %v633
        %v644 = vsel %vm207, %v639, %v631
        %645 = vset.pattern.permute.xlu0 17
        %646 = vperm.xlu0 %645, %v154
        %v647 = vpop.permute.xlu0 %646
        %v649 = vmul.f32 %v647, %v643
        %v650 = vmul.f32 %v647, %v642
        %v651 = vmul.f32 %v647, %v641
        %v652 = vmul.f32 %v647, %v640
        %v653 = vadd.f32 %v626, %v649
        %v654 = vadd.f32 %v627, %v650
        %v655 = vadd.f32 %v628, %v651
        %v656 = vadd.f32 %v629, %v652
        %657 = vrot.lane.b32.xlu0 %v643, 127
        %v658 = vpop.permute.xlu0 %657
        %659 = vrot.lane.b32.xlu0 %v642, 127
        %v660 = vpop.permute.xlu0 %659
        %661 = vrot.lane.b32.xlu0 %v641, 127
        %v662 = vpop.permute.xlu0 %661
        %663 = vrot.lane.b32.xlu0 %v640, 127
        %v664 = vpop.permute.xlu0 %663
        %665 = vrot.lane.b32.xlu0 %v644, 127
        %v666 = vpop.permute.xlu0 %665
        %v667 = vsel %vm207, %v664, %v666
        %v668 = vsel %vm207, %v662, %v664
        %v669 = vsel %vm207, %v660, %v662
        %v670 = vsel %vm207, %v658, %v660
        %v671 = vsel %vm207, %v666, %v658
        %672 = vset.pattern.permute.xlu0 18
        %673 = vperm.xlu0 %672, %v154
        %v674 = vpop.permute.xlu0 %673
        %v676 = vmul.f32 %v674, %v670
        %v677 = vmul.f32 %v674, %v669
        %v678 = vmul.f32 %v674, %v668
        %v679 = vmul.f32 %v674, %v667
        %v680 = vadd.f32 %v653, %v676
        %v681 = vadd.f32 %v654, %v677
        %v682 = vadd.f32 %v655, %v678
        %v683 = vadd.f32 %v656, %v679
        %684 = vrot.lane.b32.xlu0 %v670, 127
        %v685 = vpop.permute.xlu0 %684
        %686 = vrot.lane.b32.xlu0 %v669, 127
        %v687 = vpop.permute.xlu0 %686
        %688 = vrot.lane.b32.xlu0 %v668, 127
        %v689 = vpop.permute.xlu0 %688
        %690 = vrot.lane.b32.xlu0 %v667, 127
        %v691 = vpop.permute.xlu0 %690
        %692 = vrot.lane.b32.xlu0 %v671, 127
        %v693 = vpop.permute.xlu0 %692
        %v694 = vsel %vm207, %v691, %v693
        %v695 = vsel %vm207, %v689, %v691
        %v696 = vsel %vm207, %v687, %v689
        %v697 = vsel %vm207, %v685, %v687
        %v698 = vsel %vm207, %v693, %v685
        %699 = vset.pattern.permute.xlu0 19
        %700 = vperm.xlu0 %699, %v154
        %v701 = vpop.permute.xlu0 %700
        %v703 = vmul.f32 %v701, %v697
        %v704 = vmul.f32 %v701, %v696
        %v705 = vmul.f32 %v701, %v695
        %v706 = vmul.f32 %v701, %v694
        %v707 = vadd.f32 %v680, %v703
        %v708 = vadd.f32 %v681, %v704
        %v709 = vadd.f32 %v682, %v705
        %v710 = vadd.f32 %v683, %v706
        %711 = vrot.lane.b32.xlu0 %v697, 127
        %v712 = vpop.permute.xlu0 %711
        %713 = vrot.lane.b32.xlu0 %v696, 127
        %v714 = vpop.permute.xlu0 %713
        %715 = vrot.lane.b32.xlu0 %v695, 127
        %v716 = vpop.permute.xlu0 %715
        %717 = vrot.lane.b32.xlu0 %v694, 127
        %v718 = vpop.permute.xlu0 %717
        %719 = vrot.lane.b32.xlu0 %v698, 127
        %v720 = vpop.permute.xlu0 %719
        %v721 = vsel %vm207, %v718, %v720
        %v722 = vsel %vm207, %v716, %v718
        %v723 = vsel %vm207, %v714, %v716
        %v724 = vsel %vm207, %v712, %v714
        %v725 = vsel %vm207, %v720, %v712
        %726 = vset.pattern.permute.xlu0 20
        %727 = vperm.xlu0 %726, %v154
        %v728 = vpop.permute.xlu0 %727
        %v730 = vmul.f32 %v728, %v724
        %v731 = vmul.f32 %v728, %v723
        %v732 = vmul.f32 %v728, %v722
        %v733 = vmul.f32 %v728, %v721
        %v734 = vadd.f32 %v707, %v730
        %v735 = vadd.f32 %v708, %v731
        %v736 = vadd.f32 %v709, %v732
        %v737 = vadd.f32 %v710, %v733
        %738 = vrot.lane.b32.xlu0 %v724, 127
        %v739 = vpop.permute.xlu0 %738
        %740 = vrot.lane.b32.xlu0 %v723, 127
        %v741 = vpop.permute.xlu0 %740
        %742 = vrot.lane.b32.xlu0 %v722, 127
        %v743 = vpop.permute.xlu0 %742
        %744 = vrot.lane.b32.xlu0 %v721, 127
        %v745 = vpop.permute.xlu0 %744
        %746 = vrot.lane.b32.xlu0 %v725, 127
        %v747 = vpop.permute.xlu0 %746
        %v748 = vsel %vm207, %v745, %v747
        %v749 = vsel %vm207, %v743, %v745
        %v750 = vsel %vm207, %v741, %v743
        %v751 = vsel %vm207, %v739, %v741
        %v752 = vsel %vm207, %v747, %v739
        %753 = vset.pattern.permute.xlu0 21
        %754 = vperm.xlu0 %753, %v154
        %v755 = vpop.permute.xlu0 %754
        %v757 = vmul.f32 %v755, %v751
        %v758 = vmul.f32 %v755, %v750
        %v759 = vmul.f32 %v755, %v749
        %v760 = vmul.f32 %v755, %v748
        %v761 = vadd.f32 %v734, %v757
        %v762 = vadd.f32 %v735, %v758
        %v763 = vadd.f32 %v736, %v759
        %v764 = vadd.f32 %v737, %v760
        %765 = vrot.lane.b32.xlu0 %v751, 127
        %v766 = vpop.permute.xlu0 %765
        %767 = vrot.lane.b32.xlu0 %v750, 127
        %v768 = vpop.permute.xlu0 %767
        %769 = vrot.lane.b32.xlu0 %v749, 127
        %v770 = vpop.permute.xlu0 %769
        %771 = vrot.lane.b32.xlu0 %v748, 127
        %v772 = vpop.permute.xlu0 %771
        %773 = vrot.lane.b32.xlu0 %v752, 127
        %v774 = vpop.permute.xlu0 %773
        %v775 = vsel %vm207, %v772, %v774
        %v776 = vsel %vm207, %v770, %v772
        %v777 = vsel %vm207, %v768, %v770
        %v778 = vsel %vm207, %v766, %v768
        %v779 = vsel %vm207, %v774, %v766
        %780 = vset.pattern.permute.xlu0 22
        %781 = vperm.xlu0 %780, %v154
        %v782 = vpop.permute.xlu0 %781
        %v784 = vmul.f32 %v782, %v778
        %v785 = vmul.f32 %v782, %v777
        %v786 = vmul.f32 %v782, %v776
        %v787 = vmul.f32 %v782, %v775
        %v788 = vadd.f32 %v761, %v784
        %v789 = vadd.f32 %v762, %v785
        %v790 = vadd.f32 %v763, %v786
        %v791 = vadd.f32 %v764, %v787
        %792 = vrot.lane.b32.xlu0 %v778, 127
        %v793 = vpop.permute.xlu0 %792
        %794 = vrot.lane.b32.xlu0 %v777, 127
        %v795 = vpop.permute.xlu0 %794
        %796 = vrot.lane.b32.xlu0 %v776, 127
        %v797 = vpop.permute.xlu0 %796
        %798 = vrot.lane.b32.xlu0 %v775, 127
        %v799 = vpop.permute.xlu0 %798
        %800 = vrot.lane.b32.xlu0 %v779, 127
        %v801 = vpop.permute.xlu0 %800
        %v802 = vsel %vm207, %v799, %v801
        %v803 = vsel %vm207, %v797, %v799
        %v804 = vsel %vm207, %v795, %v797
        %v805 = vsel %vm207, %v793, %v795
        %v806 = vsel %vm207, %v801, %v793
        %807 = vset.pattern.permute.xlu0 23
        %808 = vperm.xlu0 %807, %v154
        %v809 = vpop.permute.xlu0 %808
        %v811 = vmul.f32 %v809, %v805
        %v812 = vmul.f32 %v809, %v804
        %v813 = vmul.f32 %v809, %v803
        %v814 = vmul.f32 %v809, %v802
        %v815 = vadd.f32 %v788, %v811
        %v816 = vadd.f32 %v789, %v812
        %v817 = vadd.f32 %v790, %v813
        %v818 = vadd.f32 %v791, %v814
        %819 = vrot.lane.b32.xlu0 %v805, 127
        %v820 = vpop.permute.xlu0 %819
        %821 = vrot.lane.b32.xlu0 %v804, 127
        %v822 = vpop.permute.xlu0 %821
        %823 = vrot.lane.b32.xlu0 %v803, 127
        %v824 = vpop.permute.xlu0 %823
        %825 = vrot.lane.b32.xlu0 %v802, 127
        %v826 = vpop.permute.xlu0 %825
        %827 = vrot.lane.b32.xlu0 %v806, 127
        %v828 = vpop.permute.xlu0 %827
        %v829 = vsel %vm207, %v826, %v828
        %v830 = vsel %vm207, %v824, %v826
        %v831 = vsel %vm207, %v822, %v824
        %v832 = vsel %vm207, %v820, %v822
        %v833 = vsel %vm207, %v828, %v820
        %834 = vset.pattern.permute.xlu0 24
        %835 = vperm.xlu0 %834, %v154
        %v836 = vpop.permute.xlu0 %835
        %v838 = vmul.f32 %v836, %v832
        %v839 = vmul.f32 %v836, %v831
        %v840 = vmul.f32 %v836, %v830
        %v841 = vmul.f32 %v836, %v829
        %v842 = vadd.f32 %v815, %v838
        %v843 = vadd.f32 %v816, %v839
        %v844 = vadd.f32 %v817, %v840
        %v845 = vadd.f32 %v818, %v841
        %846 = vrot.lane.b32.xlu0 %v832, 127
        %v847 = vpop.permute.xlu0 %846
        %848 = vrot.lane.b32.xlu0 %v831, 127
        %v849 = vpop.permute.xlu0 %848
        %850 = vrot.lane.b32.xlu0 %v830, 127
        %v851 = vpop.permute.xlu0 %850
        %852 = vrot.lane.b32.xlu0 %v829, 127
        %v853 = vpop.permute.xlu0 %852
        %854 = vrot.lane.b32.xlu0 %v833, 127
        %v855 = vpop.permute.xlu0 %854
        %v856 = vsel %vm207, %v853, %v855
        %v857 = vsel %vm207, %v851, %v853
        %v858 = vsel %vm207, %v849, %v851
        %v859 = vsel %vm207, %v847, %v849
        %v860 = vsel %vm207, %v855, %v847
        %861 = vset.pattern.permute.xlu0 25
        %862 = vperm.xlu0 %861, %v154
        %v863 = vpop.permute.xlu0 %862
        %v865 = vmul.f32 %v863, %v859
        %v866 = vmul.f32 %v863, %v858
        %v867 = vmul.f32 %v863, %v857
        %v868 = vmul.f32 %v863, %v856
        %v869 = vadd.f32 %v842, %v865
        %v870 = vadd.f32 %v843, %v866
        %v871 = vadd.f32 %v844, %v867
        %v872 = vadd.f32 %v845, %v868
        %873 = vrot.lane.b32.xlu0 %v859, 127
        %v874 = vpop.permute.xlu0 %873
        %875 = vrot.lane.b32.xlu0 %v858, 127
        %v876 = vpop.permute.xlu0 %875
        %877 = vrot.lane.b32.xlu0 %v857, 127
        %v878 = vpop.permute.xlu0 %877
        %879 = vrot.lane.b32.xlu0 %v856, 127
        %v880 = vpop.permute.xlu0 %879
        %881 = vrot.lane.b32.xlu0 %v860, 127
        %v882 = vpop.permute.xlu0 %881
        %v883 = vsel %vm207, %v880, %v882
        %v884 = vsel %vm207, %v878, %v880
        %v885 = vsel %vm207, %v876, %v878
        %v886 = vsel %vm207, %v874, %v876
        %v887 = vsel %vm207, %v882, %v874
        %888 = vset.pattern.permute.xlu0 26
        %889 = vperm.xlu0 %888, %v154
        %v890 = vpop.permute.xlu0 %889
        %v892 = vmul.f32 %v890, %v886
        %v893 = vmul.f32 %v890, %v885
        %v894 = vmul.f32 %v890, %v884
        %v895 = vmul.f32 %v890, %v883
        %v896 = vadd.f32 %v869, %v892
        %v897 = vadd.f32 %v870, %v893
        %v898 = vadd.f32 %v871, %v894
        %v899 = vadd.f32 %v872, %v895
        %900 = vrot.lane.b32.xlu0 %v886, 127
        %v901 = vpop.permute.xlu0 %900
        %902 = vrot.lane.b32.xlu0 %v885, 127
        %v903 = vpop.permute.xlu0 %902
        %904 = vrot.lane.b32.xlu0 %v884, 127
        %v905 = vpop.permute.xlu0 %904
        %906 = vrot.lane.b32.xlu0 %v883, 127
        %v907 = vpop.permute.xlu0 %906
        %908 = vrot.lane.b32.xlu0 %v887, 127
        %v909 = vpop.permute.xlu0 %908
        %v910 = vsel %vm207, %v907, %v909
        %v911 = vsel %vm207, %v905, %v907
        %v912 = vsel %vm207, %v903, %v905
        %v913 = vsel %vm207, %v901, %v903
        %v914 = vsel %vm207, %v909, %v901
        %915 = vset.pattern.permute.xlu0 27
        %916 = vperm.xlu0 %915, %v154
        %v917 = vpop.permute.xlu0 %916
        %v919 = vmul.f32 %v917, %v913
        %v920 = vmul.f32 %v917, %v912
        %v921 = vmul.f32 %v917, %v911
        %v922 = vmul.f32 %v917, %v910
        %v923 = vadd.f32 %v896, %v919
        %v924 = vadd.f32 %v897, %v920
        %v925 = vadd.f32 %v898, %v921
        %v926 = vadd.f32 %v899, %v922
        %927 = vrot.lane.b32.xlu0 %v913, 127
        %v928 = vpop.permute.xlu0 %927
        %929 = vrot.lane.b32.xlu0 %v912, 127
        %v930 = vpop.permute.xlu0 %929
        %931 = vrot.lane.b32.xlu0 %v911, 127
        %v932 = vpop.permute.xlu0 %931
        %933 = vrot.lane.b32.xlu0 %v910, 127
        %v934 = vpop.permute.xlu0 %933
        %935 = vrot.lane.b32.xlu0 %v914, 127
        %v936 = vpop.permute.xlu0 %935
        %v937 = vsel %vm207, %v934, %v936
        %v938 = vsel %vm207, %v932, %v934
        %v939 = vsel %vm207, %v930, %v932
        %v940 = vsel %vm207, %v928, %v930
        %v941 = vsel %vm207, %v936, %v928
        %942 = vset.pattern.permute.xlu0 28
        %943 = vperm.xlu0 %942, %v154
        %v944 = vpop.permute.xlu0 %943
        %v946 = vmul.f32 %v944, %v940
        %v947 = vmul.f32 %v944, %v939
        %v948 = vmul.f32 %v944, %v938
        %v949 = vmul.f32 %v944, %v937
        %v950 = vadd.f32 %v923, %v946
        %v951 = vadd.f32 %v924, %v947
        %v952 = vadd.f32 %v925, %v948
        %v953 = vadd.f32 %v926, %v949
        %954 = vrot.lane.b32.xlu0 %v940, 127
        %v955 = vpop.permute.xlu0 %954
        %956 = vrot.lane.b32.xlu0 %v939, 127
        %v957 = vpop.permute.xlu0 %956
        %958 = vrot.lane.b32.xlu0 %v938, 127
        %v959 = vpop.permute.xlu0 %958
        %960 = vrot.lane.b32.xlu0 %v937, 127
        %v961 = vpop.permute.xlu0 %960
        %962 = vrot.lane.b32.xlu0 %v941, 127
        %v963 = vpop.permute.xlu0 %962
        %v964 = vsel %vm207, %v961, %v963
        %v965 = vsel %vm207, %v959, %v961
        %v966 = vsel %vm207, %v957, %v959
        %v967 = vsel %vm207, %v955, %v957
        %v968 = vsel %vm207, %v963, %v955
        %969 = vset.pattern.permute.xlu0 29
        %970 = vperm.xlu0 %969, %v154
        %v971 = vpop.permute.xlu0 %970
        %v973 = vmul.f32 %v971, %v967
        %v974 = vmul.f32 %v971, %v966
        %v975 = vmul.f32 %v971, %v965
        %v976 = vmul.f32 %v971, %v964
        %v977 = vadd.f32 %v950, %v973
        %v978 = vadd.f32 %v951, %v974
        %v979 = vadd.f32 %v952, %v975
        %v980 = vadd.f32 %v953, %v976
        %981 = vrot.lane.b32.xlu0 %v967, 127
        %v982 = vpop.permute.xlu0 %981
        %983 = vrot.lane.b32.xlu0 %v966, 127
        %v984 = vpop.permute.xlu0 %983
        %985 = vrot.lane.b32.xlu0 %v965, 127
        %v986 = vpop.permute.xlu0 %985
        %987 = vrot.lane.b32.xlu0 %v964, 127
        %v988 = vpop.permute.xlu0 %987
        %989 = vrot.lane.b32.xlu0 %v968, 127
        %v990 = vpop.permute.xlu0 %989
        %v991 = vsel %vm207, %v988, %v990
        %v992 = vsel %vm207, %v986, %v988
        %v993 = vsel %vm207, %v984, %v986
        %v994 = vsel %vm207, %v982, %v984
        %v995 = vsel %vm207, %v990, %v982
        %996 = vset.pattern.permute.xlu0 30
        %997 = vperm.xlu0 %996, %v154
        %v998 = vpop.permute.xlu0 %997
        %v1000 = vmul.f32 %v998, %v994
        %v1001 = vmul.f32 %v998, %v993
        %v1002 = vmul.f32 %v998, %v992
        %v1003 = vmul.f32 %v998, %v991
        %v1004 = vadd.f32 %v977, %v1000
        %v1005 = vadd.f32 %v978, %v1001
        %v1006 = vadd.f32 %v979, %v1002
        %v1007 = vadd.f32 %v980, %v1003
        %1008 = vrot.lane.b32.xlu0 %v994, 127
        %v1009 = vpop.permute.xlu0 %1008
        %1010 = vrot.lane.b32.xlu0 %v993, 127
        %v1011 = vpop.permute.xlu0 %1010
        %1012 = vrot.lane.b32.xlu0 %v992, 127
        %v1013 = vpop.permute.xlu0 %1012
        %1014 = vrot.lane.b32.xlu0 %v991, 127
        %v1015 = vpop.permute.xlu0 %1014
        %1016 = vrot.lane.b32.xlu0 %v995, 127
        %v1017 = vpop.permute.xlu0 %1016
        %v1018 = vsel %vm207, %v1015, %v1017
        %v1019 = vsel %vm207, %v1013, %v1015
        %v1020 = vsel %vm207, %v1011, %v1013
        %v1021 = vsel %vm207, %v1009, %v1011
        %v1022 = vsel %vm207, %v1017, %v1009
        %1023 = vset.pattern.permute.xlu0 31
        %1024 = vperm.xlu0 %1023, %v154
        %v1025 = vpop.permute.xlu0 %1024
        %v1027 = vmul.f32 %v1025, %v1021
        %v1028 = vmul.f32 %v1025, %v1020
        %v1029 = vmul.f32 %v1025, %v1019
        %v1030 = vmul.f32 %v1025, %v1018
        %v1031 = vadd.f32 %v1004, %v1027
        %v1032 = vadd.f32 %v1005, %v1028
        %v1033 = vadd.f32 %v1006, %v1029
        %v1034 = vadd.f32 %v1007, %v1030
        %1035 = vrot.lane.b32.xlu0 %v1021, 127
        %v1036 = vpop.permute.xlu0 %1035
        %1037 = vrot.lane.b32.xlu0 %v1020, 127
        %v1038 = vpop.permute.xlu0 %1037
        %1039 = vrot.lane.b32.xlu0 %v1019, 127
        %v1040 = vpop.permute.xlu0 %1039
        %1041 = vrot.lane.b32.xlu0 %v1018, 127
        %v1042 = vpop.permute.xlu0 %1041
        %1043 = vrot.lane.b32.xlu0 %v1022, 127
        %v1044 = vpop.permute.xlu0 %1043
        %v1045 = vsel %vm207, %v1042, %v1044
        %v1046 = vsel %vm207, %v1040, %v1042
        %v1047 = vsel %vm207, %v1038, %v1040
        %v1048 = vsel %vm207, %v1036, %v1038
        %1049 = vset.pattern.permute.xlu0 32
        %1050 = vperm.xlu0 %1049, %v154
        %v1051 = vpop.permute.xlu0 %1050
        %v1053 = vmul.f32 %v1051, %v1048
        %v1054 = vmul.f32 %v1051, %v1047
        %v1055 = vmul.f32 %v1051, %v1046
        %v1056 = vmul.f32 %v1051, %v1045
        %v1057 = vadd.f32 %v1031, %v1053
        %v1058 = vadd.f32 %v1032, %v1054
        %v1059 = vadd.f32 %v1033, %v1055
        %v1060 = vadd.f32 %v1034, %v1056
        %1061 = vst [vmem:[%s148] sm:$0xff] %v1057
        %1062 = vst [vmem:[%s148 + $0x8] sm:$0xff] %v1058
        %1063 = vst [vmem:[%s148 + $0x10] sm:$0xff] %v1059
        %1064 = vst [vmem:[%s148 + $0x18] sm:$0xff] %v1060
        %s1065 = sadd.s32 %s155, 512
        %s1066 = sshra.s32 %s1065, 7
        %s1067 = sand.u32 %s1065, 127
        %s1068 = scalar_lea.vmem %s152, %s1066
        %v1069 = vld [vmem:[%s1068] sm:$0x1f]
        %v1071 = vlaneseq
        %v1072 = vshrl.u32 %v1071, 7
        %v1073 = vsub.s32 0, %v1072
        %v1074 = vrot.slane %v1069, %v1073
        %v1075 = vlaneseq
        %v1076 = vshrl.u32 %v1075, 7
        %v1077 = vsub.s32 1, %v1076
        %v1078 = vrot.slane %v1069, %v1077
        %v1079 = vlaneseq
        %v1080 = vshrl.u32 %v1079, 7
        %v1081 = vsub.s32 2, %v1080
        %v1082 = vrot.slane %v1069, %v1081
        %v1083 = vlaneseq
        %v1084 = vshrl.u32 %v1083, 7
        %v1085 = vsub.s32 3, %v1084
        %v1086 = vrot.slane %v1069, %v1085
        %v1087 = vlaneseq
        %v1088 = vshrl.u32 %v1087, 7
        %v1089 = vsub.s32 4, %v1088
        %v1090 = vrot.slane %v1069, %v1089
        %v1096 = vmul.f32 %v189, %v1074
        %v1097 = vmul.f32 %v189, %v1078
        %v1098 = vmul.f32 %v189, %v1082
        %v1099 = vmul.f32 %v189, %v1086
        %1100 = vrot.lane.b32.xlu0 %v1074, 127
        %v1101 = vpop.permute.xlu0 %1100
        %1102 = vrot.lane.b32.xlu0 %v1078, 127
        %v1103 = vpop.permute.xlu0 %1102
        %1104 = vrot.lane.b32.xlu0 %v1082, 127
        %v1105 = vpop.permute.xlu0 %1104
        %1106 = vrot.lane.b32.xlu0 %v1086, 127
        %v1107 = vpop.permute.xlu0 %1106
        %1108 = vrot.lane.b32.xlu0 %v1090, 127
        %v1109 = vpop.permute.xlu0 %1108
        %v1110 = vsel %vm207, %v1107, %v1109
        %v1111 = vsel %vm207, %v1105, %v1107
        %v1112 = vsel %vm207, %v1103, %v1105
        %v1113 = vsel %vm207, %v1101, %v1103
        %v1114 = vsel %vm207, %v1109, %v1101
        %v1115 = vmul.f32 %v215, %v1113
        %v1116 = vmul.f32 %v215, %v1112
        %v1117 = vmul.f32 %v215, %v1111
        %v1118 = vmul.f32 %v215, %v1110
        %v1119 = vadd.f32 %v1096, %v1115
        %v1120 = vadd.f32 %v1097, %v1116
        %v1121 = vadd.f32 %v1098, %v1117
        %v1122 = vadd.f32 %v1099, %v1118
        %1123 = vrot.lane.b32.xlu0 %v1113, 127
        %v1124 = vpop.permute.xlu0 %1123
        %1125 = vrot.lane.b32.xlu0 %v1112, 127
        %v1126 = vpop.permute.xlu0 %1125
        %1127 = vrot.lane.b32.xlu0 %v1111, 127
        %v1128 = vpop.permute.xlu0 %1127
        %1129 = vrot.lane.b32.xlu0 %v1110, 127
        %v1130 = vpop.permute.xlu0 %1129
        %1131 = vrot.lane.b32.xlu0 %v1114, 127
        %v1132 = vpop.permute.xlu0 %1131
        %v1133 = vsel %vm207, %v1130, %v1132
        %v1134 = vsel %vm207, %v1128, %v1130
        %v1135 = vsel %vm207, %v1126, %v1128
        %v1136 = vsel %vm207, %v1124, %v1126
        %v1137 = vsel %vm207, %v1132, %v1124
        %v1138 = vmul.f32 %v242, %v1136
        %v1139 = vmul.f32 %v242, %v1135
        %v1140 = vmul.f32 %v242, %v1134
        %v1141 = vmul.f32 %v242, %v1133
        %v1142 = vadd.f32 %v1119, %v1138
        %v1143 = vadd.f32 %v1120, %v1139
        %v1144 = vadd.f32 %v1121, %v1140
        %v1145 = vadd.f32 %v1122, %v1141
        %1146 = vrot.lane.b32.xlu0 %v1136, 127
        %v1147 = vpop.permute.xlu0 %1146
        %1148 = vrot.lane.b32.xlu0 %v1135, 127
        %v1149 = vpop.permute.xlu0 %1148
        %1150 = vrot.lane.b32.xlu0 %v1134, 127
        %v1151 = vpop.permute.xlu0 %1150
        %1152 = vrot.lane.b32.xlu0 %v1133, 127
        %v1153 = vpop.permute.xlu0 %1152
        %1154 = vrot.lane.b32.xlu0 %v1137, 127
        %v1155 = vpop.permute.xlu0 %1154
        %v1156 = vsel %vm207, %v1153, %v1155
        %v1157 = vsel %vm207, %v1151, %v1153
        %v1158 = vsel %vm207, %v1149, %v1151
        %v1159 = vsel %vm207, %v1147, %v1149
        %v1160 = vsel %vm207, %v1155, %v1147
        %v1161 = vmul.f32 %v269, %v1159
        %v1162 = vmul.f32 %v269, %v1158
        %v1163 = vmul.f32 %v269, %v1157
        %v1164 = vmul.f32 %v269, %v1156
        %v1165 = vadd.f32 %v1142, %v1161
        %v1166 = vadd.f32 %v1143, %v1162
        %v1167 = vadd.f32 %v1144, %v1163
        %v1168 = vadd.f32 %v1145, %v1164
        %1169 = vrot.lane.b32.xlu0 %v1159, 127
        %v1170 = vpop.permute.xlu0 %1169
        %1171 = vrot.lane.b32.xlu0 %v1158, 127
        %v1172 = vpop.permute.xlu0 %1171
        %1173 = vrot.lane.b32.xlu0 %v1157, 127
        %v1174 = vpop.permute.xlu0 %1173
        %1175 = vrot.lane.b32.xlu0 %v1156, 127
        %v1176 = vpop.permute.xlu0 %1175
        %1177 = vrot.lane.b32.xlu0 %v1160, 127
        %v1178 = vpop.permute.xlu0 %1177
        %v1179 = vsel %vm207, %v1176, %v1178
        %v1180 = vsel %vm207, %v1174, %v1176
        %v1181 = vsel %vm207, %v1172, %v1174
        %v1182 = vsel %vm207, %v1170, %v1172
        %v1183 = vsel %vm207, %v1178, %v1170
        %v1184 = vmul.f32 %v296, %v1182
        %v1185 = vmul.f32 %v296, %v1181
        %v1186 = vmul.f32 %v296, %v1180
        %v1187 = vmul.f32 %v296, %v1179
        %v1188 = vadd.f32 %v1165, %v1184
        %v1189 = vadd.f32 %v1166, %v1185
        %v1190 = vadd.f32 %v1167, %v1186
        %v1191 = vadd.f32 %v1168, %v1187
        %1192 = vrot.lane.b32.xlu0 %v1182, 127
        %v1193 = vpop.permute.xlu0 %1192
        %1194 = vrot.lane.b32.xlu0 %v1181, 127
        %v1195 = vpop.permute.xlu0 %1194
        %1196 = vrot.lane.b32.xlu0 %v1180, 127
        %v1197 = vpop.permute.xlu0 %1196
        %1198 = vrot.lane.b32.xlu0 %v1179, 127
        %v1199 = vpop.permute.xlu0 %1198
        %1200 = vrot.lane.b32.xlu0 %v1183, 127
        %v1201 = vpop.permute.xlu0 %1200
        %v1202 = vsel %vm207, %v1199, %v1201
        %v1203 = vsel %vm207, %v1197, %v1199
        %v1204 = vsel %vm207, %v1195, %v1197
        %v1205 = vsel %vm207, %v1193, %v1195
        %v1206 = vsel %vm207, %v1201, %v1193
        %v1207 = vmul.f32 %v323, %v1205
        %v1208 = vmul.f32 %v323, %v1204
        %v1209 = vmul.f32 %v323, %v1203
        %v1210 = vmul.f32 %v323, %v1202
        %v1211 = vadd.f32 %v1188, %v1207
        %v1212 = vadd.f32 %v1189, %v1208
        %v1213 = vadd.f32 %v1190, %v1209
        %v1214 = vadd.f32 %v1191, %v1210
        %1215 = vrot.lane.b32.xlu0 %v1205, 127
        %v1216 = vpop.permute.xlu0 %1215
        %1217 = vrot.lane.b32.xlu0 %v1204, 127
        %v1218 = vpop.permute.xlu0 %1217
        %1219 = vrot.lane.b32.xlu0 %v1203, 127
        %v1220 = vpop.permute.xlu0 %1219
        %1221 = vrot.lane.b32.xlu0 %v1202, 127
        %v1222 = vpop.permute.xlu0 %1221
        %1223 = vrot.lane.b32.xlu0 %v1206, 127
        %v1224 = vpop.permute.xlu0 %1223
        %v1225 = vsel %vm207, %v1222, %v1224
        %v1226 = vsel %vm207, %v1220, %v1222
        %v1227 = vsel %vm207, %v1218, %v1220
        %v1228 = vsel %vm207, %v1216, %v1218
        %v1229 = vsel %vm207, %v1224, %v1216
        %v1230 = vmul.f32 %v350, %v1228
        %v1231 = vmul.f32 %v350, %v1227
        %v1232 = vmul.f32 %v350, %v1226
        %v1233 = vmul.f32 %v350, %v1225
        %v1234 = vadd.f32 %v1211, %v1230
        %v1235 = vadd.f32 %v1212, %v1231
        %v1236 = vadd.f32 %v1213, %v1232
        %v1237 = vadd.f32 %v1214, %v1233
        %1238 = vrot.lane.b32.xlu0 %v1228, 127
        %v1239 = vpop.permute.xlu0 %1238
        %1240 = vrot.lane.b32.xlu0 %v1227, 127
        %v1241 = vpop.permute.xlu0 %1240
        %1242 = vrot.lane.b32.xlu0 %v1226, 127
        %v1243 = vpop.permute.xlu0 %1242
        %1244 = vrot.lane.b32.xlu0 %v1225, 127
        %v1245 = vpop.permute.xlu0 %1244
        %1246 = vrot.lane.b32.xlu0 %v1229, 127
        %v1247 = vpop.permute.xlu0 %1246
        %v1248 = vsel %vm207, %v1245, %v1247
        %v1249 = vsel %vm207, %v1243, %v1245
        %v1250 = vsel %vm207, %v1241, %v1243
        %v1251 = vsel %vm207, %v1239, %v1241
        %v1252 = vsel %vm207, %v1247, %v1239
        %v1253 = vmul.f32 %v377, %v1251
        %v1254 = vmul.f32 %v377, %v1250
        %v1255 = vmul.f32 %v377, %v1249
        %v1256 = vmul.f32 %v377, %v1248
        %v1257 = vadd.f32 %v1234, %v1253
        %v1258 = vadd.f32 %v1235, %v1254
        %v1259 = vadd.f32 %v1236, %v1255
        %v1260 = vadd.f32 %v1237, %v1256
        %1261 = vrot.lane.b32.xlu0 %v1251, 127
        %v1262 = vpop.permute.xlu0 %1261
        %1263 = vrot.lane.b32.xlu0 %v1250, 127
        %v1264 = vpop.permute.xlu0 %1263
        %1265 = vrot.lane.b32.xlu0 %v1249, 127
        %v1266 = vpop.permute.xlu0 %1265
        %1267 = vrot.lane.b32.xlu0 %v1248, 127
        %v1268 = vpop.permute.xlu0 %1267
        %1269 = vrot.lane.b32.xlu0 %v1252, 127
        %v1270 = vpop.permute.xlu0 %1269
        %v1271 = vsel %vm207, %v1268, %v1270
        %v1272 = vsel %vm207, %v1266, %v1268
        %v1273 = vsel %vm207, %v1264, %v1266
        %v1274 = vsel %vm207, %v1262, %v1264
        %v1275 = vsel %vm207, %v1270, %v1262
        %v1276 = vmul.f32 %v404, %v1274
        %v1277 = vmul.f32 %v404, %v1273
        %v1278 = vmul.f32 %v404, %v1272
        %v1279 = vmul.f32 %v404, %v1271
        %v1280 = vadd.f32 %v1257, %v1276
        %v1281 = vadd.f32 %v1258, %v1277
        %v1282 = vadd.f32 %v1259, %v1278
        %v1283 = vadd.f32 %v1260, %v1279
        %1284 = vrot.lane.b32.xlu0 %v1274, 127
        %v1285 = vpop.permute.xlu0 %1284
        %1286 = vrot.lane.b32.xlu0 %v1273, 127
        %v1287 = vpop.permute.xlu0 %1286
        %1288 = vrot.lane.b32.xlu0 %v1272, 127
        %v1289 = vpop.permute.xlu0 %1288
        %1290 = vrot.lane.b32.xlu0 %v1271, 127
        %v1291 = vpop.permute.xlu0 %1290
        %1292 = vrot.lane.b32.xlu0 %v1275, 127
        %v1293 = vpop.permute.xlu0 %1292
        %v1294 = vsel %vm207, %v1291, %v1293
        %v1295 = vsel %vm207, %v1289, %v1291
        %v1296 = vsel %vm207, %v1287, %v1289
        %v1297 = vsel %vm207, %v1285, %v1287
        %v1298 = vsel %vm207, %v1293, %v1285
        %v1299 = vmul.f32 %v431, %v1297
        %v1300 = vmul.f32 %v431, %v1296
        %v1301 = vmul.f32 %v431, %v1295
        %v1302 = vmul.f32 %v431, %v1294
        %v1303 = vadd.f32 %v1280, %v1299
        %v1304 = vadd.f32 %v1281, %v1300
        %v1305 = vadd.f32 %v1282, %v1301
        %v1306 = vadd.f32 %v1283, %v1302
        %1307 = vrot.lane.b32.xlu0 %v1297, 127
        %v1308 = vpop.permute.xlu0 %1307
        %1309 = vrot.lane.b32.xlu0 %v1296, 127
        %v1310 = vpop.permute.xlu0 %1309
        %1311 = vrot.lane.b32.xlu0 %v1295, 127
        %v1312 = vpop.permute.xlu0 %1311
        %1313 = vrot.lane.b32.xlu0 %v1294, 127
        %v1314 = vpop.permute.xlu0 %1313
        %1315 = vrot.lane.b32.xlu0 %v1298, 127
        %v1316 = vpop.permute.xlu0 %1315
        %v1317 = vsel %vm207, %v1314, %v1316
        %v1318 = vsel %vm207, %v1312, %v1314
        %v1319 = vsel %vm207, %v1310, %v1312
        %v1320 = vsel %vm207, %v1308, %v1310
        %v1321 = vsel %vm207, %v1316, %v1308
        %v1322 = vmul.f32 %v458, %v1320
        %v1323 = vmul.f32 %v458, %v1319
        %v1324 = vmul.f32 %v458, %v1318
        %v1325 = vmul.f32 %v458, %v1317
        %v1326 = vadd.f32 %v1303, %v1322
        %v1327 = vadd.f32 %v1304, %v1323
        %v1328 = vadd.f32 %v1305, %v1324
        %v1329 = vadd.f32 %v1306, %v1325
        %1330 = vrot.lane.b32.xlu0 %v1320, 127
        %v1331 = vpop.permute.xlu0 %1330
        %1332 = vrot.lane.b32.xlu0 %v1319, 127
        %v1333 = vpop.permute.xlu0 %1332
        %1334 = vrot.lane.b32.xlu0 %v1318, 127
        %v1335 = vpop.permute.xlu0 %1334
        %1336 = vrot.lane.b32.xlu0 %v1317, 127
        %v1337 = vpop.permute.xlu0 %1336
        %1338 = vrot.lane.b32.xlu0 %v1321, 127
        %v1339 = vpop.permute.xlu0 %1338
        %v1340 = vsel %vm207, %v1337, %v1339
        %v1341 = vsel %vm207, %v1335, %v1337
        %v1342 = vsel %vm207, %v1333, %v1335
        %v1343 = vsel %vm207, %v1331, %v1333
        %v1344 = vsel %vm207, %v1339, %v1331
        %v1345 = vmul.f32 %v485, %v1343
        %v1346 = vmul.f32 %v485, %v1342
        %v1347 = vmul.f32 %v485, %v1341
        %v1348 = vmul.f32 %v485, %v1340
        %v1349 = vadd.f32 %v1326, %v1345
        %v1350 = vadd.f32 %v1327, %v1346
        %v1351 = vadd.f32 %v1328, %v1347
        %v1352 = vadd.f32 %v1329, %v1348
        %1353 = vrot.lane.b32.xlu0 %v1343, 127
        %v1354 = vpop.permute.xlu0 %1353
        %1355 = vrot.lane.b32.xlu0 %v1342, 127
        %v1356 = vpop.permute.xlu0 %1355
        %1357 = vrot.lane.b32.xlu0 %v1341, 127
        %v1358 = vpop.permute.xlu0 %1357
        %1359 = vrot.lane.b32.xlu0 %v1340, 127
        %v1360 = vpop.permute.xlu0 %1359
        %1361 = vrot.lane.b32.xlu0 %v1344, 127
        %v1362 = vpop.permute.xlu0 %1361
        %v1363 = vsel %vm207, %v1360, %v1362
        %v1364 = vsel %vm207, %v1358, %v1360
        %v1365 = vsel %vm207, %v1356, %v1358
        %v1366 = vsel %vm207, %v1354, %v1356
        %v1367 = vsel %vm207, %v1362, %v1354
        %v1368 = vmul.f32 %v512, %v1366
        %v1369 = vmul.f32 %v512, %v1365
        %v1370 = vmul.f32 %v512, %v1364
        %v1371 = vmul.f32 %v512, %v1363
        %v1372 = vadd.f32 %v1349, %v1368
        %v1373 = vadd.f32 %v1350, %v1369
        %v1374 = vadd.f32 %v1351, %v1370
        %v1375 = vadd.f32 %v1352, %v1371
        %1376 = vrot.lane.b32.xlu0 %v1366, 127
        %v1377 = vpop.permute.xlu0 %1376
        %1378 = vrot.lane.b32.xlu0 %v1365, 127
        %v1379 = vpop.permute.xlu0 %1378
        %1380 = vrot.lane.b32.xlu0 %v1364, 127
        %v1381 = vpop.permute.xlu0 %1380
        %1382 = vrot.lane.b32.xlu0 %v1363, 127
        %v1383 = vpop.permute.xlu0 %1382
        %1384 = vrot.lane.b32.xlu0 %v1367, 127
        %v1385 = vpop.permute.xlu0 %1384
        %v1386 = vsel %vm207, %v1383, %v1385
        %v1387 = vsel %vm207, %v1381, %v1383
        %v1388 = vsel %vm207, %v1379, %v1381
        %v1389 = vsel %vm207, %v1377, %v1379
        %v1390 = vsel %vm207, %v1385, %v1377
        %v1391 = vmul.f32 %v539, %v1389
        %v1392 = vmul.f32 %v539, %v1388
        %v1393 = vmul.f32 %v539, %v1387
        %v1394 = vmul.f32 %v539, %v1386
        %v1395 = vadd.f32 %v1372, %v1391
        %v1396 = vadd.f32 %v1373, %v1392
        %v1397 = vadd.f32 %v1374, %v1393
        %v1398 = vadd.f32 %v1375, %v1394
        %1399 = vrot.lane.b32.xlu0 %v1389, 127
        %v1400 = vpop.permute.xlu0 %1399
        %1401 = vrot.lane.b32.xlu0 %v1388, 127
        %v1402 = vpop.permute.xlu0 %1401
        %1403 = vrot.lane.b32.xlu0 %v1387, 127
        %v1404 = vpop.permute.xlu0 %1403
        %1405 = vrot.lane.b32.xlu0 %v1386, 127
        %v1406 = vpop.permute.xlu0 %1405
        %1407 = vrot.lane.b32.xlu0 %v1390, 127
        %v1408 = vpop.permute.xlu0 %1407
        %v1409 = vsel %vm207, %v1406, %v1408
        %v1410 = vsel %vm207, %v1404, %v1406
        %v1411 = vsel %vm207, %v1402, %v1404
        %v1412 = vsel %vm207, %v1400, %v1402
        %v1413 = vsel %vm207, %v1408, %v1400
        %v1414 = vmul.f32 %v566, %v1412
        %v1415 = vmul.f32 %v566, %v1411
        %v1416 = vmul.f32 %v566, %v1410
        %v1417 = vmul.f32 %v566, %v1409
        %v1418 = vadd.f32 %v1395, %v1414
        %v1419 = vadd.f32 %v1396, %v1415
        %v1420 = vadd.f32 %v1397, %v1416
        %v1421 = vadd.f32 %v1398, %v1417
        %1422 = vrot.lane.b32.xlu0 %v1412, 127
        %v1423 = vpop.permute.xlu0 %1422
        %1424 = vrot.lane.b32.xlu0 %v1411, 127
        %v1425 = vpop.permute.xlu0 %1424
        %1426 = vrot.lane.b32.xlu0 %v1410, 127
        %v1427 = vpop.permute.xlu0 %1426
        %1428 = vrot.lane.b32.xlu0 %v1409, 127
        %v1429 = vpop.permute.xlu0 %1428
        %1430 = vrot.lane.b32.xlu0 %v1413, 127
        %v1431 = vpop.permute.xlu0 %1430
        %v1432 = vsel %vm207, %v1429, %v1431
        %v1433 = vsel %vm207, %v1427, %v1429
        %v1434 = vsel %vm207, %v1425, %v1427
        %v1435 = vsel %vm207, %v1423, %v1425
        %v1436 = vsel %vm207, %v1431, %v1423
        %v1437 = vmul.f32 %v593, %v1435
        %v1438 = vmul.f32 %v593, %v1434
        %v1439 = vmul.f32 %v593, %v1433
        %v1440 = vmul.f32 %v593, %v1432
        %v1441 = vadd.f32 %v1418, %v1437
        %v1442 = vadd.f32 %v1419, %v1438
        %v1443 = vadd.f32 %v1420, %v1439
        %v1444 = vadd.f32 %v1421, %v1440
        %1445 = vrot.lane.b32.xlu0 %v1435, 127
        %v1446 = vpop.permute.xlu0 %1445
        %1447 = vrot.lane.b32.xlu0 %v1434, 127
        %v1448 = vpop.permute.xlu0 %1447
        %1449 = vrot.lane.b32.xlu0 %v1433, 127
        %v1450 = vpop.permute.xlu0 %1449
        %1451 = vrot.lane.b32.xlu0 %v1432, 127
        %v1452 = vpop.permute.xlu0 %1451
        %1453 = vrot.lane.b32.xlu0 %v1436, 127
        %v1454 = vpop.permute.xlu0 %1453
        %v1455 = vsel %vm207, %v1452, %v1454
        %v1456 = vsel %vm207, %v1450, %v1452
        %v1457 = vsel %vm207, %v1448, %v1450
        %v1458 = vsel %vm207, %v1446, %v1448
        %v1459 = vsel %vm207, %v1454, %v1446
        %v1460 = vmul.f32 %v620, %v1458
        %v1461 = vmul.f32 %v620, %v1457
        %v1462 = vmul.f32 %v620, %v1456
        %v1463 = vmul.f32 %v620, %v1455
        %v1464 = vadd.f32 %v1441, %v1460
        %v1465 = vadd.f32 %v1442, %v1461
        %v1466 = vadd.f32 %v1443, %v1462
        %v1467 = vadd.f32 %v1444, %v1463
        %1468 = vrot.lane.b32.xlu0 %v1458, 127
        %v1469 = vpop.permute.xlu0 %1468
        %1470 = vrot.lane.b32.xlu0 %v1457, 127
        %v1471 = vpop.permute.xlu0 %1470
        %1472 = vrot.lane.b32.xlu0 %v1456, 127
        %v1473 = vpop.permute.xlu0 %1472
        %1474 = vrot.lane.b32.xlu0 %v1455, 127
        %v1475 = vpop.permute.xlu0 %1474
        %1476 = vrot.lane.b32.xlu0 %v1459, 127
        %v1477 = vpop.permute.xlu0 %1476
        %v1478 = vsel %vm207, %v1475, %v1477
        %v1479 = vsel %vm207, %v1473, %v1475
        %v1480 = vsel %vm207, %v1471, %v1473
        %v1481 = vsel %vm207, %v1469, %v1471
        %v1482 = vsel %vm207, %v1477, %v1469
        %v1483 = vmul.f32 %v647, %v1481
        %v1484 = vmul.f32 %v647, %v1480
        %v1485 = vmul.f32 %v647, %v1479
        %v1486 = vmul.f32 %v647, %v1478
        %v1487 = vadd.f32 %v1464, %v1483
        %v1488 = vadd.f32 %v1465, %v1484
        %v1489 = vadd.f32 %v1466, %v1485
        %v1490 = vadd.f32 %v1467, %v1486
        %1491 = vrot.lane.b32.xlu0 %v1481, 127
        %v1492 = vpop.permute.xlu0 %1491
        %1493 = vrot.lane.b32.xlu0 %v1480, 127
        %v1494 = vpop.permute.xlu0 %1493
        %1495 = vrot.lane.b32.xlu0 %v1479, 127
        %v1496 = vpop.permute.xlu0 %1495
        %1497 = vrot.lane.b32.xlu0 %v1478, 127
        %v1498 = vpop.permute.xlu0 %1497
        %1499 = vrot.lane.b32.xlu0 %v1482, 127
        %v1500 = vpop.permute.xlu0 %1499
        %v1501 = vsel %vm207, %v1498, %v1500
        %v1502 = vsel %vm207, %v1496, %v1498
        %v1503 = vsel %vm207, %v1494, %v1496
        %v1504 = vsel %vm207, %v1492, %v1494
        %v1505 = vsel %vm207, %v1500, %v1492
        %v1506 = vmul.f32 %v674, %v1504
        %v1507 = vmul.f32 %v674, %v1503
        %v1508 = vmul.f32 %v674, %v1502
        %v1509 = vmul.f32 %v674, %v1501
        %v1510 = vadd.f32 %v1487, %v1506
        %v1511 = vadd.f32 %v1488, %v1507
        %v1512 = vadd.f32 %v1489, %v1508
        %v1513 = vadd.f32 %v1490, %v1509
        %1514 = vrot.lane.b32.xlu0 %v1504, 127
        %v1515 = vpop.permute.xlu0 %1514
        %1516 = vrot.lane.b32.xlu0 %v1503, 127
        %v1517 = vpop.permute.xlu0 %1516
        %1518 = vrot.lane.b32.xlu0 %v1502, 127
        %v1519 = vpop.permute.xlu0 %1518
        %1520 = vrot.lane.b32.xlu0 %v1501, 127
        %v1521 = vpop.permute.xlu0 %1520
        %1522 = vrot.lane.b32.xlu0 %v1505, 127
        %v1523 = vpop.permute.xlu0 %1522
        %v1524 = vsel %vm207, %v1521, %v1523
        %v1525 = vsel %vm207, %v1519, %v1521
        %v1526 = vsel %vm207, %v1517, %v1519
        %v1527 = vsel %vm207, %v1515, %v1517
        %v1528 = vsel %vm207, %v1523, %v1515
        %v1529 = vmul.f32 %v701, %v1527
        %v1530 = vmul.f32 %v701, %v1526
        %v1531 = vmul.f32 %v701, %v1525
        %v1532 = vmul.f32 %v701, %v1524
        %v1533 = vadd.f32 %v1510, %v1529
        %v1534 = vadd.f32 %v1511, %v1530
        %v1535 = vadd.f32 %v1512, %v1531
        %v1536 = vadd.f32 %v1513, %v1532
        %1537 = vrot.lane.b32.xlu0 %v1527, 127
        %v1538 = vpop.permute.xlu0 %1537
        %1539 = vrot.lane.b32.xlu0 %v1526, 127
        %v1540 = vpop.permute.xlu0 %1539
        %1541 = vrot.lane.b32.xlu0 %v1525, 127
        %v1542 = vpop.permute.xlu0 %1541
        %1543 = vrot.lane.b32.xlu0 %v1524, 127
        %v1544 = vpop.permute.xlu0 %1543
        %1545 = vrot.lane.b32.xlu0 %v1528, 127
        %v1546 = vpop.permute.xlu0 %1545
        %v1547 = vsel %vm207, %v1544, %v1546
        %v1548 = vsel %vm207, %v1542, %v1544
        %v1549 = vsel %vm207, %v1540, %v1542
        %v1550 = vsel %vm207, %v1538, %v1540
        %v1551 = vsel %vm207, %v1546, %v1538
        %v1552 = vmul.f32 %v728, %v1550
        %v1553 = vmul.f32 %v728, %v1549
        %v1554 = vmul.f32 %v728, %v1548
        %v1555 = vmul.f32 %v728, %v1547
        %v1556 = vadd.f32 %v1533, %v1552
        %v1557 = vadd.f32 %v1534, %v1553
        %v1558 = vadd.f32 %v1535, %v1554
        %v1559 = vadd.f32 %v1536, %v1555
        %1560 = vrot.lane.b32.xlu0 %v1550, 127
        %v1561 = vpop.permute.xlu0 %1560
        %1562 = vrot.lane.b32.xlu0 %v1549, 127
        %v1563 = vpop.permute.xlu0 %1562
        %1564 = vrot.lane.b32.xlu0 %v1548, 127
        %v1565 = vpop.permute.xlu0 %1564
        %1566 = vrot.lane.b32.xlu0 %v1547, 127
        %v1567 = vpop.permute.xlu0 %1566
        %1568 = vrot.lane.b32.xlu0 %v1551, 127
        %v1569 = vpop.permute.xlu0 %1568
        %v1570 = vsel %vm207, %v1567, %v1569
        %v1571 = vsel %vm207, %v1565, %v1567
        %v1572 = vsel %vm207, %v1563, %v1565
        %v1573 = vsel %vm207, %v1561, %v1563
        %v1574 = vsel %vm207, %v1569, %v1561
        %v1575 = vmul.f32 %v755, %v1573
        %v1576 = vmul.f32 %v755, %v1572
        %v1577 = vmul.f32 %v755, %v1571
        %v1578 = vmul.f32 %v755, %v1570
        %v1579 = vadd.f32 %v1556, %v1575
        %v1580 = vadd.f32 %v1557, %v1576
        %v1581 = vadd.f32 %v1558, %v1577
        %v1582 = vadd.f32 %v1559, %v1578
        %1583 = vrot.lane.b32.xlu0 %v1573, 127
        %v1584 = vpop.permute.xlu0 %1583
        %1585 = vrot.lane.b32.xlu0 %v1572, 127
        %v1586 = vpop.permute.xlu0 %1585
        %1587 = vrot.lane.b32.xlu0 %v1571, 127
        %v1588 = vpop.permute.xlu0 %1587
        %1589 = vrot.lane.b32.xlu0 %v1570, 127
        %v1590 = vpop.permute.xlu0 %1589
        %1591 = vrot.lane.b32.xlu0 %v1574, 127
        %v1592 = vpop.permute.xlu0 %1591
        %v1593 = vsel %vm207, %v1590, %v1592
        %v1594 = vsel %vm207, %v1588, %v1590
        %v1595 = vsel %vm207, %v1586, %v1588
        %v1596 = vsel %vm207, %v1584, %v1586
        %v1597 = vsel %vm207, %v1592, %v1584
        %v1598 = vmul.f32 %v782, %v1596
        %v1599 = vmul.f32 %v782, %v1595
        %v1600 = vmul.f32 %v782, %v1594
        %v1601 = vmul.f32 %v782, %v1593
        %v1602 = vadd.f32 %v1579, %v1598
        %v1603 = vadd.f32 %v1580, %v1599
        %v1604 = vadd.f32 %v1581, %v1600
        %v1605 = vadd.f32 %v1582, %v1601
        %1606 = vrot.lane.b32.xlu0 %v1596, 127
        %v1607 = vpop.permute.xlu0 %1606
        %1608 = vrot.lane.b32.xlu0 %v1595, 127
        %v1609 = vpop.permute.xlu0 %1608
        %1610 = vrot.lane.b32.xlu0 %v1594, 127
        %v1611 = vpop.permute.xlu0 %1610
        %1612 = vrot.lane.b32.xlu0 %v1593, 127
        %v1613 = vpop.permute.xlu0 %1612
        %1614 = vrot.lane.b32.xlu0 %v1597, 127
        %v1615 = vpop.permute.xlu0 %1614
        %v1616 = vsel %vm207, %v1613, %v1615
        %v1617 = vsel %vm207, %v1611, %v1613
        %v1618 = vsel %vm207, %v1609, %v1611
        %v1619 = vsel %vm207, %v1607, %v1609
        %v1620 = vsel %vm207, %v1615, %v1607
        %v1621 = vmul.f32 %v809, %v1619
        %v1622 = vmul.f32 %v809, %v1618
        %v1623 = vmul.f32 %v809, %v1617
        %v1624 = vmul.f32 %v809, %v1616
        %v1625 = vadd.f32 %v1602, %v1621
        %v1626 = vadd.f32 %v1603, %v1622
        %v1627 = vadd.f32 %v1604, %v1623
        %v1628 = vadd.f32 %v1605, %v1624
        %1629 = vrot.lane.b32.xlu0 %v1619, 127
        %v1630 = vpop.permute.xlu0 %1629
        %1631 = vrot.lane.b32.xlu0 %v1618, 127
        %v1632 = vpop.permute.xlu0 %1631
        %1633 = vrot.lane.b32.xlu0 %v1617, 127
        %v1634 = vpop.permute.xlu0 %1633
        %1635 = vrot.lane.b32.xlu0 %v1616, 127
        %v1636 = vpop.permute.xlu0 %1635
        %1637 = vrot.lane.b32.xlu0 %v1620, 127
        %v1638 = vpop.permute.xlu0 %1637
        %v1639 = vsel %vm207, %v1636, %v1638
        %v1640 = vsel %vm207, %v1634, %v1636
        %v1641 = vsel %vm207, %v1632, %v1634
        %v1642 = vsel %vm207, %v1630, %v1632
        %v1643 = vsel %vm207, %v1638, %v1630
        %v1644 = vmul.f32 %v836, %v1642
        %v1645 = vmul.f32 %v836, %v1641
        %v1646 = vmul.f32 %v836, %v1640
        %v1647 = vmul.f32 %v836, %v1639
        %v1648 = vadd.f32 %v1625, %v1644
        %v1649 = vadd.f32 %v1626, %v1645
        %v1650 = vadd.f32 %v1627, %v1646
        %v1651 = vadd.f32 %v1628, %v1647
        %1652 = vrot.lane.b32.xlu0 %v1642, 127
        %v1653 = vpop.permute.xlu0 %1652
        %1654 = vrot.lane.b32.xlu0 %v1641, 127
        %v1655 = vpop.permute.xlu0 %1654
        %1656 = vrot.lane.b32.xlu0 %v1640, 127
        %v1657 = vpop.permute.xlu0 %1656
        %1658 = vrot.lane.b32.xlu0 %v1639, 127
        %v1659 = vpop.permute.xlu0 %1658
        %1660 = vrot.lane.b32.xlu0 %v1643, 127
        %v1661 = vpop.permute.xlu0 %1660
        %v1662 = vsel %vm207, %v1659, %v1661
        %v1663 = vsel %vm207, %v1657, %v1659
        %v1664 = vsel %vm207, %v1655, %v1657
        %v1665 = vsel %vm207, %v1653, %v1655
        %v1666 = vsel %vm207, %v1661, %v1653
        %v1667 = vmul.f32 %v863, %v1665
        %v1668 = vmul.f32 %v863, %v1664
        %v1669 = vmul.f32 %v863, %v1663
        %v1670 = vmul.f32 %v863, %v1662
        %v1671 = vadd.f32 %v1648, %v1667
        %v1672 = vadd.f32 %v1649, %v1668
        %v1673 = vadd.f32 %v1650, %v1669
        %v1674 = vadd.f32 %v1651, %v1670
        %1675 = vrot.lane.b32.xlu0 %v1665, 127
        %v1676 = vpop.permute.xlu0 %1675
        %1677 = vrot.lane.b32.xlu0 %v1664, 127
        %v1678 = vpop.permute.xlu0 %1677
        %1679 = vrot.lane.b32.xlu0 %v1663, 127
        %v1680 = vpop.permute.xlu0 %1679
        %1681 = vrot.lane.b32.xlu0 %v1662, 127
        %v1682 = vpop.permute.xlu0 %1681
        %1683 = vrot.lane.b32.xlu0 %v1666, 127
        %v1684 = vpop.permute.xlu0 %1683
        %v1685 = vsel %vm207, %v1682, %v1684
        %v1686 = vsel %vm207, %v1680, %v1682
        %v1687 = vsel %vm207, %v1678, %v1680
        %v1688 = vsel %vm207, %v1676, %v1678
        %v1689 = vsel %vm207, %v1684, %v1676
        %v1690 = vmul.f32 %v890, %v1688
        %v1691 = vmul.f32 %v890, %v1687
        %v1692 = vmul.f32 %v890, %v1686
        %v1693 = vmul.f32 %v890, %v1685
        %v1694 = vadd.f32 %v1671, %v1690
        %v1695 = vadd.f32 %v1672, %v1691
        %v1696 = vadd.f32 %v1673, %v1692
        %v1697 = vadd.f32 %v1674, %v1693
        %1698 = vrot.lane.b32.xlu0 %v1688, 127
        %v1699 = vpop.permute.xlu0 %1698
        %1700 = vrot.lane.b32.xlu0 %v1687, 127
        %v1701 = vpop.permute.xlu0 %1700
        %1702 = vrot.lane.b32.xlu0 %v1686, 127
        %v1703 = vpop.permute.xlu0 %1702
        %1704 = vrot.lane.b32.xlu0 %v1685, 127
        %v1705 = vpop.permute.xlu0 %1704
        %1706 = vrot.lane.b32.xlu0 %v1689, 127
        %v1707 = vpop.permute.xlu0 %1706
        %v1708 = vsel %vm207, %v1705, %v1707
        %v1709 = vsel %vm207, %v1703, %v1705
        %v1710 = vsel %vm207, %v1701, %v1703
        %v1711 = vsel %vm207, %v1699, %v1701
        %v1712 = vsel %vm207, %v1707, %v1699
        %v1713 = vmul.f32 %v917, %v1711
        %v1714 = vmul.f32 %v917, %v1710
        %v1715 = vmul.f32 %v917, %v1709
        %v1716 = vmul.f32 %v917, %v1708
        %v1717 = vadd.f32 %v1694, %v1713
        %v1718 = vadd.f32 %v1695, %v1714
        %v1719 = vadd.f32 %v1696, %v1715
        %v1720 = vadd.f32 %v1697, %v1716
        %1721 = vrot.lane.b32.xlu0 %v1711, 127
        %v1722 = vpop.permute.xlu0 %1721
        %1723 = vrot.lane.b32.xlu0 %v1710, 127
        %v1724 = vpop.permute.xlu0 %1723
        %1725 = vrot.lane.b32.xlu0 %v1709, 127
        %v1726 = vpop.permute.xlu0 %1725
        %1727 = vrot.lane.b32.xlu0 %v1708, 127
        %v1728 = vpop.permute.xlu0 %1727
        %1729 = vrot.lane.b32.xlu0 %v1712, 127
        %v1730 = vpop.permute.xlu0 %1729
        %v1731 = vsel %vm207, %v1728, %v1730
        %v1732 = vsel %vm207, %v1726, %v1728
        %v1733 = vsel %vm207, %v1724, %v1726
        %v1734 = vsel %vm207, %v1722, %v1724
        %v1735 = vsel %vm207, %v1730, %v1722
        %v1736 = vmul.f32 %v944, %v1734
        %v1737 = vmul.f32 %v944, %v1733
        %v1738 = vmul.f32 %v944, %v1732
        %v1739 = vmul.f32 %v944, %v1731
        %v1740 = vadd.f32 %v1717, %v1736
        %v1741 = vadd.f32 %v1718, %v1737
        %v1742 = vadd.f32 %v1719, %v1738
        %v1743 = vadd.f32 %v1720, %v1739
        %1744 = vrot.lane.b32.xlu0 %v1734, 127
        %v1745 = vpop.permute.xlu0 %1744
        %1746 = vrot.lane.b32.xlu0 %v1733, 127
        %v1747 = vpop.permute.xlu0 %1746
        %1748 = vrot.lane.b32.xlu0 %v1732, 127
        %v1749 = vpop.permute.xlu0 %1748
        %1750 = vrot.lane.b32.xlu0 %v1731, 127
        %v1751 = vpop.permute.xlu0 %1750
        %1752 = vrot.lane.b32.xlu0 %v1735, 127
        %v1753 = vpop.permute.xlu0 %1752
        %v1754 = vsel %vm207, %v1751, %v1753
        %v1755 = vsel %vm207, %v1749, %v1751
        %v1756 = vsel %vm207, %v1747, %v1749
        %v1757 = vsel %vm207, %v1745, %v1747
        %v1758 = vsel %vm207, %v1753, %v1745
        %v1759 = vmul.f32 %v971, %v1757
        %v1760 = vmul.f32 %v971, %v1756
        %v1761 = vmul.f32 %v971, %v1755
        %v1762 = vmul.f32 %v971, %v1754
        %v1763 = vadd.f32 %v1740, %v1759
        %v1764 = vadd.f32 %v1741, %v1760
        %v1765 = vadd.f32 %v1742, %v1761
        %v1766 = vadd.f32 %v1743, %v1762
        %1767 = vrot.lane.b32.xlu0 %v1757, 127
        %v1768 = vpop.permute.xlu0 %1767
        %1769 = vrot.lane.b32.xlu0 %v1756, 127
        %v1770 = vpop.permute.xlu0 %1769
        %1771 = vrot.lane.b32.xlu0 %v1755, 127
        %v1772 = vpop.permute.xlu0 %1771
        %1773 = vrot.lane.b32.xlu0 %v1754, 127
        %v1774 = vpop.permute.xlu0 %1773
        %1775 = vrot.lane.b32.xlu0 %v1758, 127
        %v1776 = vpop.permute.xlu0 %1775
        %v1777 = vsel %vm207, %v1774, %v1776
        %v1778 = vsel %vm207, %v1772, %v1774
        %v1779 = vsel %vm207, %v1770, %v1772
        %v1780 = vsel %vm207, %v1768, %v1770
        %v1781 = vsel %vm207, %v1776, %v1768
        %v1782 = vmul.f32 %v998, %v1780
        %v1783 = vmul.f32 %v998, %v1779
        %v1784 = vmul.f32 %v998, %v1778
        %v1785 = vmul.f32 %v998, %v1777
        %v1786 = vadd.f32 %v1763, %v1782
        %v1787 = vadd.f32 %v1764, %v1783
        %v1788 = vadd.f32 %v1765, %v1784
        %v1789 = vadd.f32 %v1766, %v1785
        %1790 = vrot.lane.b32.xlu0 %v1780, 127
        %v1791 = vpop.permute.xlu0 %1790
        %1792 = vrot.lane.b32.xlu0 %v1779, 127
        %v1793 = vpop.permute.xlu0 %1792
        %1794 = vrot.lane.b32.xlu0 %v1778, 127
        %v1795 = vpop.permute.xlu0 %1794
        %1796 = vrot.lane.b32.xlu0 %v1777, 127
        %v1797 = vpop.permute.xlu0 %1796
        %1798 = vrot.lane.b32.xlu0 %v1781, 127
        %v1799 = vpop.permute.xlu0 %1798
        %v1800 = vsel %vm207, %v1797, %v1799
        %v1801 = vsel %vm207, %v1795, %v1797
        %v1802 = vsel %vm207, %v1793, %v1795
        %v1803 = vsel %vm207, %v1791, %v1793
        %v1804 = vsel %vm207, %v1799, %v1791
        %v1805 = vmul.f32 %v1025, %v1803
        %v1806 = vmul.f32 %v1025, %v1802
        %v1807 = vmul.f32 %v1025, %v1801
        %v1808 = vmul.f32 %v1025, %v1800
        %v1809 = vadd.f32 %v1786, %v1805
        %v1810 = vadd.f32 %v1787, %v1806
        %v1811 = vadd.f32 %v1788, %v1807
        %v1812 = vadd.f32 %v1789, %v1808
        %1813 = vrot.lane.b32.xlu0 %v1803, 127
        %v1814 = vpop.permute.xlu0 %1813
        %1815 = vrot.lane.b32.xlu0 %v1802, 127
        %v1816 = vpop.permute.xlu0 %1815
        %1817 = vrot.lane.b32.xlu0 %v1801, 127
        %v1818 = vpop.permute.xlu0 %1817
        %1819 = vrot.lane.b32.xlu0 %v1800, 127
        %v1820 = vpop.permute.xlu0 %1819
        %1821 = vrot.lane.b32.xlu0 %v1804, 127
        %v1822 = vpop.permute.xlu0 %1821
        %v1823 = vsel %vm207, %v1820, %v1822
        %v1824 = vsel %vm207, %v1818, %v1820
        %v1825 = vsel %vm207, %v1816, %v1818
        %v1826 = vsel %vm207, %v1814, %v1816
        %v1827 = vmul.f32 %v1051, %v1826
        %v1828 = vmul.f32 %v1051, %v1825
        %v1829 = vmul.f32 %v1051, %v1824
        %v1830 = vmul.f32 %v1051, %v1823
        %v1831 = vadd.f32 %v1809, %v1827
        %v1832 = vadd.f32 %v1810, %v1828
        %v1833 = vadd.f32 %v1811, %v1829
        %v1834 = vadd.f32 %v1812, %v1830
        %1835 = vst [vmem:[%s148 + $0x20] sm:$0xff] %v1831
        %1836 = vst [vmem:[%s148 + $0x28] sm:$0xff] %v1832
        %1837 = vst [vmem:[%s148 + $0x30] sm:$0xff] %v1833
        %1838 = vst [vmem:[%s148 + $0x38] sm:$0xff] %v1834
        %s1839 = sadd.s32 %s155, 1024
        %s1840 = sshra.s32 %s1839, 7
        %s1841 = sand.u32 %s1839, 127
        %s1842 = scalar_lea.vmem %s152, %s1840
        %v1843 = vld [vmem:[%s1842] sm:$0x1f]
        %v1845 = vlaneseq
        %v1846 = vshrl.u32 %v1845, 7
        %v1847 = vsub.s32 0, %v1846
        %v1848 = vrot.slane %v1843, %v1847
        %v1849 = vlaneseq
        %v1850 = vshrl.u32 %v1849, 7
        %v1851 = vsub.s32 1, %v1850
        %v1852 = vrot.slane %v1843, %v1851
        %v1853 = vlaneseq
        %v1854 = vshrl.u32 %v1853, 7
        %v1855 = vsub.s32 2, %v1854
        %v1856 = vrot.slane %v1843, %v1855
        %v1857 = vlaneseq
        %v1858 = vshrl.u32 %v1857, 7
        %v1859 = vsub.s32 3, %v1858
        %v1860 = vrot.slane %v1843, %v1859
        %v1861 = vlaneseq
        %v1862 = vshrl.u32 %v1861, 7
        %v1863 = vsub.s32 4, %v1862
        %v1864 = vrot.slane %v1843, %v1863
        %v1870 = vmul.f32 %v189, %v1848
        %v1871 = vmul.f32 %v189, %v1852
        %v1872 = vmul.f32 %v189, %v1856
        %v1873 = vmul.f32 %v189, %v1860
        %1874 = vrot.lane.b32.xlu0 %v1848, 127
        %v1875 = vpop.permute.xlu0 %1874
        %1876 = vrot.lane.b32.xlu0 %v1852, 127
        %v1877 = vpop.permute.xlu0 %1876
        %1878 = vrot.lane.b32.xlu0 %v1856, 127
        %v1879 = vpop.permute.xlu0 %1878
        %1880 = vrot.lane.b32.xlu0 %v1860, 127
        %v1881 = vpop.permute.xlu0 %1880
        %1882 = vrot.lane.b32.xlu0 %v1864, 127
        %v1883 = vpop.permute.xlu0 %1882
        %v1884 = vsel %vm207, %v1881, %v1883
        %v1885 = vsel %vm207, %v1879, %v1881
        %v1886 = vsel %vm207, %v1877, %v1879
        %v1887 = vsel %vm207, %v1875, %v1877
        %v1888 = vsel %vm207, %v1883, %v1875
        %v1889 = vmul.f32 %v215, %v1887
        %v1890 = vmul.f32 %v215, %v1886
        %v1891 = vmul.f32 %v215, %v1885
        %v1892 = vmul.f32 %v215, %v1884
        %v1893 = vadd.f32 %v1870, %v1889
        %v1894 = vadd.f32 %v1871, %v1890
        %v1895 = vadd.f32 %v1872, %v1891
        %v1896 = vadd.f32 %v1873, %v1892
        %1897 = vrot.lane.b32.xlu0 %v1887, 127
        %v1898 = vpop.permute.xlu0 %1897
        %1899 = vrot.lane.b32.xlu0 %v1886, 127
        %v1900 = vpop.permute.xlu0 %1899
        %1901 = vrot.lane.b32.xlu0 %v1885, 127
        %v1902 = vpop.permute.xlu0 %1901
        %1903 = vrot.lane.b32.xlu0 %v1884, 127
        %v1904 = vpop.permute.xlu0 %1903
        %1905 = vrot.lane.b32.xlu0 %v1888, 127
        %v1906 = vpop.permute.xlu0 %1905
        %v1907 = vsel %vm207, %v1904, %v1906
        %v1908 = vsel %vm207, %v1902, %v1904
        %v1909 = vsel %vm207, %v1900, %v1902
        %v1910 = vsel %vm207, %v1898, %v1900
        %v1911 = vsel %vm207, %v1906, %v1898
        %v1912 = vmul.f32 %v242, %v1910
        %v1913 = vmul.f32 %v242, %v1909
        %v1914 = vmul.f32 %v242, %v1908
        %v1915 = vmul.f32 %v242, %v1907
        %v1916 = vadd.f32 %v1893, %v1912
        %v1917 = vadd.f32 %v1894, %v1913
        %v1918 = vadd.f32 %v1895, %v1914
        %v1919 = vadd.f32 %v1896, %v1915
        %1920 = vrot.lane.b32.xlu0 %v1910, 127
        %v1921 = vpop.permute.xlu0 %1920
        %1922 = vrot.lane.b32.xlu0 %v1909, 127
        %v1923 = vpop.permute.xlu0 %1922
        %1924 = vrot.lane.b32.xlu0 %v1908, 127
        %v1925 = vpop.permute.xlu0 %1924
        %1926 = vrot.lane.b32.xlu0 %v1907, 127
        %v1927 = vpop.permute.xlu0 %1926
        %1928 = vrot.lane.b32.xlu0 %v1911, 127
        %v1929 = vpop.permute.xlu0 %1928
        %v1930 = vsel %vm207, %v1927, %v1929
        %v1931 = vsel %vm207, %v1925, %v1927
        %v1932 = vsel %vm207, %v1923, %v1925
        %v1933 = vsel %vm207, %v1921, %v1923
        %v1934 = vsel %vm207, %v1929, %v1921
        %v1935 = vmul.f32 %v269, %v1933
        %v1936 = vmul.f32 %v269, %v1932
        %v1937 = vmul.f32 %v269, %v1931
        %v1938 = vmul.f32 %v269, %v1930
        %v1939 = vadd.f32 %v1916, %v1935
        %v1940 = vadd.f32 %v1917, %v1936
        %v1941 = vadd.f32 %v1918, %v1937
        %v1942 = vadd.f32 %v1919, %v1938
        %1943 = vrot.lane.b32.xlu0 %v1933, 127
        %v1944 = vpop.permute.xlu0 %1943
        %1945 = vrot.lane.b32.xlu0 %v1932, 127
        %v1946 = vpop.permute.xlu0 %1945
        %1947 = vrot.lane.b32.xlu0 %v1931, 127
        %v1948 = vpop.permute.xlu0 %1947
        %1949 = vrot.lane.b32.xlu0 %v1930, 127
        %v1950 = vpop.permute.xlu0 %1949
        %1951 = vrot.lane.b32.xlu0 %v1934, 127
        %v1952 = vpop.permute.xlu0 %1951
        %v1953 = vsel %vm207, %v1950, %v1952
        %v1954 = vsel %vm207, %v1948, %v1950
        %v1955 = vsel %vm207, %v1946, %v1948
        %v1956 = vsel %vm207, %v1944, %v1946
        %v1957 = vsel %vm207, %v1952, %v1944
        %v1958 = vmul.f32 %v296, %v1956
        %v1959 = vmul.f32 %v296, %v1955
        %v1960 = vmul.f32 %v296, %v1954
        %v1961 = vmul.f32 %v296, %v1953
        %v1962 = vadd.f32 %v1939, %v1958
        %v1963 = vadd.f32 %v1940, %v1959
        %v1964 = vadd.f32 %v1941, %v1960
        %v1965 = vadd.f32 %v1942, %v1961
        %1966 = vrot.lane.b32.xlu0 %v1956, 127
        %v1967 = vpop.permute.xlu0 %1966
        %1968 = vrot.lane.b32.xlu0 %v1955, 127
        %v1969 = vpop.permute.xlu0 %1968
        %1970 = vrot.lane.b32.xlu0 %v1954, 127
        %v1971 = vpop.permute.xlu0 %1970
        %1972 = vrot.lane.b32.xlu0 %v1953, 127
        %v1973 = vpop.permute.xlu0 %1972
        %1974 = vrot.lane.b32.xlu0 %v1957, 127
        %v1975 = vpop.permute.xlu0 %1974
        %v1976 = vsel %vm207, %v1973, %v1975
        %v1977 = vsel %vm207, %v1971, %v1973
        %v1978 = vsel %vm207, %v1969, %v1971
        %v1979 = vsel %vm207, %v1967, %v1969
        %v1980 = vsel %vm207, %v1975, %v1967
        %v1981 = vmul.f32 %v323, %v1979
        %v1982 = vmul.f32 %v323, %v1978
        %v1983 = vmul.f32 %v323, %v1977
        %v1984 = vmul.f32 %v323, %v1976
        %v1985 = vadd.f32 %v1962, %v1981
        %v1986 = vadd.f32 %v1963, %v1982
        %v1987 = vadd.f32 %v1964, %v1983
        %v1988 = vadd.f32 %v1965, %v1984
        %1989 = vrot.lane.b32.xlu0 %v1979, 127
        %v1990 = vpop.permute.xlu0 %1989
        %1991 = vrot.lane.b32.xlu0 %v1978, 127
        %v1992 = vpop.permute.xlu0 %1991
        %1993 = vrot.lane.b32.xlu0 %v1977, 127
        %v1994 = vpop.permute.xlu0 %1993
        %1995 = vrot.lane.b32.xlu0 %v1976, 127
        %v1996 = vpop.permute.xlu0 %1995
        %1997 = vrot.lane.b32.xlu0 %v1980, 127
        %v1998 = vpop.permute.xlu0 %1997
        %v1999 = vsel %vm207, %v1996, %v1998
        %v2000 = vsel %vm207, %v1994, %v1996
        %v2001 = vsel %vm207, %v1992, %v1994
        %v2002 = vsel %vm207, %v1990, %v1992
        %v2003 = vsel %vm207, %v1998, %v1990
        %v2004 = vmul.f32 %v350, %v2002
        %v2005 = vmul.f32 %v350, %v2001
        %v2006 = vmul.f32 %v350, %v2000
        %v2007 = vmul.f32 %v350, %v1999
        %v2008 = vadd.f32 %v1985, %v2004
        %v2009 = vadd.f32 %v1986, %v2005
        %v2010 = vadd.f32 %v1987, %v2006
        %v2011 = vadd.f32 %v1988, %v2007
        %2012 = vrot.lane.b32.xlu0 %v2002, 127
        %v2013 = vpop.permute.xlu0 %2012
        %2014 = vrot.lane.b32.xlu0 %v2001, 127
        %v2015 = vpop.permute.xlu0 %2014
        %2016 = vrot.lane.b32.xlu0 %v2000, 127
        %v2017 = vpop.permute.xlu0 %2016
        %2018 = vrot.lane.b32.xlu0 %v1999, 127
        %v2019 = vpop.permute.xlu0 %2018
        %2020 = vrot.lane.b32.xlu0 %v2003, 127
        %v2021 = vpop.permute.xlu0 %2020
        %v2022 = vsel %vm207, %v2019, %v2021
        %v2023 = vsel %vm207, %v2017, %v2019
        %v2024 = vsel %vm207, %v2015, %v2017
        %v2025 = vsel %vm207, %v2013, %v2015
        %v2026 = vsel %vm207, %v2021, %v2013
        %v2027 = vmul.f32 %v377, %v2025
        %v2028 = vmul.f32 %v377, %v2024
        %v2029 = vmul.f32 %v377, %v2023
        %v2030 = vmul.f32 %v377, %v2022
        %v2031 = vadd.f32 %v2008, %v2027
        %v2032 = vadd.f32 %v2009, %v2028
        %v2033 = vadd.f32 %v2010, %v2029
        %v2034 = vadd.f32 %v2011, %v2030
        %2035 = vrot.lane.b32.xlu0 %v2025, 127
        %v2036 = vpop.permute.xlu0 %2035
        %2037 = vrot.lane.b32.xlu0 %v2024, 127
        %v2038 = vpop.permute.xlu0 %2037
        %2039 = vrot.lane.b32.xlu0 %v2023, 127
        %v2040 = vpop.permute.xlu0 %2039
        %2041 = vrot.lane.b32.xlu0 %v2022, 127
        %v2042 = vpop.permute.xlu0 %2041
        %2043 = vrot.lane.b32.xlu0 %v2026, 127
        %v2044 = vpop.permute.xlu0 %2043
        %v2045 = vsel %vm207, %v2042, %v2044
        %v2046 = vsel %vm207, %v2040, %v2042
        %v2047 = vsel %vm207, %v2038, %v2040
        %v2048 = vsel %vm207, %v2036, %v2038
        %v2049 = vsel %vm207, %v2044, %v2036
        %v2050 = vmul.f32 %v404, %v2048
        %v2051 = vmul.f32 %v404, %v2047
        %v2052 = vmul.f32 %v404, %v2046
        %v2053 = vmul.f32 %v404, %v2045
        %v2054 = vadd.f32 %v2031, %v2050
        %v2055 = vadd.f32 %v2032, %v2051
        %v2056 = vadd.f32 %v2033, %v2052
        %v2057 = vadd.f32 %v2034, %v2053
        %2058 = vrot.lane.b32.xlu0 %v2048, 127
        %v2059 = vpop.permute.xlu0 %2058
        %2060 = vrot.lane.b32.xlu0 %v2047, 127
        %v2061 = vpop.permute.xlu0 %2060
        %2062 = vrot.lane.b32.xlu0 %v2046, 127
        %v2063 = vpop.permute.xlu0 %2062
        %2064 = vrot.lane.b32.xlu0 %v2045, 127
        %v2065 = vpop.permute.xlu0 %2064
        %2066 = vrot.lane.b32.xlu0 %v2049, 127
        %v2067 = vpop.permute.xlu0 %2066
        %v2068 = vsel %vm207, %v2065, %v2067
        %v2069 = vsel %vm207, %v2063, %v2065
        %v2070 = vsel %vm207, %v2061, %v2063
        %v2071 = vsel %vm207, %v2059, %v2061
        %v2072 = vsel %vm207, %v2067, %v2059
        %v2073 = vmul.f32 %v431, %v2071
        %v2074 = vmul.f32 %v431, %v2070
        %v2075 = vmul.f32 %v431, %v2069
        %v2076 = vmul.f32 %v431, %v2068
        %v2077 = vadd.f32 %v2054, %v2073
        %v2078 = vadd.f32 %v2055, %v2074
        %v2079 = vadd.f32 %v2056, %v2075
        %v2080 = vadd.f32 %v2057, %v2076
        %2081 = vrot.lane.b32.xlu0 %v2071, 127
        %v2082 = vpop.permute.xlu0 %2081
        %2083 = vrot.lane.b32.xlu0 %v2070, 127
        %v2084 = vpop.permute.xlu0 %2083
        %2085 = vrot.lane.b32.xlu0 %v2069, 127
        %v2086 = vpop.permute.xlu0 %2085
        %2087 = vrot.lane.b32.xlu0 %v2068, 127
        %v2088 = vpop.permute.xlu0 %2087
        %2089 = vrot.lane.b32.xlu0 %v2072, 127
        %v2090 = vpop.permute.xlu0 %2089
        %v2091 = vsel %vm207, %v2088, %v2090
        %v2092 = vsel %vm207, %v2086, %v2088
        %v2093 = vsel %vm207, %v2084, %v2086
        %v2094 = vsel %vm207, %v2082, %v2084
        %v2095 = vsel %vm207, %v2090, %v2082
        %v2096 = vmul.f32 %v458, %v2094
        %v2097 = vmul.f32 %v458, %v2093
        %v2098 = vmul.f32 %v458, %v2092
        %v2099 = vmul.f32 %v458, %v2091
        %v2100 = vadd.f32 %v2077, %v2096
        %v2101 = vadd.f32 %v2078, %v2097
        %v2102 = vadd.f32 %v2079, %v2098
        %v2103 = vadd.f32 %v2080, %v2099
        %2104 = vrot.lane.b32.xlu0 %v2094, 127
        %v2105 = vpop.permute.xlu0 %2104
        %2106 = vrot.lane.b32.xlu0 %v2093, 127
        %v2107 = vpop.permute.xlu0 %2106
        %2108 = vrot.lane.b32.xlu0 %v2092, 127
        %v2109 = vpop.permute.xlu0 %2108
        %2110 = vrot.lane.b32.xlu0 %v2091, 127
        %v2111 = vpop.permute.xlu0 %2110
        %2112 = vrot.lane.b32.xlu0 %v2095, 127
        %v2113 = vpop.permute.xlu0 %2112
        %v2114 = vsel %vm207, %v2111, %v2113
        %v2115 = vsel %vm207, %v2109, %v2111
        %v2116 = vsel %vm207, %v2107, %v2109
        %v2117 = vsel %vm207, %v2105, %v2107
        %v2118 = vsel %vm207, %v2113, %v2105
        %v2119 = vmul.f32 %v485, %v2117
        %v2120 = vmul.f32 %v485, %v2116
        %v2121 = vmul.f32 %v485, %v2115
        %v2122 = vmul.f32 %v485, %v2114
        %v2123 = vadd.f32 %v2100, %v2119
        %v2124 = vadd.f32 %v2101, %v2120
        %v2125 = vadd.f32 %v2102, %v2121
        %v2126 = vadd.f32 %v2103, %v2122
        %2127 = vrot.lane.b32.xlu0 %v2117, 127
        %v2128 = vpop.permute.xlu0 %2127
        %2129 = vrot.lane.b32.xlu0 %v2116, 127
        %v2130 = vpop.permute.xlu0 %2129
        %2131 = vrot.lane.b32.xlu0 %v2115, 127
        %v2132 = vpop.permute.xlu0 %2131
        %2133 = vrot.lane.b32.xlu0 %v2114, 127
        %v2134 = vpop.permute.xlu0 %2133
        %2135 = vrot.lane.b32.xlu0 %v2118, 127
        %v2136 = vpop.permute.xlu0 %2135
        %v2137 = vsel %vm207, %v2134, %v2136
        %v2138 = vsel %vm207, %v2132, %v2134
        %v2139 = vsel %vm207, %v2130, %v2132
        %v2140 = vsel %vm207, %v2128, %v2130
        %v2141 = vsel %vm207, %v2136, %v2128
        %v2142 = vmul.f32 %v512, %v2140
        %v2143 = vmul.f32 %v512, %v2139
        %v2144 = vmul.f32 %v512, %v2138
        %v2145 = vmul.f32 %v512, %v2137
        %v2146 = vadd.f32 %v2123, %v2142
        %v2147 = vadd.f32 %v2124, %v2143
        %v2148 = vadd.f32 %v2125, %v2144
        %v2149 = vadd.f32 %v2126, %v2145
        %2150 = vrot.lane.b32.xlu0 %v2140, 127
        %v2151 = vpop.permute.xlu0 %2150
        %2152 = vrot.lane.b32.xlu0 %v2139, 127
        %v2153 = vpop.permute.xlu0 %2152
        %2154 = vrot.lane.b32.xlu0 %v2138, 127
        %v2155 = vpop.permute.xlu0 %2154
        %2156 = vrot.lane.b32.xlu0 %v2137, 127
        %v2157 = vpop.permute.xlu0 %2156
        %2158 = vrot.lane.b32.xlu0 %v2141, 127
        %v2159 = vpop.permute.xlu0 %2158
        %v2160 = vsel %vm207, %v2157, %v2159
        %v2161 = vsel %vm207, %v2155, %v2157
        %v2162 = vsel %vm207, %v2153, %v2155
        %v2163 = vsel %vm207, %v2151, %v2153
        %v2164 = vsel %vm207, %v2159, %v2151
        %v2165 = vmul.f32 %v539, %v2163
        %v2166 = vmul.f32 %v539, %v2162
        %v2167 = vmul.f32 %v539, %v2161
        %v2168 = vmul.f32 %v539, %v2160
        %v2169 = vadd.f32 %v2146, %v2165
        %v2170 = vadd.f32 %v2147, %v2166
        %v2171 = vadd.f32 %v2148, %v2167
        %v2172 = vadd.f32 %v2149, %v2168
        %2173 = vrot.lane.b32.xlu0 %v2163, 127
        %v2174 = vpop.permute.xlu0 %2173
        %2175 = vrot.lane.b32.xlu0 %v2162, 127
        %v2176 = vpop.permute.xlu0 %2175
        %2177 = vrot.lane.b32.xlu0 %v2161, 127
        %v2178 = vpop.permute.xlu0 %2177
        %2179 = vrot.lane.b32.xlu0 %v2160, 127
        %v2180 = vpop.permute.xlu0 %2179
        %2181 = vrot.lane.b32.xlu0 %v2164, 127
        %v2182 = vpop.permute.xlu0 %2181
        %v2183 = vsel %vm207, %v2180, %v2182
        %v2184 = vsel %vm207, %v2178, %v2180
        %v2185 = vsel %vm207, %v2176, %v2178
        %v2186 = vsel %vm207, %v2174, %v2176
        %v2187 = vsel %vm207, %v2182, %v2174
        %v2188 = vmul.f32 %v566, %v2186
        %v2189 = vmul.f32 %v566, %v2185
        %v2190 = vmul.f32 %v566, %v2184
        %v2191 = vmul.f32 %v566, %v2183
        %v2192 = vadd.f32 %v2169, %v2188
        %v2193 = vadd.f32 %v2170, %v2189
        %v2194 = vadd.f32 %v2171, %v2190
        %v2195 = vadd.f32 %v2172, %v2191
        %2196 = vrot.lane.b32.xlu0 %v2186, 127
        %v2197 = vpop.permute.xlu0 %2196
        %2198 = vrot.lane.b32.xlu0 %v2185, 127
        %v2199 = vpop.permute.xlu0 %2198
        %2200 = vrot.lane.b32.xlu0 %v2184, 127
        %v2201 = vpop.permute.xlu0 %2200
        %2202 = vrot.lane.b32.xlu0 %v2183, 127
        %v2203 = vpop.permute.xlu0 %2202
        %2204 = vrot.lane.b32.xlu0 %v2187, 127
        %v2205 = vpop.permute.xlu0 %2204
        %v2206 = vsel %vm207, %v2203, %v2205
        %v2207 = vsel %vm207, %v2201, %v2203
        %v2208 = vsel %vm207, %v2199, %v2201
        %v2209 = vsel %vm207, %v2197, %v2199
        %v2210 = vsel %vm207, %v2205, %v2197
        %v2211 = vmul.f32 %v593, %v2209
        %v2212 = vmul.f32 %v593, %v2208
        %v2213 = vmul.f32 %v593, %v2207
        %v2214 = vmul.f32 %v593, %v2206
        %v2215 = vadd.f32 %v2192, %v2211
        %v2216 = vadd.f32 %v2193, %v2212
        %v2217 = vadd.f32 %v2194, %v2213
        %v2218 = vadd.f32 %v2195, %v2214
        %2219 = vrot.lane.b32.xlu0 %v2209, 127
        %v2220 = vpop.permute.xlu0 %2219
        %2221 = vrot.lane.b32.xlu0 %v2208, 127
        %v2222 = vpop.permute.xlu0 %2221
        %2223 = vrot.lane.b32.xlu0 %v2207, 127
        %v2224 = vpop.permute.xlu0 %2223
        %2225 = vrot.lane.b32.xlu0 %v2206, 127
        %v2226 = vpop.permute.xlu0 %2225
        %2227 = vrot.lane.b32.xlu0 %v2210, 127
        %v2228 = vpop.permute.xlu0 %2227
        %v2229 = vsel %vm207, %v2226, %v2228
        %v2230 = vsel %vm207, %v2224, %v2226
        %v2231 = vsel %vm207, %v2222, %v2224
        %v2232 = vsel %vm207, %v2220, %v2222
        %v2233 = vsel %vm207, %v2228, %v2220
        %v2234 = vmul.f32 %v620, %v2232
        %v2235 = vmul.f32 %v620, %v2231
        %v2236 = vmul.f32 %v620, %v2230
        %v2237 = vmul.f32 %v620, %v2229
        %v2238 = vadd.f32 %v2215, %v2234
        %v2239 = vadd.f32 %v2216, %v2235
        %v2240 = vadd.f32 %v2217, %v2236
        %v2241 = vadd.f32 %v2218, %v2237
        %2242 = vrot.lane.b32.xlu0 %v2232, 127
        %v2243 = vpop.permute.xlu0 %2242
        %2244 = vrot.lane.b32.xlu0 %v2231, 127
        %v2245 = vpop.permute.xlu0 %2244
        %2246 = vrot.lane.b32.xlu0 %v2230, 127
        %v2247 = vpop.permute.xlu0 %2246
        %2248 = vrot.lane.b32.xlu0 %v2229, 127
        %v2249 = vpop.permute.xlu0 %2248
        %2250 = vrot.lane.b32.xlu0 %v2233, 127
        %v2251 = vpop.permute.xlu0 %2250
        %v2252 = vsel %vm207, %v2249, %v2251
        %v2253 = vsel %vm207, %v2247, %v2249
        %v2254 = vsel %vm207, %v2245, %v2247
        %v2255 = vsel %vm207, %v2243, %v2245
        %v2256 = vsel %vm207, %v2251, %v2243
        %v2257 = vmul.f32 %v647, %v2255
        %v2258 = vmul.f32 %v647, %v2254
        %v2259 = vmul.f32 %v647, %v2253
        %v2260 = vmul.f32 %v647, %v2252
        %v2261 = vadd.f32 %v2238, %v2257
        %v2262 = vadd.f32 %v2239, %v2258
        %v2263 = vadd.f32 %v2240, %v2259
        %v2264 = vadd.f32 %v2241, %v2260
        %2265 = vrot.lane.b32.xlu0 %v2255, 127
        %v2266 = vpop.permute.xlu0 %2265
        %2267 = vrot.lane.b32.xlu0 %v2254, 127
        %v2268 = vpop.permute.xlu0 %2267
        %2269 = vrot.lane.b32.xlu0 %v2253, 127
        %v2270 = vpop.permute.xlu0 %2269
        %2271 = vrot.lane.b32.xlu0 %v2252, 127
        %v2272 = vpop.permute.xlu0 %2271
        %2273 = vrot.lane.b32.xlu0 %v2256, 127
        %v2274 = vpop.permute.xlu0 %2273
        %v2275 = vsel %vm207, %v2272, %v2274
        %v2276 = vsel %vm207, %v2270, %v2272
        %v2277 = vsel %vm207, %v2268, %v2270
        %v2278 = vsel %vm207, %v2266, %v2268
        %v2279 = vsel %vm207, %v2274, %v2266
        %v2280 = vmul.f32 %v674, %v2278
        %v2281 = vmul.f32 %v674, %v2277
        %v2282 = vmul.f32 %v674, %v2276
        %v2283 = vmul.f32 %v674, %v2275
        %v2284 = vadd.f32 %v2261, %v2280
        %v2285 = vadd.f32 %v2262, %v2281
        %v2286 = vadd.f32 %v2263, %v2282
        %v2287 = vadd.f32 %v2264, %v2283
        %2288 = vrot.lane.b32.xlu0 %v2278, 127
        %v2289 = vpop.permute.xlu0 %2288
        %2290 = vrot.lane.b32.xlu0 %v2277, 127
        %v2291 = vpop.permute.xlu0 %2290
        %2292 = vrot.lane.b32.xlu0 %v2276, 127
        %v2293 = vpop.permute.xlu0 %2292
        %2294 = vrot.lane.b32.xlu0 %v2275, 127
        %v2295 = vpop.permute.xlu0 %2294
        %2296 = vrot.lane.b32.xlu0 %v2279, 127
        %v2297 = vpop.permute.xlu0 %2296
        %v2298 = vsel %vm207, %v2295, %v2297
        %v2299 = vsel %vm207, %v2293, %v2295
        %v2300 = vsel %vm207, %v2291, %v2293
        %v2301 = vsel %vm207, %v2289, %v2291
        %v2302 = vsel %vm207, %v2297, %v2289
        %v2303 = vmul.f32 %v701, %v2301
        %v2304 = vmul.f32 %v701, %v2300
        %v2305 = vmul.f32 %v701, %v2299
        %v2306 = vmul.f32 %v701, %v2298
        %v2307 = vadd.f32 %v2284, %v2303
        %v2308 = vadd.f32 %v2285, %v2304
        %v2309 = vadd.f32 %v2286, %v2305
        %v2310 = vadd.f32 %v2287, %v2306
        %2311 = vrot.lane.b32.xlu0 %v2301, 127
        %v2312 = vpop.permute.xlu0 %2311
        %2313 = vrot.lane.b32.xlu0 %v2300, 127
        %v2314 = vpop.permute.xlu0 %2313
        %2315 = vrot.lane.b32.xlu0 %v2299, 127
        %v2316 = vpop.permute.xlu0 %2315
        %2317 = vrot.lane.b32.xlu0 %v2298, 127
        %v2318 = vpop.permute.xlu0 %2317
        %2319 = vrot.lane.b32.xlu0 %v2302, 127
        %v2320 = vpop.permute.xlu0 %2319
        %v2321 = vsel %vm207, %v2318, %v2320
        %v2322 = vsel %vm207, %v2316, %v2318
        %v2323 = vsel %vm207, %v2314, %v2316
        %v2324 = vsel %vm207, %v2312, %v2314
        %v2325 = vsel %vm207, %v2320, %v2312
        %v2326 = vmul.f32 %v728, %v2324
        %v2327 = vmul.f32 %v728, %v2323
        %v2328 = vmul.f32 %v728, %v2322
        %v2329 = vmul.f32 %v728, %v2321
        %v2330 = vadd.f32 %v2307, %v2326
        %v2331 = vadd.f32 %v2308, %v2327
        %v2332 = vadd.f32 %v2309, %v2328
        %v2333 = vadd.f32 %v2310, %v2329
        %2334 = vrot.lane.b32.xlu0 %v2324, 127
        %v2335 = vpop.permute.xlu0 %2334
        %2336 = vrot.lane.b32.xlu0 %v2323, 127
        %v2337 = vpop.permute.xlu0 %2336
        %2338 = vrot.lane.b32.xlu0 %v2322, 127
        %v2339 = vpop.permute.xlu0 %2338
        %2340 = vrot.lane.b32.xlu0 %v2321, 127
        %v2341 = vpop.permute.xlu0 %2340
        %2342 = vrot.lane.b32.xlu0 %v2325, 127
        %v2343 = vpop.permute.xlu0 %2342
        %v2344 = vsel %vm207, %v2341, %v2343
        %v2345 = vsel %vm207, %v2339, %v2341
        %v2346 = vsel %vm207, %v2337, %v2339
        %v2347 = vsel %vm207, %v2335, %v2337
        %v2348 = vsel %vm207, %v2343, %v2335
        %v2349 = vmul.f32 %v755, %v2347
        %v2350 = vmul.f32 %v755, %v2346
        %v2351 = vmul.f32 %v755, %v2345
        %v2352 = vmul.f32 %v755, %v2344
        %v2353 = vadd.f32 %v2330, %v2349
        %v2354 = vadd.f32 %v2331, %v2350
        %v2355 = vadd.f32 %v2332, %v2351
        %v2356 = vadd.f32 %v2333, %v2352
        %2357 = vrot.lane.b32.xlu0 %v2347, 127
        %v2358 = vpop.permute.xlu0 %2357
        %2359 = vrot.lane.b32.xlu0 %v2346, 127
        %v2360 = vpop.permute.xlu0 %2359
        %2361 = vrot.lane.b32.xlu0 %v2345, 127
        %v2362 = vpop.permute.xlu0 %2361
        %2363 = vrot.lane.b32.xlu0 %v2344, 127
        %v2364 = vpop.permute.xlu0 %2363
        %2365 = vrot.lane.b32.xlu0 %v2348, 127
        %v2366 = vpop.permute.xlu0 %2365
        %v2367 = vsel %vm207, %v2364, %v2366
        %v2368 = vsel %vm207, %v2362, %v2364
        %v2369 = vsel %vm207, %v2360, %v2362
        %v2370 = vsel %vm207, %v2358, %v2360
        %v2371 = vsel %vm207, %v2366, %v2358
        %v2372 = vmul.f32 %v782, %v2370
        %v2373 = vmul.f32 %v782, %v2369
        %v2374 = vmul.f32 %v782, %v2368
        %v2375 = vmul.f32 %v782, %v2367
        %v2376 = vadd.f32 %v2353, %v2372
        %v2377 = vadd.f32 %v2354, %v2373
        %v2378 = vadd.f32 %v2355, %v2374
        %v2379 = vadd.f32 %v2356, %v2375
        %2380 = vrot.lane.b32.xlu0 %v2370, 127
        %v2381 = vpop.permute.xlu0 %2380
        %2382 = vrot.lane.b32.xlu0 %v2369, 127
        %v2383 = vpop.permute.xlu0 %2382
        %2384 = vrot.lane.b32.xlu0 %v2368, 127
        %v2385 = vpop.permute.xlu0 %2384
        %2386 = vrot.lane.b32.xlu0 %v2367, 127
        %v2387 = vpop.permute.xlu0 %2386
        %2388 = vrot.lane.b32.xlu0 %v2371, 127
        %v2389 = vpop.permute.xlu0 %2388
        %v2390 = vsel %vm207, %v2387, %v2389
        %v2391 = vsel %vm207, %v2385, %v2387
        %v2392 = vsel %vm207, %v2383, %v2385
        %v2393 = vsel %vm207, %v2381, %v2383
        %v2394 = vsel %vm207, %v2389, %v2381
        %v2395 = vmul.f32 %v809, %v2393
        %v2396 = vmul.f32 %v809, %v2392
        %v2397 = vmul.f32 %v809, %v2391
        %v2398 = vmul.f32 %v809, %v2390
        %v2399 = vadd.f32 %v2376, %v2395
        %v2400 = vadd.f32 %v2377, %v2396
        %v2401 = vadd.f32 %v2378, %v2397
        %v2402 = vadd.f32 %v2379, %v2398
        %2403 = vrot.lane.b32.xlu0 %v2393, 127
        %v2404 = vpop.permute.xlu0 %2403
        %2405 = vrot.lane.b32.xlu0 %v2392, 127
        %v2406 = vpop.permute.xlu0 %2405
        %2407 = vrot.lane.b32.xlu0 %v2391, 127
        %v2408 = vpop.permute.xlu0 %2407
        %2409 = vrot.lane.b32.xlu0 %v2390, 127
        %v2410 = vpop.permute.xlu0 %2409
        %2411 = vrot.lane.b32.xlu0 %v2394, 127
        %v2412 = vpop.permute.xlu0 %2411
        %v2413 = vsel %vm207, %v2410, %v2412
        %v2414 = vsel %vm207, %v2408, %v2410
        %v2415 = vsel %vm207, %v2406, %v2408
        %v2416 = vsel %vm207, %v2404, %v2406
        %v2417 = vsel %vm207, %v2412, %v2404
        %v2418 = vmul.f32 %v836, %v2416
        %v2419 = vmul.f32 %v836, %v2415
        %v2420 = vmul.f32 %v836, %v2414
        %v2421 = vmul.f32 %v836, %v2413
        %v2422 = vadd.f32 %v2399, %v2418
        %v2423 = vadd.f32 %v2400, %v2419
        %v2424 = vadd.f32 %v2401, %v2420
        %v2425 = vadd.f32 %v2402, %v2421
        %2426 = vrot.lane.b32.xlu0 %v2416, 127
        %v2427 = vpop.permute.xlu0 %2426
        %2428 = vrot.lane.b32.xlu0 %v2415, 127
        %v2429 = vpop.permute.xlu0 %2428
        %2430 = vrot.lane.b32.xlu0 %v2414, 127
        %v2431 = vpop.permute.xlu0 %2430
        %2432 = vrot.lane.b32.xlu0 %v2413, 127
        %v2433 = vpop.permute.xlu0 %2432
        %2434 = vrot.lane.b32.xlu0 %v2417, 127
        %v2435 = vpop.permute.xlu0 %2434
        %v2436 = vsel %vm207, %v2433, %v2435
        %v2437 = vsel %vm207, %v2431, %v2433
        %v2438 = vsel %vm207, %v2429, %v2431
        %v2439 = vsel %vm207, %v2427, %v2429
        %v2440 = vsel %vm207, %v2435, %v2427
        %v2441 = vmul.f32 %v863, %v2439
        %v2442 = vmul.f32 %v863, %v2438
        %v2443 = vmul.f32 %v863, %v2437
        %v2444 = vmul.f32 %v863, %v2436
        %v2445 = vadd.f32 %v2422, %v2441
        %v2446 = vadd.f32 %v2423, %v2442
        %v2447 = vadd.f32 %v2424, %v2443
        %v2448 = vadd.f32 %v2425, %v2444
        %2449 = vrot.lane.b32.xlu0 %v2439, 127
        %v2450 = vpop.permute.xlu0 %2449
        %2451 = vrot.lane.b32.xlu0 %v2438, 127
        %v2452 = vpop.permute.xlu0 %2451
        %2453 = vrot.lane.b32.xlu0 %v2437, 127
        %v2454 = vpop.permute.xlu0 %2453
        %2455 = vrot.lane.b32.xlu0 %v2436, 127
        %v2456 = vpop.permute.xlu0 %2455
        %2457 = vrot.lane.b32.xlu0 %v2440, 127
        %v2458 = vpop.permute.xlu0 %2457
        %v2459 = vsel %vm207, %v2456, %v2458
        %v2460 = vsel %vm207, %v2454, %v2456
        %v2461 = vsel %vm207, %v2452, %v2454
        %v2462 = vsel %vm207, %v2450, %v2452
        %v2463 = vsel %vm207, %v2458, %v2450
        %v2464 = vmul.f32 %v890, %v2462
        %v2465 = vmul.f32 %v890, %v2461
        %v2466 = vmul.f32 %v890, %v2460
        %v2467 = vmul.f32 %v890, %v2459
        %v2468 = vadd.f32 %v2445, %v2464
        %v2469 = vadd.f32 %v2446, %v2465
        %v2470 = vadd.f32 %v2447, %v2466
        %v2471 = vadd.f32 %v2448, %v2467
        %2472 = vrot.lane.b32.xlu0 %v2462, 127
        %v2473 = vpop.permute.xlu0 %2472
        %2474 = vrot.lane.b32.xlu0 %v2461, 127
        %v2475 = vpop.permute.xlu0 %2474
        %2476 = vrot.lane.b32.xlu0 %v2460, 127
        %v2477 = vpop.permute.xlu0 %2476
        %2478 = vrot.lane.b32.xlu0 %v2459, 127
        %v2479 = vpop.permute.xlu0 %2478
        %2480 = vrot.lane.b32.xlu0 %v2463, 127
        %v2481 = vpop.permute.xlu0 %2480
        %v2482 = vsel %vm207, %v2479, %v2481
        %v2483 = vsel %vm207, %v2477, %v2479
        %v2484 = vsel %vm207, %v2475, %v2477
        %v2485 = vsel %vm207, %v2473, %v2475
        %v2486 = vsel %vm207, %v2481, %v2473
        %v2487 = vmul.f32 %v917, %v2485
        %v2488 = vmul.f32 %v917, %v2484
        %v2489 = vmul.f32 %v917, %v2483
        %v2490 = vmul.f32 %v917, %v2482
        %v2491 = vadd.f32 %v2468, %v2487
        %v2492 = vadd.f32 %v2469, %v2488
        %v2493 = vadd.f32 %v2470, %v2489
        %v2494 = vadd.f32 %v2471, %v2490
        %2495 = vrot.lane.b32.xlu0 %v2485, 127
        %v2496 = vpop.permute.xlu0 %2495
        %2497 = vrot.lane.b32.xlu0 %v2484, 127
        %v2498 = vpop.permute.xlu0 %2497
        %2499 = vrot.lane.b32.xlu0 %v2483, 127
        %v2500 = vpop.permute.xlu0 %2499
        %2501 = vrot.lane.b32.xlu0 %v2482, 127
        %v2502 = vpop.permute.xlu0 %2501
        %2503 = vrot.lane.b32.xlu0 %v2486, 127
        %v2504 = vpop.permute.xlu0 %2503
        %v2505 = vsel %vm207, %v2502, %v2504
        %v2506 = vsel %vm207, %v2500, %v2502
        %v2507 = vsel %vm207, %v2498, %v2500
        %v2508 = vsel %vm207, %v2496, %v2498
        %v2509 = vsel %vm207, %v2504, %v2496
        %v2510 = vmul.f32 %v944, %v2508
        %v2511 = vmul.f32 %v944, %v2507
        %v2512 = vmul.f32 %v944, %v2506
        %v2513 = vmul.f32 %v944, %v2505
        %v2514 = vadd.f32 %v2491, %v2510
        %v2515 = vadd.f32 %v2492, %v2511
        %v2516 = vadd.f32 %v2493, %v2512
        %v2517 = vadd.f32 %v2494, %v2513
        %2518 = vrot.lane.b32.xlu0 %v2508, 127
        %v2519 = vpop.permute.xlu0 %2518
        %2520 = vrot.lane.b32.xlu0 %v2507, 127
        %v2521 = vpop.permute.xlu0 %2520
        %2522 = vrot.lane.b32.xlu0 %v2506, 127
        %v2523 = vpop.permute.xlu0 %2522
        %2524 = vrot.lane.b32.xlu0 %v2505, 127
        %v2525 = vpop.permute.xlu0 %2524
        %2526 = vrot.lane.b32.xlu0 %v2509, 127
        %v2527 = vpop.permute.xlu0 %2526
        %v2528 = vsel %vm207, %v2525, %v2527
        %v2529 = vsel %vm207, %v2523, %v2525
        %v2530 = vsel %vm207, %v2521, %v2523
        %v2531 = vsel %vm207, %v2519, %v2521
        %v2532 = vsel %vm207, %v2527, %v2519
        %v2533 = vmul.f32 %v971, %v2531
        %v2534 = vmul.f32 %v971, %v2530
        %v2535 = vmul.f32 %v971, %v2529
        %v2536 = vmul.f32 %v971, %v2528
        %v2537 = vadd.f32 %v2514, %v2533
        %v2538 = vadd.f32 %v2515, %v2534
        %v2539 = vadd.f32 %v2516, %v2535
        %v2540 = vadd.f32 %v2517, %v2536
        %2541 = vrot.lane.b32.xlu0 %v2531, 127
        %v2542 = vpop.permute.xlu0 %2541
        %2543 = vrot.lane.b32.xlu0 %v2530, 127
        %v2544 = vpop.permute.xlu0 %2543
        %2545 = vrot.lane.b32.xlu0 %v2529, 127
        %v2546 = vpop.permute.xlu0 %2545
        %2547 = vrot.lane.b32.xlu0 %v2528, 127
        %v2548 = vpop.permute.xlu0 %2547
        %2549 = vrot.lane.b32.xlu0 %v2532, 127
        %v2550 = vpop.permute.xlu0 %2549
        %v2551 = vsel %vm207, %v2548, %v2550
        %v2552 = vsel %vm207, %v2546, %v2548
        %v2553 = vsel %vm207, %v2544, %v2546
        %v2554 = vsel %vm207, %v2542, %v2544
        %v2555 = vsel %vm207, %v2550, %v2542
        %v2556 = vmul.f32 %v998, %v2554
        %v2557 = vmul.f32 %v998, %v2553
        %v2558 = vmul.f32 %v998, %v2552
        %v2559 = vmul.f32 %v998, %v2551
        %v2560 = vadd.f32 %v2537, %v2556
        %v2561 = vadd.f32 %v2538, %v2557
        %v2562 = vadd.f32 %v2539, %v2558
        %v2563 = vadd.f32 %v2540, %v2559
        %2564 = vrot.lane.b32.xlu0 %v2554, 127
        %v2565 = vpop.permute.xlu0 %2564
        %2566 = vrot.lane.b32.xlu0 %v2553, 127
        %v2567 = vpop.permute.xlu0 %2566
        %2568 = vrot.lane.b32.xlu0 %v2552, 127
        %v2569 = vpop.permute.xlu0 %2568
        %2570 = vrot.lane.b32.xlu0 %v2551, 127
        %v2571 = vpop.permute.xlu0 %2570
        %2572 = vrot.lane.b32.xlu0 %v2555, 127
        %v2573 = vpop.permute.xlu0 %2572
        %v2574 = vsel %vm207, %v2571, %v2573
        %v2575 = vsel %vm207, %v2569, %v2571
        %v2576 = vsel %vm207, %v2567, %v2569
        %v2577 = vsel %vm207, %v2565, %v2567
        %v2578 = vsel %vm207, %v2573, %v2565
        %v2579 = vmul.f32 %v1025, %v2577
        %v2580 = vmul.f32 %v1025, %v2576
        %v2581 = vmul.f32 %v1025, %v2575
        %v2582 = vmul.f32 %v1025, %v2574
        %v2583 = vadd.f32 %v2560, %v2579
        %v2584 = vadd.f32 %v2561, %v2580
        %v2585 = vadd.f32 %v2562, %v2581
        %v2586 = vadd.f32 %v2563, %v2582
        %2587 = vrot.lane.b32.xlu0 %v2577, 127
        %v2588 = vpop.permute.xlu0 %2587
        %2589 = vrot.lane.b32.xlu0 %v2576, 127
        %v2590 = vpop.permute.xlu0 %2589
        %2591 = vrot.lane.b32.xlu0 %v2575, 127
        %v2592 = vpop.permute.xlu0 %2591
        %2593 = vrot.lane.b32.xlu0 %v2574, 127
        %v2594 = vpop.permute.xlu0 %2593
        %2595 = vrot.lane.b32.xlu0 %v2578, 127
        %v2596 = vpop.permute.xlu0 %2595
        %v2597 = vsel %vm207, %v2594, %v2596
        %v2598 = vsel %vm207, %v2592, %v2594
        %v2599 = vsel %vm207, %v2590, %v2592
        %v2600 = vsel %vm207, %v2588, %v2590
        %v2601 = vmul.f32 %v1051, %v2600
        %v2602 = vmul.f32 %v1051, %v2599
        %v2603 = vmul.f32 %v1051, %v2598
        %v2604 = vmul.f32 %v1051, %v2597
        %v2605 = vadd.f32 %v2583, %v2601
        %v2606 = vadd.f32 %v2584, %v2602
        %v2607 = vadd.f32 %v2585, %v2603
        %v2608 = vadd.f32 %v2586, %v2604
        %2609 = vst [vmem:[%s148 + $0x40] sm:$0xff] %v2605
        %2610 = vst [vmem:[%s148 + $0x48] sm:$0xff] %v2606
        %2611 = vst [vmem:[%s148 + $0x50] sm:$0xff] %v2607
        %2612 = vst [vmem:[%s148 + $0x58] sm:$0xff] %v2608
        %s2613 = sadd.s32 %s155, 1536
        %s2614 = sshra.s32 %s2613, 7
        %s2615 = sand.u32 %s2613, 127
        %s2616 = scalar_lea.vmem %s152, %s2614
        %v2617 = vld [vmem:[%s2616] sm:$0x1f]
        %v2619 = vlaneseq
        %v2620 = vshrl.u32 %v2619, 7
        %v2621 = vsub.s32 0, %v2620
        %v2622 = vrot.slane %v2617, %v2621
        %v2623 = vlaneseq
        %v2624 = vshrl.u32 %v2623, 7
        %v2625 = vsub.s32 1, %v2624
        %v2626 = vrot.slane %v2617, %v2625
        %v2627 = vlaneseq
        %v2628 = vshrl.u32 %v2627, 7
        %v2629 = vsub.s32 2, %v2628
        %v2630 = vrot.slane %v2617, %v2629
        %v2631 = vlaneseq
        %v2632 = vshrl.u32 %v2631, 7
        %v2633 = vsub.s32 3, %v2632
        %v2634 = vrot.slane %v2617, %v2633
        %v2635 = vlaneseq
        %v2636 = vshrl.u32 %v2635, 7
        %v2637 = vsub.s32 4, %v2636
        %v2638 = vrot.slane %v2617, %v2637
        %v2644 = vmul.f32 %v189, %v2622
        %v2645 = vmul.f32 %v189, %v2626
        %v2646 = vmul.f32 %v189, %v2630
        %v2647 = vmul.f32 %v189, %v2634
        %2648 = vrot.lane.b32.xlu0 %v2622, 127
        %v2649 = vpop.permute.xlu0 %2648
        %2650 = vrot.lane.b32.xlu0 %v2626, 127
        %v2651 = vpop.permute.xlu0 %2650
        %2652 = vrot.lane.b32.xlu0 %v2630, 127
        %v2653 = vpop.permute.xlu0 %2652
        %2654 = vrot.lane.b32.xlu0 %v2634, 127
        %v2655 = vpop.permute.xlu0 %2654
        %2656 = vrot.lane.b32.xlu0 %v2638, 127
        %v2657 = vpop.permute.xlu0 %2656
        %v2658 = vsel %vm207, %v2655, %v2657
        %v2659 = vsel %vm207, %v2653, %v2655
        %v2660 = vsel %vm207, %v2651, %v2653
        %v2661 = vsel %vm207, %v2649, %v2651
        %v2662 = vsel %vm207, %v2657, %v2649
        %v2663 = vmul.f32 %v215, %v2661
        %v2664 = vmul.f32 %v215, %v2660
        %v2665 = vmul.f32 %v215, %v2659
        %v2666 = vmul.f32 %v215, %v2658
        %v2667 = vadd.f32 %v2644, %v2663
        %v2668 = vadd.f32 %v2645, %v2664
        %v2669 = vadd.f32 %v2646, %v2665
        %v2670 = vadd.f32 %v2647, %v2666
        %2671 = vrot.lane.b32.xlu0 %v2661, 127
        %v2672 = vpop.permute.xlu0 %2671
        %2673 = vrot.lane.b32.xlu0 %v2660, 127
        %v2674 = vpop.permute.xlu0 %2673
        %2675 = vrot.lane.b32.xlu0 %v2659, 127
        %v2676 = vpop.permute.xlu0 %2675
        %2677 = vrot.lane.b32.xlu0 %v2658, 127
        %v2678 = vpop.permute.xlu0 %2677
        %2679 = vrot.lane.b32.xlu0 %v2662, 127
        %v2680 = vpop.permute.xlu0 %2679
        %v2681 = vsel %vm207, %v2678, %v2680
        %v2682 = vsel %vm207, %v2676, %v2678
        %v2683 = vsel %vm207, %v2674, %v2676
        %v2684 = vsel %vm207, %v2672, %v2674
        %v2685 = vsel %vm207, %v2680, %v2672
        %v2686 = vmul.f32 %v242, %v2684
        %v2687 = vmul.f32 %v242, %v2683
        %v2688 = vmul.f32 %v242, %v2682
        %v2689 = vmul.f32 %v242, %v2681
        %v2690 = vadd.f32 %v2667, %v2686
        %v2691 = vadd.f32 %v2668, %v2687
        %v2692 = vadd.f32 %v2669, %v2688
        %v2693 = vadd.f32 %v2670, %v2689
        %2694 = vrot.lane.b32.xlu0 %v2684, 127
        %v2695 = vpop.permute.xlu0 %2694
        %2696 = vrot.lane.b32.xlu0 %v2683, 127
        %v2697 = vpop.permute.xlu0 %2696
        %2698 = vrot.lane.b32.xlu0 %v2682, 127
        %v2699 = vpop.permute.xlu0 %2698
        %2700 = vrot.lane.b32.xlu0 %v2681, 127
        %v2701 = vpop.permute.xlu0 %2700
        %2702 = vrot.lane.b32.xlu0 %v2685, 127
        %v2703 = vpop.permute.xlu0 %2702
        %v2704 = vsel %vm207, %v2701, %v2703
        %v2705 = vsel %vm207, %v2699, %v2701
        %v2706 = vsel %vm207, %v2697, %v2699
        %v2707 = vsel %vm207, %v2695, %v2697
        %v2708 = vsel %vm207, %v2703, %v2695
        %v2709 = vmul.f32 %v269, %v2707
        %v2710 = vmul.f32 %v269, %v2706
        %v2711 = vmul.f32 %v269, %v2705
        %v2712 = vmul.f32 %v269, %v2704
        %v2713 = vadd.f32 %v2690, %v2709
        %v2714 = vadd.f32 %v2691, %v2710
        %v2715 = vadd.f32 %v2692, %v2711
        %v2716 = vadd.f32 %v2693, %v2712
        %2717 = vrot.lane.b32.xlu0 %v2707, 127
        %v2718 = vpop.permute.xlu0 %2717
        %2719 = vrot.lane.b32.xlu0 %v2706, 127
        %v2720 = vpop.permute.xlu0 %2719
        %2721 = vrot.lane.b32.xlu0 %v2705, 127
        %v2722 = vpop.permute.xlu0 %2721
        %2723 = vrot.lane.b32.xlu0 %v2704, 127
        %v2724 = vpop.permute.xlu0 %2723
        %2725 = vrot.lane.b32.xlu0 %v2708, 127
        %v2726 = vpop.permute.xlu0 %2725
        %v2727 = vsel %vm207, %v2724, %v2726
        %v2728 = vsel %vm207, %v2722, %v2724
        %v2729 = vsel %vm207, %v2720, %v2722
        %v2730 = vsel %vm207, %v2718, %v2720
        %v2731 = vsel %vm207, %v2726, %v2718
        %v2732 = vmul.f32 %v296, %v2730
        %v2733 = vmul.f32 %v296, %v2729
        %v2734 = vmul.f32 %v296, %v2728
        %v2735 = vmul.f32 %v296, %v2727
        %v2736 = vadd.f32 %v2713, %v2732
        %v2737 = vadd.f32 %v2714, %v2733
        %v2738 = vadd.f32 %v2715, %v2734
        %v2739 = vadd.f32 %v2716, %v2735
        %2740 = vrot.lane.b32.xlu0 %v2730, 127
        %v2741 = vpop.permute.xlu0 %2740
        %2742 = vrot.lane.b32.xlu0 %v2729, 127
        %v2743 = vpop.permute.xlu0 %2742
        %2744 = vrot.lane.b32.xlu0 %v2728, 127
        %v2745 = vpop.permute.xlu0 %2744
        %2746 = vrot.lane.b32.xlu0 %v2727, 127
        %v2747 = vpop.permute.xlu0 %2746
        %2748 = vrot.lane.b32.xlu0 %v2731, 127
        %v2749 = vpop.permute.xlu0 %2748
        %v2750 = vsel %vm207, %v2747, %v2749
        %v2751 = vsel %vm207, %v2745, %v2747
        %v2752 = vsel %vm207, %v2743, %v2745
        %v2753 = vsel %vm207, %v2741, %v2743
        %v2754 = vsel %vm207, %v2749, %v2741
        %v2755 = vmul.f32 %v323, %v2753
        %v2756 = vmul.f32 %v323, %v2752
        %v2757 = vmul.f32 %v323, %v2751
        %v2758 = vmul.f32 %v323, %v2750
        %v2759 = vadd.f32 %v2736, %v2755
        %v2760 = vadd.f32 %v2737, %v2756
        %v2761 = vadd.f32 %v2738, %v2757
        %v2762 = vadd.f32 %v2739, %v2758
        %2763 = vrot.lane.b32.xlu0 %v2753, 127
        %v2764 = vpop.permute.xlu0 %2763
        %2765 = vrot.lane.b32.xlu0 %v2752, 127
        %v2766 = vpop.permute.xlu0 %2765
        %2767 = vrot.lane.b32.xlu0 %v2751, 127
        %v2768 = vpop.permute.xlu0 %2767
        %2769 = vrot.lane.b32.xlu0 %v2750, 127
        %v2770 = vpop.permute.xlu0 %2769
        %2771 = vrot.lane.b32.xlu0 %v2754, 127
        %v2772 = vpop.permute.xlu0 %2771
        %v2773 = vsel %vm207, %v2770, %v2772
        %v2774 = vsel %vm207, %v2768, %v2770
        %v2775 = vsel %vm207, %v2766, %v2768
        %v2776 = vsel %vm207, %v2764, %v2766
        %v2777 = vsel %vm207, %v2772, %v2764
        %v2778 = vmul.f32 %v350, %v2776
        %v2779 = vmul.f32 %v350, %v2775
        %v2780 = vmul.f32 %v350, %v2774
        %v2781 = vmul.f32 %v350, %v2773
        %v2782 = vadd.f32 %v2759, %v2778
        %v2783 = vadd.f32 %v2760, %v2779
        %v2784 = vadd.f32 %v2761, %v2780
        %v2785 = vadd.f32 %v2762, %v2781
        %2786 = vrot.lane.b32.xlu0 %v2776, 127
        %v2787 = vpop.permute.xlu0 %2786
        %2788 = vrot.lane.b32.xlu0 %v2775, 127
        %v2789 = vpop.permute.xlu0 %2788
        %2790 = vrot.lane.b32.xlu0 %v2774, 127
        %v2791 = vpop.permute.xlu0 %2790
        %2792 = vrot.lane.b32.xlu0 %v2773, 127
        %v2793 = vpop.permute.xlu0 %2792
        %2794 = vrot.lane.b32.xlu0 %v2777, 127
        %v2795 = vpop.permute.xlu0 %2794
        %v2796 = vsel %vm207, %v2793, %v2795
        %v2797 = vsel %vm207, %v2791, %v2793
        %v2798 = vsel %vm207, %v2789, %v2791
        %v2799 = vsel %vm207, %v2787, %v2789
        %v2800 = vsel %vm207, %v2795, %v2787
        %v2801 = vmul.f32 %v377, %v2799
        %v2802 = vmul.f32 %v377, %v2798
        %v2803 = vmul.f32 %v377, %v2797
        %v2804 = vmul.f32 %v377, %v2796
        %v2805 = vadd.f32 %v2782, %v2801
        %v2806 = vadd.f32 %v2783, %v2802
        %v2807 = vadd.f32 %v2784, %v2803
        %v2808 = vadd.f32 %v2785, %v2804
        %2809 = vrot.lane.b32.xlu0 %v2799, 127
        %v2810 = vpop.permute.xlu0 %2809
        %2811 = vrot.lane.b32.xlu0 %v2798, 127
        %v2812 = vpop.permute.xlu0 %2811
        %2813 = vrot.lane.b32.xlu0 %v2797, 127
        %v2814 = vpop.permute.xlu0 %2813
        %2815 = vrot.lane.b32.xlu0 %v2796, 127
        %v2816 = vpop.permute.xlu0 %2815
        %2817 = vrot.lane.b32.xlu0 %v2800, 127
        %v2818 = vpop.permute.xlu0 %2817
        %v2819 = vsel %vm207, %v2816, %v2818
        %v2820 = vsel %vm207, %v2814, %v2816
        %v2821 = vsel %vm207, %v2812, %v2814
        %v2822 = vsel %vm207, %v2810, %v2812
        %v2823 = vsel %vm207, %v2818, %v2810
        %v2824 = vmul.f32 %v404, %v2822
        %v2825 = vmul.f32 %v404, %v2821
        %v2826 = vmul.f32 %v404, %v2820
        %v2827 = vmul.f32 %v404, %v2819
        %v2828 = vadd.f32 %v2805, %v2824
        %v2829 = vadd.f32 %v2806, %v2825
        %v2830 = vadd.f32 %v2807, %v2826
        %v2831 = vadd.f32 %v2808, %v2827
        %2832 = vrot.lane.b32.xlu0 %v2822, 127
        %v2833 = vpop.permute.xlu0 %2832
        %2834 = vrot.lane.b32.xlu0 %v2821, 127
        %v2835 = vpop.permute.xlu0 %2834
        %2836 = vrot.lane.b32.xlu0 %v2820, 127
        %v2837 = vpop.permute.xlu0 %2836
        %2838 = vrot.lane.b32.xlu0 %v2819, 127
        %v2839 = vpop.permute.xlu0 %2838
        %2840 = vrot.lane.b32.xlu0 %v2823, 127
        %v2841 = vpop.permute.xlu0 %2840
        %v2842 = vsel %vm207, %v2839, %v2841
        %v2843 = vsel %vm207, %v2837, %v2839
        %v2844 = vsel %vm207, %v2835, %v2837
        %v2845 = vsel %vm207, %v2833, %v2835
        %v2846 = vsel %vm207, %v2841, %v2833
        %v2847 = vmul.f32 %v431, %v2845
        %v2848 = vmul.f32 %v431, %v2844
        %v2849 = vmul.f32 %v431, %v2843
        %v2850 = vmul.f32 %v431, %v2842
        %v2851 = vadd.f32 %v2828, %v2847
        %v2852 = vadd.f32 %v2829, %v2848
        %v2853 = vadd.f32 %v2830, %v2849
        %v2854 = vadd.f32 %v2831, %v2850
        %2855 = vrot.lane.b32.xlu0 %v2845, 127
        %v2856 = vpop.permute.xlu0 %2855
        %2857 = vrot.lane.b32.xlu0 %v2844, 127
        %v2858 = vpop.permute.xlu0 %2857
        %2859 = vrot.lane.b32.xlu0 %v2843, 127
        %v2860 = vpop.permute.xlu0 %2859
        %2861 = vrot.lane.b32.xlu0 %v2842, 127
        %v2862 = vpop.permute.xlu0 %2861
        %2863 = vrot.lane.b32.xlu0 %v2846, 127
        %v2864 = vpop.permute.xlu0 %2863
        %v2865 = vsel %vm207, %v2862, %v2864
        %v2866 = vsel %vm207, %v2860, %v2862
        %v2867 = vsel %vm207, %v2858, %v2860
        %v2868 = vsel %vm207, %v2856, %v2858
        %v2869 = vsel %vm207, %v2864, %v2856
        %v2870 = vmul.f32 %v458, %v2868
        %v2871 = vmul.f32 %v458, %v2867
        %v2872 = vmul.f32 %v458, %v2866
        %v2873 = vmul.f32 %v458, %v2865
        %v2874 = vadd.f32 %v2851, %v2870
        %v2875 = vadd.f32 %v2852, %v2871
        %v2876 = vadd.f32 %v2853, %v2872
        %v2877 = vadd.f32 %v2854, %v2873
        %2878 = vrot.lane.b32.xlu0 %v2868, 127
        %v2879 = vpop.permute.xlu0 %2878
        %2880 = vrot.lane.b32.xlu0 %v2867, 127
        %v2881 = vpop.permute.xlu0 %2880
        %2882 = vrot.lane.b32.xlu0 %v2866, 127
        %v2883 = vpop.permute.xlu0 %2882
        %2884 = vrot.lane.b32.xlu0 %v2865, 127
        %v2885 = vpop.permute.xlu0 %2884
        %2886 = vrot.lane.b32.xlu0 %v2869, 127
        %v2887 = vpop.permute.xlu0 %2886
        %v2888 = vsel %vm207, %v2885, %v2887
        %v2889 = vsel %vm207, %v2883, %v2885
        %v2890 = vsel %vm207, %v2881, %v2883
        %v2891 = vsel %vm207, %v2879, %v2881
        %v2892 = vsel %vm207, %v2887, %v2879
        %v2893 = vmul.f32 %v485, %v2891
        %v2894 = vmul.f32 %v485, %v2890
        %v2895 = vmul.f32 %v485, %v2889
        %v2896 = vmul.f32 %v485, %v2888
        %v2897 = vadd.f32 %v2874, %v2893
        %v2898 = vadd.f32 %v2875, %v2894
        %v2899 = vadd.f32 %v2876, %v2895
        %v2900 = vadd.f32 %v2877, %v2896
        %2901 = vrot.lane.b32.xlu0 %v2891, 127
        %v2902 = vpop.permute.xlu0 %2901
        %2903 = vrot.lane.b32.xlu0 %v2890, 127
        %v2904 = vpop.permute.xlu0 %2903
        %2905 = vrot.lane.b32.xlu0 %v2889, 127
        %v2906 = vpop.permute.xlu0 %2905
        %2907 = vrot.lane.b32.xlu0 %v2888, 127
        %v2908 = vpop.permute.xlu0 %2907
        %2909 = vrot.lane.b32.xlu0 %v2892, 127
        %v2910 = vpop.permute.xlu0 %2909
        %v2911 = vsel %vm207, %v2908, %v2910
        %v2912 = vsel %vm207, %v2906, %v2908
        %v2913 = vsel %vm207, %v2904, %v2906
        %v2914 = vsel %vm207, %v2902, %v2904
        %v2915 = vsel %vm207, %v2910, %v2902
        %v2916 = vmul.f32 %v512, %v2914
        %v2917 = vmul.f32 %v512, %v2913
        %v2918 = vmul.f32 %v512, %v2912
        %v2919 = vmul.f32 %v512, %v2911
        %v2920 = vadd.f32 %v2897, %v2916
        %v2921 = vadd.f32 %v2898, %v2917
        %v2922 = vadd.f32 %v2899, %v2918
        %v2923 = vadd.f32 %v2900, %v2919
        %2924 = vrot.lane.b32.xlu0 %v2914, 127
        %v2925 = vpop.permute.xlu0 %2924
        %2926 = vrot.lane.b32.xlu0 %v2913, 127
        %v2927 = vpop.permute.xlu0 %2926
        %2928 = vrot.lane.b32.xlu0 %v2912, 127
        %v2929 = vpop.permute.xlu0 %2928
        %2930 = vrot.lane.b32.xlu0 %v2911, 127
        %v2931 = vpop.permute.xlu0 %2930
        %2932 = vrot.lane.b32.xlu0 %v2915, 127
        %v2933 = vpop.permute.xlu0 %2932
        %v2934 = vsel %vm207, %v2931, %v2933
        %v2935 = vsel %vm207, %v2929, %v2931
        %v2936 = vsel %vm207, %v2927, %v2929
        %v2937 = vsel %vm207, %v2925, %v2927
        %v2938 = vsel %vm207, %v2933, %v2925
        %v2939 = vmul.f32 %v539, %v2937
        %v2940 = vmul.f32 %v539, %v2936
        %v2941 = vmul.f32 %v539, %v2935
        %v2942 = vmul.f32 %v539, %v2934
        %v2943 = vadd.f32 %v2920, %v2939
        %v2944 = vadd.f32 %v2921, %v2940
        %v2945 = vadd.f32 %v2922, %v2941
        %v2946 = vadd.f32 %v2923, %v2942
        %2947 = vrot.lane.b32.xlu0 %v2937, 127
        %v2948 = vpop.permute.xlu0 %2947
        %2949 = vrot.lane.b32.xlu0 %v2936, 127
        %v2950 = vpop.permute.xlu0 %2949
        %2951 = vrot.lane.b32.xlu0 %v2935, 127
        %v2952 = vpop.permute.xlu0 %2951
        %2953 = vrot.lane.b32.xlu0 %v2934, 127
        %v2954 = vpop.permute.xlu0 %2953
        %2955 = vrot.lane.b32.xlu0 %v2938, 127
        %v2956 = vpop.permute.xlu0 %2955
        %v2957 = vsel %vm207, %v2954, %v2956
        %v2958 = vsel %vm207, %v2952, %v2954
        %v2959 = vsel %vm207, %v2950, %v2952
        %v2960 = vsel %vm207, %v2948, %v2950
        %v2961 = vsel %vm207, %v2956, %v2948
        %v2962 = vmul.f32 %v566, %v2960
        %v2963 = vmul.f32 %v566, %v2959
        %v2964 = vmul.f32 %v566, %v2958
        %v2965 = vmul.f32 %v566, %v2957
        %v2966 = vadd.f32 %v2943, %v2962
        %v2967 = vadd.f32 %v2944, %v2963
        %v2968 = vadd.f32 %v2945, %v2964
        %v2969 = vadd.f32 %v2946, %v2965
        %2970 = vrot.lane.b32.xlu0 %v2960, 127
        %v2971 = vpop.permute.xlu0 %2970
        %2972 = vrot.lane.b32.xlu0 %v2959, 127
        %v2973 = vpop.permute.xlu0 %2972
        %2974 = vrot.lane.b32.xlu0 %v2958, 127
        %v2975 = vpop.permute.xlu0 %2974
        %2976 = vrot.lane.b32.xlu0 %v2957, 127
        %v2977 = vpop.permute.xlu0 %2976
        %2978 = vrot.lane.b32.xlu0 %v2961, 127
        %v2979 = vpop.permute.xlu0 %2978
        %v2980 = vsel %vm207, %v2977, %v2979
        %v2981 = vsel %vm207, %v2975, %v2977
        %v2982 = vsel %vm207, %v2973, %v2975
        %v2983 = vsel %vm207, %v2971, %v2973
        %v2984 = vsel %vm207, %v2979, %v2971
        %v2985 = vmul.f32 %v593, %v2983
        %v2986 = vmul.f32 %v593, %v2982
        %v2987 = vmul.f32 %v593, %v2981
        %v2988 = vmul.f32 %v593, %v2980
        %v2989 = vadd.f32 %v2966, %v2985
        %v2990 = vadd.f32 %v2967, %v2986
        %v2991 = vadd.f32 %v2968, %v2987
        %v2992 = vadd.f32 %v2969, %v2988
        %2993 = vrot.lane.b32.xlu0 %v2983, 127
        %v2994 = vpop.permute.xlu0 %2993
        %2995 = vrot.lane.b32.xlu0 %v2982, 127
        %v2996 = vpop.permute.xlu0 %2995
        %2997 = vrot.lane.b32.xlu0 %v2981, 127
        %v2998 = vpop.permute.xlu0 %2997
        %2999 = vrot.lane.b32.xlu0 %v2980, 127
        %v3000 = vpop.permute.xlu0 %2999
        %3001 = vrot.lane.b32.xlu0 %v2984, 127
        %v3002 = vpop.permute.xlu0 %3001
        %v3003 = vsel %vm207, %v3000, %v3002
        %v3004 = vsel %vm207, %v2998, %v3000
        %v3005 = vsel %vm207, %v2996, %v2998
        %v3006 = vsel %vm207, %v2994, %v2996
        %v3007 = vsel %vm207, %v3002, %v2994
        %v3008 = vmul.f32 %v620, %v3006
        %v3009 = vmul.f32 %v620, %v3005
        %v3010 = vmul.f32 %v620, %v3004
        %v3011 = vmul.f32 %v620, %v3003
        %v3012 = vadd.f32 %v2989, %v3008
        %v3013 = vadd.f32 %v2990, %v3009
        %v3014 = vadd.f32 %v2991, %v3010
        %v3015 = vadd.f32 %v2992, %v3011
        %3016 = vrot.lane.b32.xlu0 %v3006, 127
        %v3017 = vpop.permute.xlu0 %3016
        %3018 = vrot.lane.b32.xlu0 %v3005, 127
        %v3019 = vpop.permute.xlu0 %3018
        %3020 = vrot.lane.b32.xlu0 %v3004, 127
        %v3021 = vpop.permute.xlu0 %3020
        %3022 = vrot.lane.b32.xlu0 %v3003, 127
        %v3023 = vpop.permute.xlu0 %3022
        %3024 = vrot.lane.b32.xlu0 %v3007, 127
        %v3025 = vpop.permute.xlu0 %3024
        %v3026 = vsel %vm207, %v3023, %v3025
        %v3027 = vsel %vm207, %v3021, %v3023
        %v3028 = vsel %vm207, %v3019, %v3021
        %v3029 = vsel %vm207, %v3017, %v3019
        %v3030 = vsel %vm207, %v3025, %v3017
        %v3031 = vmul.f32 %v647, %v3029
        %v3032 = vmul.f32 %v647, %v3028
        %v3033 = vmul.f32 %v647, %v3027
        %v3034 = vmul.f32 %v647, %v3026
        %v3035 = vadd.f32 %v3012, %v3031
        %v3036 = vadd.f32 %v3013, %v3032
        %v3037 = vadd.f32 %v3014, %v3033
        %v3038 = vadd.f32 %v3015, %v3034
        %3039 = vrot.lane.b32.xlu0 %v3029, 127
        %v3040 = vpop.permute.xlu0 %3039
        %3041 = vrot.lane.b32.xlu0 %v3028, 127
        %v3042 = vpop.permute.xlu0 %3041
        %3043 = vrot.lane.b32.xlu0 %v3027, 127
        %v3044 = vpop.permute.xlu0 %3043
        %3045 = vrot.lane.b32.xlu0 %v3026, 127
        %v3046 = vpop.permute.xlu0 %3045
        %3047 = vrot.lane.b32.xlu0 %v3030, 127
        %v3048 = vpop.permute.xlu0 %3047
        %v3049 = vsel %vm207, %v3046, %v3048
        %v3050 = vsel %vm207, %v3044, %v3046
        %v3051 = vsel %vm207, %v3042, %v3044
        %v3052 = vsel %vm207, %v3040, %v3042
        %v3053 = vsel %vm207, %v3048, %v3040
        %v3054 = vmul.f32 %v674, %v3052
        %v3055 = vmul.f32 %v674, %v3051
        %v3056 = vmul.f32 %v674, %v3050
        %v3057 = vmul.f32 %v674, %v3049
        %v3058 = vadd.f32 %v3035, %v3054
        %v3059 = vadd.f32 %v3036, %v3055
        %v3060 = vadd.f32 %v3037, %v3056
        %v3061 = vadd.f32 %v3038, %v3057
        %3062 = vrot.lane.b32.xlu0 %v3052, 127
        %v3063 = vpop.permute.xlu0 %3062
        %3064 = vrot.lane.b32.xlu0 %v3051, 127
        %v3065 = vpop.permute.xlu0 %3064
        %3066 = vrot.lane.b32.xlu0 %v3050, 127
        %v3067 = vpop.permute.xlu0 %3066
        %3068 = vrot.lane.b32.xlu0 %v3049, 127
        %v3069 = vpop.permute.xlu0 %3068
        %3070 = vrot.lane.b32.xlu0 %v3053, 127
        %v3071 = vpop.permute.xlu0 %3070
        %v3072 = vsel %vm207, %v3069, %v3071
        %v3073 = vsel %vm207, %v3067, %v3069
        %v3074 = vsel %vm207, %v3065, %v3067
        %v3075 = vsel %vm207, %v3063, %v3065
        %v3076 = vsel %vm207, %v3071, %v3063
        %v3077 = vmul.f32 %v701, %v3075
        %v3078 = vmul.f32 %v701, %v3074
        %v3079 = vmul.f32 %v701, %v3073
        %v3080 = vmul.f32 %v701, %v3072
        %v3081 = vadd.f32 %v3058, %v3077
        %v3082 = vadd.f32 %v3059, %v3078
        %v3083 = vadd.f32 %v3060, %v3079
        %v3084 = vadd.f32 %v3061, %v3080
        %3085 = vrot.lane.b32.xlu0 %v3075, 127
        %v3086 = vpop.permute.xlu0 %3085
        %3087 = vrot.lane.b32.xlu0 %v3074, 127
        %v3088 = vpop.permute.xlu0 %3087
        %3089 = vrot.lane.b32.xlu0 %v3073, 127
        %v3090 = vpop.permute.xlu0 %3089
        %3091 = vrot.lane.b32.xlu0 %v3072, 127
        %v3092 = vpop.permute.xlu0 %3091
        %3093 = vrot.lane.b32.xlu0 %v3076, 127
        %v3094 = vpop.permute.xlu0 %3093
        %v3095 = vsel %vm207, %v3092, %v3094
        %v3096 = vsel %vm207, %v3090, %v3092
        %v3097 = vsel %vm207, %v3088, %v3090
        %v3098 = vsel %vm207, %v3086, %v3088
        %v3099 = vsel %vm207, %v3094, %v3086
        %v3100 = vmul.f32 %v728, %v3098
        %v3101 = vmul.f32 %v728, %v3097
        %v3102 = vmul.f32 %v728, %v3096
        %v3103 = vmul.f32 %v728, %v3095
        %v3104 = vadd.f32 %v3081, %v3100
        %v3105 = vadd.f32 %v3082, %v3101
        %v3106 = vadd.f32 %v3083, %v3102
        %v3107 = vadd.f32 %v3084, %v3103
        %3108 = vrot.lane.b32.xlu0 %v3098, 127
        %v3109 = vpop.permute.xlu0 %3108
        %3110 = vrot.lane.b32.xlu0 %v3097, 127
        %v3111 = vpop.permute.xlu0 %3110
        %3112 = vrot.lane.b32.xlu0 %v3096, 127
        %v3113 = vpop.permute.xlu0 %3112
        %3114 = vrot.lane.b32.xlu0 %v3095, 127
        %v3115 = vpop.permute.xlu0 %3114
        %3116 = vrot.lane.b32.xlu0 %v3099, 127
        %v3117 = vpop.permute.xlu0 %3116
        %v3118 = vsel %vm207, %v3115, %v3117
        %v3119 = vsel %vm207, %v3113, %v3115
        %v3120 = vsel %vm207, %v3111, %v3113
        %v3121 = vsel %vm207, %v3109, %v3111
        %v3122 = vsel %vm207, %v3117, %v3109
        %v3123 = vmul.f32 %v755, %v3121
        %v3124 = vmul.f32 %v755, %v3120
        %v3125 = vmul.f32 %v755, %v3119
        %v3126 = vmul.f32 %v755, %v3118
        %v3127 = vadd.f32 %v3104, %v3123
        %v3128 = vadd.f32 %v3105, %v3124
        %v3129 = vadd.f32 %v3106, %v3125
        %v3130 = vadd.f32 %v3107, %v3126
        %3131 = vrot.lane.b32.xlu0 %v3121, 127
        %v3132 = vpop.permute.xlu0 %3131
        %3133 = vrot.lane.b32.xlu0 %v3120, 127
        %v3134 = vpop.permute.xlu0 %3133
        %3135 = vrot.lane.b32.xlu0 %v3119, 127
        %v3136 = vpop.permute.xlu0 %3135
        %3137 = vrot.lane.b32.xlu0 %v3118, 127
        %v3138 = vpop.permute.xlu0 %3137
        %3139 = vrot.lane.b32.xlu0 %v3122, 127
        %v3140 = vpop.permute.xlu0 %3139
        %v3141 = vsel %vm207, %v3138, %v3140
        %v3142 = vsel %vm207, %v3136, %v3138
        %v3143 = vsel %vm207, %v3134, %v3136
        %v3144 = vsel %vm207, %v3132, %v3134
        %v3145 = vsel %vm207, %v3140, %v3132
        %v3146 = vmul.f32 %v782, %v3144
        %v3147 = vmul.f32 %v782, %v3143
        %v3148 = vmul.f32 %v782, %v3142
        %v3149 = vmul.f32 %v782, %v3141
        %v3150 = vadd.f32 %v3127, %v3146
        %v3151 = vadd.f32 %v3128, %v3147
        %v3152 = vadd.f32 %v3129, %v3148
        %v3153 = vadd.f32 %v3130, %v3149
        %3154 = vrot.lane.b32.xlu0 %v3144, 127
        %v3155 = vpop.permute.xlu0 %3154
        %3156 = vrot.lane.b32.xlu0 %v3143, 127
        %v3157 = vpop.permute.xlu0 %3156
        %3158 = vrot.lane.b32.xlu0 %v3142, 127
        %v3159 = vpop.permute.xlu0 %3158
        %3160 = vrot.lane.b32.xlu0 %v3141, 127
        %v3161 = vpop.permute.xlu0 %3160
        %3162 = vrot.lane.b32.xlu0 %v3145, 127
        %v3163 = vpop.permute.xlu0 %3162
        %v3164 = vsel %vm207, %v3161, %v3163
        %v3165 = vsel %vm207, %v3159, %v3161
        %v3166 = vsel %vm207, %v3157, %v3159
        %v3167 = vsel %vm207, %v3155, %v3157
        %v3168 = vsel %vm207, %v3163, %v3155
        %v3169 = vmul.f32 %v809, %v3167
        %v3170 = vmul.f32 %v809, %v3166
        %v3171 = vmul.f32 %v809, %v3165
        %v3172 = vmul.f32 %v809, %v3164
        %v3173 = vadd.f32 %v3150, %v3169
        %v3174 = vadd.f32 %v3151, %v3170
        %v3175 = vadd.f32 %v3152, %v3171
        %v3176 = vadd.f32 %v3153, %v3172
        %3177 = vrot.lane.b32.xlu0 %v3167, 127
        %v3178 = vpop.permute.xlu0 %3177
        %3179 = vrot.lane.b32.xlu0 %v3166, 127
        %v3180 = vpop.permute.xlu0 %3179
        %3181 = vrot.lane.b32.xlu0 %v3165, 127
        %v3182 = vpop.permute.xlu0 %3181
        %3183 = vrot.lane.b32.xlu0 %v3164, 127
        %v3184 = vpop.permute.xlu0 %3183
        %3185 = vrot.lane.b32.xlu0 %v3168, 127
        %v3186 = vpop.permute.xlu0 %3185
        %v3187 = vsel %vm207, %v3184, %v3186
        %v3188 = vsel %vm207, %v3182, %v3184
        %v3189 = vsel %vm207, %v3180, %v3182
        %v3190 = vsel %vm207, %v3178, %v3180
        %v3191 = vsel %vm207, %v3186, %v3178
        %v3192 = vmul.f32 %v836, %v3190
        %v3193 = vmul.f32 %v836, %v3189
        %v3194 = vmul.f32 %v836, %v3188
        %v3195 = vmul.f32 %v836, %v3187
        %v3196 = vadd.f32 %v3173, %v3192
        %v3197 = vadd.f32 %v3174, %v3193
        %v3198 = vadd.f32 %v3175, %v3194
        %v3199 = vadd.f32 %v3176, %v3195
        %3200 = vrot.lane.b32.xlu0 %v3190, 127
        %v3201 = vpop.permute.xlu0 %3200
        %3202 = vrot.lane.b32.xlu0 %v3189, 127
        %v3203 = vpop.permute.xlu0 %3202
        %3204 = vrot.lane.b32.xlu0 %v3188, 127
        %v3205 = vpop.permute.xlu0 %3204
        %3206 = vrot.lane.b32.xlu0 %v3187, 127
        %v3207 = vpop.permute.xlu0 %3206
        %3208 = vrot.lane.b32.xlu0 %v3191, 127
        %v3209 = vpop.permute.xlu0 %3208
        %v3210 = vsel %vm207, %v3207, %v3209
        %v3211 = vsel %vm207, %v3205, %v3207
        %v3212 = vsel %vm207, %v3203, %v3205
        %v3213 = vsel %vm207, %v3201, %v3203
        %v3214 = vsel %vm207, %v3209, %v3201
        %v3215 = vmul.f32 %v863, %v3213
        %v3216 = vmul.f32 %v863, %v3212
        %v3217 = vmul.f32 %v863, %v3211
        %v3218 = vmul.f32 %v863, %v3210
        %v3219 = vadd.f32 %v3196, %v3215
        %v3220 = vadd.f32 %v3197, %v3216
        %v3221 = vadd.f32 %v3198, %v3217
        %v3222 = vadd.f32 %v3199, %v3218
        %3223 = vrot.lane.b32.xlu0 %v3213, 127
        %v3224 = vpop.permute.xlu0 %3223
        %3225 = vrot.lane.b32.xlu0 %v3212, 127
        %v3226 = vpop.permute.xlu0 %3225
        %3227 = vrot.lane.b32.xlu0 %v3211, 127
        %v3228 = vpop.permute.xlu0 %3227
        %3229 = vrot.lane.b32.xlu0 %v3210, 127
        %v3230 = vpop.permute.xlu0 %3229
        %3231 = vrot.lane.b32.xlu0 %v3214, 127
        %v3232 = vpop.permute.xlu0 %3231
        %v3233 = vsel %vm207, %v3230, %v3232
        %v3234 = vsel %vm207, %v3228, %v3230
        %v3235 = vsel %vm207, %v3226, %v3228
        %v3236 = vsel %vm207, %v3224, %v3226
        %v3237 = vsel %vm207, %v3232, %v3224
        %v3238 = vmul.f32 %v890, %v3236
        %v3239 = vmul.f32 %v890, %v3235
        %v3240 = vmul.f32 %v890, %v3234
        %v3241 = vmul.f32 %v890, %v3233
        %v3242 = vadd.f32 %v3219, %v3238
        %v3243 = vadd.f32 %v3220, %v3239
        %v3244 = vadd.f32 %v3221, %v3240
        %v3245 = vadd.f32 %v3222, %v3241
        %3246 = vrot.lane.b32.xlu0 %v3236, 127
        %v3247 = vpop.permute.xlu0 %3246
        %3248 = vrot.lane.b32.xlu0 %v3235, 127
        %v3249 = vpop.permute.xlu0 %3248
        %3250 = vrot.lane.b32.xlu0 %v3234, 127
        %v3251 = vpop.permute.xlu0 %3250
        %3252 = vrot.lane.b32.xlu0 %v3233, 127
        %v3253 = vpop.permute.xlu0 %3252
        %3254 = vrot.lane.b32.xlu0 %v3237, 127
        %v3255 = vpop.permute.xlu0 %3254
        %v3256 = vsel %vm207, %v3253, %v3255
        %v3257 = vsel %vm207, %v3251, %v3253
        %v3258 = vsel %vm207, %v3249, %v3251
        %v3259 = vsel %vm207, %v3247, %v3249
        %v3260 = vsel %vm207, %v3255, %v3247
        %v3261 = vmul.f32 %v917, %v3259
        %v3262 = vmul.f32 %v917, %v3258
        %v3263 = vmul.f32 %v917, %v3257
        %v3264 = vmul.f32 %v917, %v3256
        %v3265 = vadd.f32 %v3242, %v3261
        %v3266 = vadd.f32 %v3243, %v3262
        %v3267 = vadd.f32 %v3244, %v3263
        %v3268 = vadd.f32 %v3245, %v3264
        %3269 = vrot.lane.b32.xlu0 %v3259, 127
        %v3270 = vpop.permute.xlu0 %3269
        %3271 = vrot.lane.b32.xlu0 %v3258, 127
        %v3272 = vpop.permute.xlu0 %3271
        %3273 = vrot.lane.b32.xlu0 %v3257, 127
        %v3274 = vpop.permute.xlu0 %3273
        %3275 = vrot.lane.b32.xlu0 %v3256, 127
        %v3276 = vpop.permute.xlu0 %3275
        %3277 = vrot.lane.b32.xlu0 %v3260, 127
        %v3278 = vpop.permute.xlu0 %3277
        %v3279 = vsel %vm207, %v3276, %v3278
        %v3280 = vsel %vm207, %v3274, %v3276
        %v3281 = vsel %vm207, %v3272, %v3274
        %v3282 = vsel %vm207, %v3270, %v3272
        %v3283 = vsel %vm207, %v3278, %v3270
        %v3284 = vmul.f32 %v944, %v3282
        %v3285 = vmul.f32 %v944, %v3281
        %v3286 = vmul.f32 %v944, %v3280
        %v3287 = vmul.f32 %v944, %v3279
        %v3288 = vadd.f32 %v3265, %v3284
        %v3289 = vadd.f32 %v3266, %v3285
        %v3290 = vadd.f32 %v3267, %v3286
        %v3291 = vadd.f32 %v3268, %v3287
        %3292 = vrot.lane.b32.xlu0 %v3282, 127
        %v3293 = vpop.permute.xlu0 %3292
        %3294 = vrot.lane.b32.xlu0 %v3281, 127
        %v3295 = vpop.permute.xlu0 %3294
        %3296 = vrot.lane.b32.xlu0 %v3280, 127
        %v3297 = vpop.permute.xlu0 %3296
        %3298 = vrot.lane.b32.xlu0 %v3279, 127
        %v3299 = vpop.permute.xlu0 %3298
        %3300 = vrot.lane.b32.xlu0 %v3283, 127
        %v3301 = vpop.permute.xlu0 %3300
        %v3302 = vsel %vm207, %v3299, %v3301
        %v3303 = vsel %vm207, %v3297, %v3299
        %v3304 = vsel %vm207, %v3295, %v3297
        %v3305 = vsel %vm207, %v3293, %v3295
        %v3306 = vsel %vm207, %v3301, %v3293
        %v3307 = vmul.f32 %v971, %v3305
        %v3308 = vmul.f32 %v971, %v3304
        %v3309 = vmul.f32 %v971, %v3303
        %v3310 = vmul.f32 %v971, %v3302
        %v3311 = vadd.f32 %v3288, %v3307
        %v3312 = vadd.f32 %v3289, %v3308
        %v3313 = vadd.f32 %v3290, %v3309
        %v3314 = vadd.f32 %v3291, %v3310
        %3315 = vrot.lane.b32.xlu0 %v3305, 127
        %v3316 = vpop.permute.xlu0 %3315
        %3317 = vrot.lane.b32.xlu0 %v3304, 127
        %v3318 = vpop.permute.xlu0 %3317
        %3319 = vrot.lane.b32.xlu0 %v3303, 127
        %v3320 = vpop.permute.xlu0 %3319
        %3321 = vrot.lane.b32.xlu0 %v3302, 127
        %v3322 = vpop.permute.xlu0 %3321
        %3323 = vrot.lane.b32.xlu0 %v3306, 127
        %v3324 = vpop.permute.xlu0 %3323
        %v3325 = vsel %vm207, %v3322, %v3324
        %v3326 = vsel %vm207, %v3320, %v3322
        %v3327 = vsel %vm207, %v3318, %v3320
        %v3328 = vsel %vm207, %v3316, %v3318
        %v3329 = vsel %vm207, %v3324, %v3316
        %v3330 = vmul.f32 %v998, %v3328
        %v3331 = vmul.f32 %v998, %v3327
        %v3332 = vmul.f32 %v998, %v3326
        %v3333 = vmul.f32 %v998, %v3325
        %v3334 = vadd.f32 %v3311, %v3330
        %v3335 = vadd.f32 %v3312, %v3331
        %v3336 = vadd.f32 %v3313, %v3332
        %v3337 = vadd.f32 %v3314, %v3333
        %3338 = vrot.lane.b32.xlu0 %v3328, 127
        %v3339 = vpop.permute.xlu0 %3338
        %3340 = vrot.lane.b32.xlu0 %v3327, 127
        %v3341 = vpop.permute.xlu0 %3340
        %3342 = vrot.lane.b32.xlu0 %v3326, 127
        %v3343 = vpop.permute.xlu0 %3342
        %3344 = vrot.lane.b32.xlu0 %v3325, 127
        %v3345 = vpop.permute.xlu0 %3344
        %3346 = vrot.lane.b32.xlu0 %v3329, 127
        %v3347 = vpop.permute.xlu0 %3346
        %v3348 = vsel %vm207, %v3345, %v3347
        %v3349 = vsel %vm207, %v3343, %v3345
        %v3350 = vsel %vm207, %v3341, %v3343
        %v3351 = vsel %vm207, %v3339, %v3341
        %v3352 = vsel %vm207, %v3347, %v3339
        %v3353 = vmul.f32 %v1025, %v3351
        %v3354 = vmul.f32 %v1025, %v3350
        %v3355 = vmul.f32 %v1025, %v3349
        %v3356 = vmul.f32 %v1025, %v3348
        %v3357 = vadd.f32 %v3334, %v3353
        %v3358 = vadd.f32 %v3335, %v3354
        %v3359 = vadd.f32 %v3336, %v3355
        %v3360 = vadd.f32 %v3337, %v3356
        %3361 = vrot.lane.b32.xlu0 %v3351, 127
        %v3362 = vpop.permute.xlu0 %3361
        %3363 = vrot.lane.b32.xlu0 %v3350, 127
        %v3364 = vpop.permute.xlu0 %3363
        %3365 = vrot.lane.b32.xlu0 %v3349, 127
        %v3366 = vpop.permute.xlu0 %3365
        %3367 = vrot.lane.b32.xlu0 %v3348, 127
        %v3368 = vpop.permute.xlu0 %3367
        %3369 = vrot.lane.b32.xlu0 %v3352, 127
        %v3370 = vpop.permute.xlu0 %3369
        %v3371 = vsel %vm207, %v3368, %v3370
        %v3372 = vsel %vm207, %v3366, %v3368
        %v3373 = vsel %vm207, %v3364, %v3366
        %v3374 = vsel %vm207, %v3362, %v3364
        %v3375 = vmul.f32 %v1051, %v3374
        %v3376 = vmul.f32 %v1051, %v3373
        %v3377 = vmul.f32 %v1051, %v3372
        %v3378 = vmul.f32 %v1051, %v3371
        %v3379 = vadd.f32 %v3357, %v3375
        %v3380 = vadd.f32 %v3358, %v3376
        %v3381 = vadd.f32 %v3359, %v3377
        %v3382 = vadd.f32 %v3360, %v3378
        %3383 = vst [vmem:[%s148 + $0x60] sm:$0xff] %v3379
        %3384 = vst [vmem:[%s148 + $0x68] sm:$0xff] %v3380
        %3385 = vst [vmem:[%s148 + $0x70] sm:$0xff] %v3381
        %3386 = vst [vmem:[%s148 + $0x78] sm:$0xff] %v3382
        %s3387 = sand.u32 %s85, 1
        %s3388 = scalar_lea.sflag [#allocation3], %s3387
        %s3389 = sand.u32 %s85, 1
        %s3390 = smul.addr %s3389, 128
        %s3391 = scalar_lea.vmem [#allocation2], %s3390
        // Predicated region
        $region29: #{a_call__.1} parent=27 // pred_check
          %p3392 = pneg %p95
        $region30: #{a_call__.1} parent=27 // pred_check_branch
          %3394 = sbr.rel (%p3392) target = $region32
        $region31: #{a_call__.1} parent=27 // pred_region
          %s3395 = smul.u32 16, %s21
          %s3397 = ssub.s32 2048, 2048
          %3398 = vsyncadd %s3388, %s3397
          %s3399 = smul.addr %s20, 16
          %s3400 = sadd.s32 %s3395, %s3399
          %s3401 = smul.addr %s3400, 128
          %s3402 = scalar_lea.hbm %s2, %s3401
          %s3404 = sshll.u32 %s3391, 4
          %s3405 = int_to_ptr.vmem [resolvable:$true] %s3404
          %3407 = dma.vmem_to_hbm [thread:$0]  %s3405, 2048, %s3402, %s3388
        $region32: #{a_call__.1} parent=27 // pred_fallthru
          _
      $region28: #{a_call__.1} parent=5 // pred_fallthru
        _
      %p3408 = scmp.le.s32.totalorder 2, %s11
      // Predicated region
      $region33: #{a_call__.1} parent=5 // pred_check
        %p3409 = pneg %p3408
      $region34: #{a_call__.1} parent=5 // pred_check_branch
        %3411 = sbr.rel (%p3409) target = $region36
      $region35: #{a_call__.1} parent=5 // pred_region
        %s3412 = ssub.s32 %s11, 2
        // Predicated region
        $region37: #{a_call__.1} parent=35 // pred_check
          %p3413 = pneg %p101
        $region38: #{a_call__.1} parent=35 // pred_check_branch
          %3415 = sbr.rel (%p3413) target = $region40
        $region39: #{a_call__.1} parent=35 // pred_region
          %s3416 = sand.u32 %s86, 1
          %s3417 = scalar_lea.sflag [#allocation3], %s3416
          %s3418 = sand.u32 %s86, 1
          %s3419 = smul.addr %s3418, 128
          %s3420 = scalar_lea.vmem [#allocation2], %s3419
          %3421 = dma.done %s3417, 2048
        $region40: #{a_call__.1} parent=35 // pred_fallthru
          _
      $region36: #{a_call__.1} parent=5 // pred_fallthru
        _
    $region6: #{a_call__.1} parent=1 // loop_footer
      %s15 = sadd.s32 1, %s11
    $region7: #{a_call__.1} parent=1 // loop_footer_branch
      %10 = sbr.rel target = $region3
    $region8: #{a_call__.1} parent=1 // loop_exit
      _
    %3422 = vsyncpa [#allocation3], 1
    %s3423 = scalar_lea.sflag [#allocation3], 1
    %3424 = vsyncpa %s3423, 1

</llo_original>
